<compile_context>
chip_gen: v7x
topology: tpu7x:2x2x1
jax: 0.10.0
libtpu: 0.0.40
codegen_flags: <defaults>
</compile_context>

<pallas_src>
import functools

import jax
import jax.numpy as jnp
from jax.experimental import pallas as pl
from jax.experimental.pallas import tpu as pltpu

_VMEM = functools.partial(pl.BlockSpec, memory_space=pltpu.MemorySpace.VMEM)

_LANE = 128                       # lane tile granularity (last dim)
_TM = 512                         # lane-tile size for conv matmul outputs
_TN = 512                         # lane-tile size for pool outputs
_VMEM_LIMIT = 32 * 1024 * 1024    # fits v5e/v6e scoped defaults and v7x 64 MiB VMEM


def _round_up(x, m):
    return (x + m - 1) // m * m


# ---------------------------------------------------------------------------
# Pallas kernels (hot paths)
# ---------------------------------------------------------------------------
def _convT_kernel(w_ref, p_ref, scale_ref, shift_ref, o_ref, *, relu):
    """o = act((W @ P) * scale + shift).

    W: (O, K) bf16, P: (K, TM) bf16 lane-tile of the transposed im2col patches,
    scale/shift: (O, 1) f32 with conv bias (and eval-mode BatchNorm) pre-folded.
    Accumulate + epilogue in f32, store in o_ref.dtype (bf16).
    """
    acc = jnp.dot(w_ref[...], p_ref[...], preferred_element_type=jnp.float32)
    acc = acc * scale_ref[...] + shift_ref[...]
    if relu:
        acc = jnp.maximum(acc, 0.0)
    o_ref[...] = acc.astype(o_ref.dtype)


def _max_window_kernel(x_ref, o_ref):
    """Max over the leading (k*k pooling-window) axis: (k*k, C, TN) -> (C, TN)."""
    o_ref[...] = jnp.max(x_ref[...], axis=0)


def _fc_logsoftmax_kernel(a_ref, w_ref, b_ref, logits_ref, logp_ref):
    """logits = A @ W + b ; logp = log_softmax(logits, axis=-1)."""
    logits = jnp.dot(a_ref[...], w_ref[...],
                     preferred_element_type=jnp.float32) + b_ref[...]
    m = jnp.max(logits, axis=-1, keepdims=True)
    z = logits - m
    lse = jnp.log(jnp.sum(jnp.exp(z), axis=-1, keepdims=True))
    logits_ref[...] = logits.astype(logits_ref.dtype)
    logp_ref[...] = (z - lse).astype(logp_ref.dtype)


# ---------------------------------------------------------------------------
# Wrappers (glue: transposed im2col, window views, padding)
# ---------------------------------------------------------------------------
def conv2d_t(x_cbhw, w_mat, scale, shift, *, kh, kw, relu):
    """Valid stride-1 conv in channels-first layout.

    x_cbhw: (C, B, H, W) bf16; w_mat: (O, Kpad) bf16 with K = kh*kw*C
    (zero-padded to Kpad); scale/shift: (O, 1) f32.  Returns (O, B, Ho, Wo) bf16.
    """
    C, B, H, W = x_cbhw.shape
    O, k_pad = w_mat.shape
    ho, wo = H - kh + 1, W - kw + 1
    k = kh * kw * C
    m = B * ho * wo

    # Transposed im2col (glue): row index = (di*kw + dj)*C + c, lane = (b,ho,wo).
    slabs = [x_cbhw[:, :, di:di + ho, dj:dj + wo]
             for di in range(kh) for dj in range(kw)]
    patches = jnp.stack(slabs, axis=0).reshape(k, m)

    tm = _TM if m >= _TM else _round_up(m, _LANE)
    m_pad = _round_up(m, tm)
    patches = jnp.pad(patches, ((0, k_pad - k), (0, m_pad - m)))

    out = pl.pallas_call(
        functools.partial(_convT_kernel, relu=relu),
        out_shape=jax.ShapeDtypeStruct((O, m_pad), jnp.bfloat16),
        grid=(m_pad // tm,),
        in_specs=[
            pl.BlockSpec((O, k_pad), lambda i: (0, 0)),     # weights, resident
            pl.BlockSpec((k_pad, tm), lambda i: (0, i)),    # patch lane tile
            pl.BlockSpec((O, 1), lambda i: (0, 0)),         # fused scale
            pl.BlockSpec((O, 1), lambda i: (0, 0)),         # fused shift(+bias)
        ],
        out_specs=pl.BlockSpec((O, tm), lambda i: (0, i)),  # lane-dense output
        compiler_params=pltpu.CompilerParams(
            dimension_semantics=("parallel",),
            vmem_limit_bytes=_VMEM_LIMIT),
    )(w_mat, patches, scale, shift)
    return out[:, :m].reshape(O, B, ho, wo)


def maxpool2d_t(x_cbhw, k):
    """Non-overlapping max pool (kernel=stride=k) in channels-first layout."""
    C, B, H, W = x_cbhw.shape
    ho, wo = H // k, W // k
    n = B * ho * wo
    # Window-axis view (1x copy, not k^2x): (k*k, C, B*Ho*Wo).
    wins = (x_cbhw.reshape(C, B, ho, k, wo, k)
            .transpose(3, 5, 0, 1, 2, 4)
            .reshape(k * k, C, n))
    tn = _TN if n >= _TN else _round_up(n, _LANE)
    n_pad = _round_up(n, tn)
    wins = jnp.pad(wins, ((0, 0), (0, 0), (0, n_pad - n)))

    out = pl.pallas_call(
        _max_window_kernel,
        out_shape=jax.ShapeDtypeStruct((C, n_pad), x_cbhw.dtype),
        grid=(n_pad // tn,),
        in_specs=[pl.BlockSpec((k * k, C, tn), lambda i: (0, 0, i))],
        out_specs=pl.BlockSpec((C, tn), lambda i: (0, i)),
        compiler_params=pltpu.CompilerParams(
            dimension_semantics=("parallel",),
            vmem_limit_bytes=_VMEM_LIMIT),
    )(wins)
    return out[:, :n].reshape(C, B, ho, wo)


def linear_logsoftmax(feat, w_kd, bias):
    """feat: (B, K) bf16, w_kd: (K, 10) bf16 (pre-transposed), bias: (1, 10) f32."""
    Bn, _ = feat.shape
    O = w_kd.shape[1]
    logits, logp = pl.pallas_call(
        _fc_logsoftmax_kernel,
        out_shape=(jax.ShapeDtypeStruct((Bn, O), jnp.float32),
                   jax.ShapeDtypeStruct((Bn, O), jnp.float32)),
        in_specs=[_VMEM(), _VMEM(), _VMEM()],
        out_specs=(_VMEM(), _VMEM()),
    )(feat, w_kd, bias)
    return logp, logits


# ---------------------------------------------------------------------------
# Parameters (deterministic synthetic init, shapes from the PyTorch __init__)
# ---------------------------------------------------------------------------
def init_params(key):
    ks = jax.random.split(key, 8)
    s = 0.05
    return {
        "conv1_w": s * jax.random.normal(ks[0], (32, 3, 5, 5), jnp.float32),
        "conv1_b": s * jax.random.normal(ks[1], (32,), jnp.float32),
        "conv2_w": s * jax.random.normal(ks[2], (64, 32, 5, 5), jnp.float32),
        "conv2_b": s * jax.random.normal(ks[3], (64,), jnp.float32),
        "conv3_w": s * jax.random.normal(ks[4], (128, 64, 3, 3), jnp.float32),
        "conv3_b": s * jax.random.normal(ks[5], (128,), jnp.float32),
        # BatchNorm2d(128) -- eval-mode running stats at PyTorch defaults.
        # TODO(synk): training-mode BatchNorm would use batch statistics.
        "bn_gamma": jnp.ones((128,), jnp.float32),
        "bn_beta": jnp.zeros((128,), jnp.float32),
        "bn_mean": jnp.zeros((128,), jnp.float32),
        "bn_var": jnp.ones((128,), jnp.float32),
        "fc_w": s * jax.random.normal(ks[6], (10, 1152), jnp.float32),
        "fc_b": s * jax.random.normal(ks[7], (10,), jnp.float32),
    }


def prepare_params(params, eps=1e-5):
    """One-time relayout: conv weights -> (O, KH*KW*C) bf16 with K padded to a
    sublane multiple, conv bias / eval-mode BatchNorm folded into per-channel
    (scale, shift), fc weight pre-transposed."""
    def conv_mat(w, k_pad=None):
        O = w.shape[0]
        k = w.shape[1] * w.shape[2] * w.shape[3]
        wm = jnp.transpose(w, (0, 2, 3, 1)).reshape(O, k)   # row = (di*KW+dj)*C + c
        if k_pad is not None and k_pad > k:
            wm = jnp.pad(wm, ((0, 0), (0, k_pad - k)))
        return wm.astype(jnp.bfloat16)

    bn_scale = params["bn_gamma"] / jnp.sqrt(params["bn_var"] + eps)
    bn_shift = (params["conv3_b"] - params["bn_mean"]) * bn_scale + params["bn_beta"]
    col = lambda v: v.reshape(-1, 1).astype(jnp.float32)
    return {
        "w1": conv_mat(params["conv1_w"], k_pad=_round_up(3 * 5 * 5, 8)),  # 75 -> 80
        "s1": jnp.ones((32, 1), jnp.float32),
        "t1": col(params["conv1_b"]),
        "w2": conv_mat(params["conv2_w"]),          # K = 800 (sublane aligned)
        "s2": jnp.ones((64, 1), jnp.float32),
        "t2": col(params["conv2_b"]),
        "w3": conv_mat(params["conv3_w"]),          # K = 576
        "s3": col(bn_scale),
        "t3": col(bn_shift),
        "fc_w": jnp.transpose(params["fc_w"]).astype(jnp.bfloat16),  # (1152, 10)
        "fc_b": params["fc_b"].reshape(1, -1).astype(jnp.float32),
    }


# ---------------------------------------------------------------------------
# Forward pass (matches CNN_Student.forward)
# ---------------------------------------------------------------------------
@jax.jit
def cnn_student_forward(prep, x_nchw):
    Bn = x_nchw.shape[0]
    # NCHW -> channels-first transposed layout (C, B, H, W), bf16 for the MXU.
    x = jnp.transpose(x_nchw, (1, 0, 2, 3)).astype(jnp.bfloat16)              # (3,B,32,32)

    x = conv2d_t(x, prep["w1"], prep["s1"], prep["t1"], kh=5, kw=5, relu=True)  # (32,B,28,28)
    x = conv2d_t(x, prep["w2"], prep["s2"], prep["t2"], kh=5, kw=5, relu=True)  # (64,B,24,24)
    x = maxpool2d_t(x, 3)                                                       # (64,B,8,8)
    x = conv2d_t(x, prep["w3"], prep["s3"], prep["t3"], kh=3, kw=3, relu=True)  # (128,B,6,6)
    x = maxpool2d_t(x, 2)                                                       # (128,B,3,3)

    # PyTorch flattens NCHW (B, C, H, W) -> (B, C*H*W); channels-first layout
    # makes this a tiny (B, 1152) transpose.
    feat = jnp.transpose(x, (1, 0, 2, 3)).reshape(Bn, -1)                       # (B,1152)
    y_pred, logits = linear_logsoftmax(feat, prep["fc_w"], prep["fc_b"])
    return y_pred, logits


if __name__ == "__main__":
    key = jax.random.PRNGKey(0)
    pkey, xkey = jax.random.split(key)
    params = init_params(pkey)
    prep = prepare_params(params)

    # Smallest valid input consistent with Linear(1152, 10): 3x32x32, batch=2.
    x = jax.random.normal(xkey, (2, 3, 32, 32), jnp.float32)

    y_pred, logits = cnn_student_forward(prep, x)
    jax.block_until_ready((y_pred, logits))

    assert y_pred.shape == (2, 10) and logits.shape == (2, 10)
    # log_softmax rows must (log-)sum to ~1
    assert jnp.allclose(jnp.sum(jnp.exp(y_pred), axis=1), 1.0, atol=1e-4)
    print("KERNEL_OK")
</pallas_src>

<mosaic_0001>
module attributes {stable_mosaic.version = 11 : i64} {
  func.func @_convT_kernel(%arg0: i32, %arg1: memref<32x80xbf16, #tpu.memory_space<vmem>>, %arg2: memref<80x512xbf16, #tpu.memory_space<vmem>>, %arg3: memref<32x1xf32, #tpu.memory_space<vmem>>, %arg4: memref<32x1xf32, #tpu.memory_space<vmem>>, %arg5: memref<32x512xbf16, #tpu.memory_space<vmem>>) attributes {dimension_semantics = [#tpu.dimension_semantics<parallel>], iteration_bounds = array<i64: 4>, scalar_prefetch = 0 : i64, scratch_operands = 0 : i64, tpu.core_type = #tpu.core_type<tc>, window_params = [{pipeline_mode = #tpu.pipeline_mode<synchronous>, transform_indices = @transform_0, window_bounds = array<i64: 32, 80>}, {transform_indices = @transform_1, window_bounds = array<i64: 80, 512>}, {pipeline_mode = #tpu.pipeline_mode<synchronous>, transform_indices = @transform_2, window_bounds = array<i64: 32, 1>}, {pipeline_mode = #tpu.pipeline_mode<synchronous>, transform_indices = @transform_3, window_bounds = array<i64: 32, 1>}, {transform_indices = @transform_4, window_bounds = array<i64: 32, 512>}]} {
    %c0 = arith.constant 0 : index
    %c0_0 = arith.constant 0 : index
    %0 = vector.load %arg1[%c0, %c0_0] : memref<32x80xbf16, #tpu.memory_space<vmem>>, vector<32x80xbf16>
    %c0_1 = arith.constant 0 : index
    %c0_2 = arith.constant 0 : index
    %1 = vector.load %arg2[%c0_1, %c0_2] : memref<80x512xbf16, #tpu.memory_space<vmem>>, vector<80x512xbf16>
    %cst = arith.constant dense<0.000000e+00> : vector<32x512xf32>
    %2 = tpu.matmul %0, %1, %cst {dimension_numbers = #tpu.dot_dimension_numbers<[1], [0], [0], [1], [0, 0, 1, 1], [], []>} : vector<32x80xbf16>, vector<80x512xbf16>, vector<32x512xf32> -> vector<32x512xf32>
    %c0_3 = arith.constant 0 : index
    %c0_4 = arith.constant 0 : index
    %3 = vector.load %arg3[%c0_3, %c0_4] : memref<32x1xf32, #tpu.memory_space<vmem>>, vector<32x1xf32>
    %4 = vector.broadcast %3 : vector<32x1xf32> to vector<32x512xf32>
    %5 = arith.mulf %2, %4 : vector<32x512xf32>
    %c0_5 = arith.constant 0 : index
    %c0_6 = arith.constant 0 : index
    %6 = vector.load %arg4[%c0_5, %c0_6] : memref<32x1xf32, #tpu.memory_space<vmem>>, vector<32x1xf32>
    %7 = vector.broadcast %6 : vector<32x1xf32> to vector<32x512xf32>
    %8 = arith.addf %5, %7 : vector<32x512xf32>
    %cst_7 = arith.constant 0.000000e+00 : f32
    %9 = vector.broadcast %cst_7 : f32 to vector<32x512xf32>
    %10 = arith.maximumf %8, %9 : vector<32x512xf32>
    %11 = arith.truncf %10 : vector<32x512xf32> to vector<32x512xbf16>
    %c0_8 = arith.constant 0 : index
    %c0_9 = arith.constant 0 : index
    %12 = vector.load %arg5[%c0_8, %c0_9] : memref<32x512xbf16, #tpu.memory_space<vmem>>, vector<32x512xbf16>
    tpu.vector_store %arg5[%c0_8, %c0_9], %11 {strides = array<i32>} : memref<32x512xbf16, #tpu.memory_space<vmem>>, vector<32x512xbf16>,
    return
  }
  func.func @transform_0(%arg0: i32) -> (i32, i32) {
    %c0_i32 = arith.constant 0 : i32
    %c0_i32_0 = arith.constant 0 : i32
    %c0_i32_1 = arith.constant 0 : i32
    return %c0_i32, %c0_i32_0 : i32, i32
  }
  func.func @transform_1(%arg0: i32) -> (i32, i32) {
    %c0_i32 = arith.constant 0 : i32
    %c0_i32_0 = arith.constant 0 : i32
    return %c0_i32, %arg0 : i32, i32
  }
  func.func @transform_2(%arg0: i32) -> (i32, i32) {
    %c0_i32 = arith.constant 0 : i32
    %c0_i32_0 = arith.constant 0 : i32
    %c0_i32_1 = arith.constant 0 : i32
    return %c0_i32, %c0_i32_0 : i32, i32
  }
  func.func @transform_3(%arg0: i32) -> (i32, i32) {
    %c0_i32 = arith.constant 0 : i32
    %c0_i32_0 = arith.constant 0 : i32
    %c0_i32_1 = arith.constant 0 : i32
    return %c0_i32, %c0_i32_0 : i32, i32
  }
  func.func @transform_4(%arg0: i32) -> (i32, i32) {
    %c0_i32 = arith.constant 0 : i32
    %c0_i32_0 = arith.constant 0 : i32
    return %c0_i32, %arg0 : i32, i32
  }
}

module attributes {stable_mosaic.version = 11 : i64} {
  func.func @_convT_kernel(%arg0: i32, %arg1: memref<64x800xbf16, #tpu.memory_space<vmem>>, %arg2: memref<800x512xbf16, #tpu.memory_space<vmem>>, %arg3: memref<64x1xf32, #tpu.memory_space<vmem>>, %arg4: memref<64x1xf32, #tpu.memory_space<vmem>>, %arg5: memref<64x512xbf16, #tpu.memory_space<vmem>>) attributes {dimension_semantics = [#tpu.dimension_semantics<parallel>], iteration_bounds = array<i64: 3>, scalar_prefetch = 0 : i64, scratch_operands = 0 : i64, tpu.core_type = #tpu.core_type<tc>, window_params = [{pipeline_mode = #tpu.pipeline_mode<synchronous>, transform_indices = @transform_0, window_bounds = array<i64: 64, 800>}, {transform_indices = @transform_1, window_bounds = array<i64: 800, 512>}, {pipeline_mode = #tpu.pipeline_mode<synchronous>, transform_indices = @transform_2, window_bounds = array<i64: 64, 1>}, {pipeline_mode = #tpu.pipeline_mode<synchronous>, transform_indices = @transform_3, window_bounds = array<i64: 64, 1>}, {transform_indices = @transform_4, window_bounds = array<i64: 64, 512>}]} {
    %c0 = arith.constant 0 : index
    %c0_0 = arith.constant 0 : index
    %0 = vector.load %arg1[%c0, %c0_0] : memref<64x800xbf16, #tpu.memory_space<vmem>>, vector<64x800xbf16>
    %c0_1 = arith.constant 0 : index
    %c0_2 = arith.constant 0 : index
    %1 = vector.load %arg2[%c0_1, %c0_2] : memref<800x512xbf16, #tpu.memory_space<vmem>>, vector<800x512xbf16>
    %cst = arith.constant dense<0.000000e+00> : vector<64x512xf32>
    %2 = tpu.matmul %0, %1, %cst {dimension_numbers = #tpu.dot_dimension_numbers<[1], [0], [0], [1], [0, 0, 1, 1], [], []>} : vector<64x800xbf16>, vector<800x512xbf16>, vector<64x512xf32> -> vector<64x512xf32>
    %c0_3 = arith.constant 0 : index
    %c0_4 = arith.constant 0 : index
    %3 = vector.load %arg3[%c0_3, %c0_4] : memref<64x1xf32, #tpu.memory_space<vmem>>, vector<64x1xf32>
    %4 = vector.broadcast %3 : vector<64x1xf32> to vector<64x512xf32>
    %5 = arith.mulf %2, %4 : vector<64x512xf32>
    %c0_5 = arith.constant 0 : index
    %c0_6 = arith.constant 0 : index
    %6 = vector.load %arg4[%c0_5, %c0_6] : memref<64x1xf32, #tpu.memory_space<vmem>>, vector<64x1xf32>
    %7 = vector.broadcast %6 : vector<64x1xf32> to vector<64x512xf32>
    %8 = arith.addf %5, %7 : vector<64x512xf32>
    %cst_7 = arith.constant 0.000000e+00 : f32
    %9 = vector.broadcast %cst_7 : f32 to vector<64x512xf32>
    %10 = arith.maximumf %8, %9 : vector<64x512xf32>
    %11 = arith.truncf %10 : vector<64x512xf32> to vector<64x512xbf16>
    %c0_8 = arith.constant 0 : index
    %c0_9 = arith.constant 0 : index
    %12 = vector.load %arg5[%c0_8, %c0_9] : memref<64x512xbf16, #tpu.memory_space<vmem>>, vector<64x512xbf16>
    tpu.vector_store %arg5[%c0_8, %c0_9], %11 {strides = array<i32>} : memref<64x512xbf16, #tpu.memory_space<vmem>>, vector<64x512xbf16>,
    return
  }
  func.func @transform_0(%arg0: i32) -> (i32, i32) {
    %c0_i32 = arith.constant 0 : i32
    %c0_i32_0 = arith.constant 0 : i32
    %c0_i32_1 = arith.constant 0 : i32
    return %c0_i32, %c0_i32_0 : i32, i32
  }
  func.func @transform_1(%arg0: i32) -> (i32, i32) {
    %c0_i32 = arith.constant 0 : i32
    %c0_i32_0 = arith.constant 0 : i32
    return %c0_i32, %arg0 : i32, i32
  }
  func.func @transform_2(%arg0: i32) -> (i32, i32) {
    %c0_i32 = arith.constant 0 : i32
    %c0_i32_0 = arith.constant 0 : i32
    %c0_i32_1 = arith.constant 0 : i32
    return %c0_i32, %c0_i32_0 : i32, i32
  }
  func.func @transform_3(%arg0: i32) -> (i32, i32) {
    %c0_i32 = arith.constant 0 : i32
    %c0_i32_0 = arith.constant 0 : i32
    %c0_i32_1 = arith.constant 0 : i32
    return %c0_i32, %c0_i32_0 : i32, i32
  }
  func.func @transform_4(%arg0: i32) -> (i32, i32) {
    %c0_i32 = arith.constant 0 : i32
    %c0_i32_0 = arith.constant 0 : i32
    return %c0_i32, %arg0 : i32, i32
  }
}

module attributes {stable_mosaic.version = 11 : i64} {
  func.func @_max_window_kernel(%arg0: i32, %arg1: memref<9x64x128xbf16, #tpu.memory_space<vmem>>, %arg2: memref<64x128xbf16, #tpu.memory_space<vmem>>) attributes {dimension_semantics = [#tpu.dimension_semantics<parallel>], iteration_bounds = array<i64: 1>, scalar_prefetch = 0 : i64, scratch_operands = 0 : i64, tpu.core_type = #tpu.core_type<tc>, window_params = [{transform_indices = @transform_0, window_bounds = array<i64: 9, 64, 128>}, {transform_indices = @transform_1, window_bounds = array<i64: 64, 128>}]} {
    %c0 = arith.constant 0 : index
    %c0_0 = arith.constant 0 : index
    %c0_1 = arith.constant 0 : index
    %0 = vector.load %arg1[%c0, %c0_0, %c0_1] : memref<9x64x128xbf16, #tpu.memory_space<vmem>>, vector<9x64x128xbf16>
    %cst = arith.constant dense<0xFF80> : vector<64x128xbf16>
    %1 = vector.multi_reduction <maximumf>, %0, %cst [0] : vector<9x64x128xbf16> to vector<64x128xbf16>
    %c0_2 = arith.constant 0 : index
    %c0_3 = arith.constant 0 : index
    %2 = vector.load %arg2[%c0_2, %c0_3] : memref<64x128xbf16, #tpu.memory_space<vmem>>, vector<64x128xbf16>
    tpu.vector_store %arg2[%c0_2, %c0_3], %1 {strides = array<i32>} : memref<64x128xbf16, #tpu.memory_space<vmem>>, vector<64x128xbf16>,
    return
  }
  func.func @transform_0(%arg0: i32) -> (i32, i32, i32) {
    %c0_i32 = arith.constant 0 : i32
    %c0_i32_0 = arith.constant 0 : i32
    %c0_i32_1 = arith.constant 0 : i32
    return %c0_i32, %c0_i32_0, %arg0 : i32, i32, i32
  }
  func.func @transform_1(%arg0: i32) -> (i32, i32) {
    %c0_i32 = arith.constant 0 : i32
    %c0_i32_0 = arith.constant 0 : i32
    return %c0_i32, %arg0 : i32, i32
  }
}

module attributes {stable_mosaic.version = 11 : i64} {
  func.func @_convT_kernel(%arg0: i32, %arg1: memref<128x576xbf16, #tpu.memory_space<vmem>>, %arg2: memref<576x128xbf16, #tpu.memory_space<vmem>>, %arg3: memref<128x1xf32, #tpu.memory_space<vmem>>, %arg4: memref<128x1xf32, #tpu.memory_space<vmem>>, %arg5: memref<128x128xbf16, #tpu.memory_space<vmem>>) attributes {dimension_semantics = [#tpu.dimension_semantics<parallel>], iteration_bounds = array<i64: 1>, scalar_prefetch = 0 : i64, scratch_operands = 0 : i64, tpu.core_type = #tpu.core_type<tc>, window_params = [{pipeline_mode = #tpu.pipeline_mode<synchronous>, transform_indices = @transform_0, window_bounds = array<i64: 128, 576>}, {transform_indices = @transform_1, window_bounds = array<i64: 576, 128>}, {pipeline_mode = #tpu.pipeline_mode<synchronous>, transform_indices = @transform_2, window_bounds = array<i64: 128, 1>}, {pipeline_mode = #tpu.pipeline_mode<synchronous>, transform_indices = @transform_3, window_bounds = array<i64: 128, 1>}, {transform_indices = @transform_4, window_bounds = array<i64: 128, 128>}]} {
    %c0 = arith.constant 0 : index
    %c0_0 = arith.constant 0 : index
    %0 = vector.load %arg1[%c0, %c0_0] : memref<128x576xbf16, #tpu.memory_space<vmem>>, vector<128x576xbf16>
    %c0_1 = arith.constant 0 : index
    %c0_2 = arith.constant 0 : index
    %1 = vector.load %arg2[%c0_1, %c0_2] : memref<576x128xbf16, #tpu.memory_space<vmem>>, vector<576x128xbf16>
    %cst = arith.constant dense<0.000000e+00> : vector<128x128xf32>
    %2 = tpu.matmul %0, %1, %cst {dimension_numbers = #tpu.dot_dimension_numbers<[1], [0], [0], [1], [0, 0, 1, 1], [], []>} : vector<128x576xbf16>, vector<576x128xbf16>, vector<128x128xf32> -> vector<128x128xf32>
    %c0_3 = arith.constant 0 : index
    %c0_4 = arith.constant 0 : index
    %3 = vector.load %arg3[%c0_3, %c0_4] : memref<128x1xf32, #tpu.memory_space<vmem>>, vector<128x1xf32>
    %4 = vector.broadcast %3 : vector<128x1xf32> to vector<128x128xf32>
    %5 = arith.mulf %2, %4 : vector<128x128xf32>
    %c0_5 = arith.constant 0 : index
    %c0_6 = arith.constant 0 : index
    %6 = vector.load %arg4[%c0_5, %c0_6] : memref<128x1xf32, #tpu.memory_space<vmem>>, vector<128x1xf32>
    %7 = vector.broadcast %6 : vector<128x1xf32> to vector<128x128xf32>
    %8 = arith.addf %5, %7 : vector<128x128xf32>
    %cst_7 = arith.constant 0.000000e+00 : f32
    %9 = vector.broadcast %cst_7 : f32 to vector<128x128xf32>
    %10 = arith.maximumf %8, %9 : vector<128x128xf32>
    %11 = arith.truncf %10 : vector<128x128xf32> to vector<128x128xbf16>
    %c0_8 = arith.constant 0 : index
    %c0_9 = arith.constant 0 : index
    %12 = vector.load %arg5[%c0_8, %c0_9] : memref<128x128xbf16, #tpu.memory_space<vmem>>, vector<128x128xbf16>
    tpu.vector_store %arg5[%c0_8, %c0_9], %11 {strides = array<i32>} : memref<128x128xbf16, #tpu.memory_space<vmem>>, vector<128x128xbf16>,
    return
  }
  func.func @transform_0(%arg0: i32) -> (i32, i32) {
    %c0_i32 = arith.constant 0 : i32
    %c0_i32_0 = arith.constant 0 : i32
    %c0_i32_1 = arith.constant 0 : i32
    return %c0_i32, %c0_i32_0 : i32, i32
  }
  func.func @transform_1(%arg0: i32) -> (i32, i32) {
    %c0_i32 = arith.constant 0 : i32
    %c0_i32_0 = arith.constant 0 : i32
    return %c0_i32, %arg0 : i32, i32
  }
  func.func @transform_2(%arg0: i32) -> (i32, i32) {
    %c0_i32 = arith.constant 0 : i32
    %c0_i32_0 = arith.constant 0 : i32
    %c0_i32_1 = arith.constant 0 : i32
    return %c0_i32, %c0_i32_0 : i32, i32
  }
  func.func @transform_3(%arg0: i32) -> (i32, i32) {
    %c0_i32 = arith.constant 0 : i32
    %c0_i32_0 = arith.constant 0 : i32
    %c0_i32_1 = arith.constant 0 : i32
    return %c0_i32, %c0_i32_0 : i32, i32
  }
  func.func @transform_4(%arg0: i32) -> (i32, i32) {
    %c0_i32 = arith.constant 0 : i32
    %c0_i32_0 = arith.constant 0 : i32
    return %c0_i32, %arg0 : i32, i32
  }
}

module attributes {stable_mosaic.version = 11 : i64} {
  func.func @_max_window_kernel(%arg0: i32, %arg1: memref<4x128x128xbf16, #tpu.memory_space<vmem>>, %arg2: memref<128x128xbf16, #tpu.memory_space<vmem>>) attributes {dimension_semantics = [#tpu.dimension_semantics<parallel>], iteration_bounds = array<i64: 1>, scalar_prefetch = 0 : i64, scratch_operands = 0 : i64, tpu.core_type = #tpu.core_type<tc>, window_params = [{transform_indices = @transform_0, window_bounds = array<i64: 4, 128, 128>}, {transform_indices = @transform_1, window_bounds = array<i64: 128, 128>}]} {
    %c0 = arith.constant 0 : index
    %c0_0 = arith.constant 0 : index
    %c0_1 = arith.constant 0 : index
    %0 = vector.load %arg1[%c0, %c0_0, %c0_1] : memref<4x128x128xbf16, #tpu.memory_space<vmem>>, vector<4x128x128xbf16>
    %cst = arith.constant dense<0xFF80> : vector<128x128xbf16>
    %1 = vector.multi_reduction <maximumf>, %0, %cst [0] : vector<4x128x128xbf16> to vector<128x128xbf16>
    %c0_2 = arith.constant 0 : index
    %c0_3 = arith.constant 0 : index
    %2 = vector.load %arg2[%c0_2, %c0_3] : memref<128x128xbf16, #tpu.memory_space<vmem>>, vector<128x128xbf16>
    tpu.vector_store %arg2[%c0_2, %c0_3], %1 {strides = array<i32>} : memref<128x128xbf16, #tpu.memory_space<vmem>>, vector<128x128xbf16>,
    return
  }
  func.func @transform_0(%arg0: i32) -> (i32, i32, i32) {
    %c0_i32 = arith.constant 0 : i32
    %c0_i32_0 = arith.constant 0 : i32
    %c0_i32_1 = arith.constant 0 : i32
    return %c0_i32, %c0_i32_0, %arg0 : i32, i32, i32
  }
  func.func @transform_1(%arg0: i32) -> (i32, i32) {
    %c0_i32 = arith.constant 0 : i32
    %c0_i32_0 = arith.constant 0 : i32
    return %c0_i32, %arg0 : i32, i32
  }
}

module attributes {stable_mosaic.version = 11 : i64} {
  func.func @_fc_logsoftmax_kernel(%arg0: memref<2x1152xbf16, #tpu.memory_space<vmem>>, %arg1: memref<1152x10xbf16, #tpu.memory_space<vmem>>, %arg2: memref<1x10xf32, #tpu.memory_space<vmem>>, %arg3: memref<2x10xf32, #tpu.memory_space<vmem>>, %arg4: memref<2x10xf32, #tpu.memory_space<vmem>>) attributes {dimension_semantics = [], scalar_prefetch = 0 : i64, scratch_operands = 0 : i64, tpu.core_type = #tpu.core_type<tc>} {
    %c0 = arith.constant 0 : index
    %c0_0 = arith.constant 0 : index
    %0 = vector.load %arg0[%c0, %c0_0] : memref<2x1152xbf16, #tpu.memory_space<vmem>>, vector<2x1152xbf16>
    %c0_1 = arith.constant 0 : index
    %c0_2 = arith.constant 0 : index
    %1 = vector.load %arg1[%c0_1, %c0_2] : memref<1152x10xbf16, #tpu.memory_space<vmem>>, vector<1152x10xbf16>
    %cst = arith.constant dense<0.000000e+00> : vector<2x10xf32>
    %2 = tpu.matmul %0, %1, %cst {dimension_numbers = #tpu.dot_dimension_numbers<[1], [0], [0], [1], [0, 0, 1, 1], [], []>} : vector<2x1152xbf16>, vector<1152x10xbf16>, vector<2x10xf32> -> vector<2x10xf32>
    %c0_3 = arith.constant 0 : index
    %c0_4 = arith.constant 0 : index
    %3 = vector.load %arg2[%c0_3, %c0_4] : memref<1x10xf32, #tpu.memory_space<vmem>>, vector<1x10xf32>
    %4 = vector.broadcast %3 : vector<1x10xf32> to vector<2x10xf32>
    %5 = arith.addf %2, %4 : vector<2x10xf32>
    %cst_5 = arith.constant dense<0xFF800000> : vector<2xf32>
    %6 = vector.multi_reduction <maximumf>, %5, %cst_5 [1] : vector<2x10xf32> to vector<2xf32>
    %7 = vector.shape_cast %6 : vector<2xf32> to vector<2x1xf32>
    %8 = vector.broadcast %7 : vector<2x1xf32> to vector<2x10xf32>
    %9 = arith.subf %5, %8 : vector<2x10xf32>
    %10 = math.exp %9 : vector<2x10xf32>
    %cst_6 = arith.constant dense<0.000000e+00> : vector<2xf32>
    %11 = vector.multi_reduction <add>, %10, %cst_6 [1] : vector<2x10xf32> to vector<2xf32>
    %12 = vector.shape_cast %11 : vector<2xf32> to vector<2x1xf32>
    %13 = math.log %12 : vector<2x1xf32>
    %c0_7 = arith.constant 0 : index
    %c0_8 = arith.constant 0 : index
    %14 = vector.load %arg3[%c0_7, %c0_8] : memref<2x10xf32, #tpu.memory_space<vmem>>, vector<2x10xf32>
    tpu.vector_store %arg3[%c0_7, %c0_8], %5 {strides = array<i32>} : memref<2x10xf32, #tpu.memory_space<vmem>>, vector<2x10xf32>,
    %15 = vector.broadcast %13 : vector<2x1xf32> to vector<2x10xf32>
    %16 = arith.subf %9, %15 : vector<2x10xf32>
    %c0_9 = arith.constant 0 : index
    %c0_10 = arith.constant 0 : index
    %17 = vector.load %arg4[%c0_9, %c0_10] : memref<2x10xf32, #tpu.memory_space<vmem>>, vector<2x10xf32>
    tpu.vector_store %arg4[%c0_9, %c0_10], %16 {strides = array<i32>} : memref<2x10xf32, #tpu.memory_space<vmem>>, vector<2x10xf32>,
    return
  }
}

</mosaic_0001>

<llo_original>
// kernel: cnn_student_forward.6
$region0: #{cnn_student_forward.6}
  #allocation0 [shape = 'u32[]', space=smem, size = 0x4, offset = 0x4, fixed_abs, tag = 'smem constant byte address 0x4 - core index']
  #allocation1 [shape = 'u32[144,128]{1,0:T(1,128)}', space=vmem, size = 0x12000, scoped, tag = 'internal scratch']
  %s0 = inlined_call_operand.vmem [shape: bf16[32,80], index: 0, kind: input, shape index: {}]
  %s1 = inlined_call_operand.vmem [shape: bf16[80,2048], index: 1, kind: input, shape index: {}]
  %s2 = inlined_call_operand.vmem [shape: f32[32,1], index: 2, kind: input, shape index: {}]
  %s3 = inlined_call_operand.vmem [shape: f32[32,1], index: 3, kind: input, shape index: {}]
  %s4 = inlined_call_operand.vmem [shape: bf16[32,2048], index: 4, kind: output, shape index: {}]
  %s5 = sld [smem:[#allocation0]]
  $region91: #{cnn_student_forward.6} parent=0
    _
  %s7 = ssub.s32 1, %s5
  %s8 = scalar_select 0, %s7, %s5
  $region1: #{cnn_student_forward.6} parent=0
    #allocation2 [shape = 'u8[163840]{0}', space=vmem, size = 0x28000, scoped, tag = 'input window, operand 1']
    #allocation3 [shape = 'u8[65536]{0}', space=vmem, size = 0x10000, scoped, tag = 'output window, operand 0']
    loop: start=0, step=1, limit=6
    $region2: #{cnn_student_forward.6} parent=1 // loop_pre_header
      _
    $region3: #{cnn_student_forward.6} parent=1 // loop_header
      %s10 = sphi 0, %s14
      %p11 = scmp.ge.s32.totalorder %s10, 6
      %s18 = sphi 0, %s18
      %s20 = sphi 0, %s18
      %s21 = sphi 0, %s20
      %s35 = sphi 0, %s21
      %s41 = sphi 0, %s43
      %s44 = sphi 0, %s41
      %s45 = sphi 0, %s44
      %s61 = sphi 0, %s45
      %s65 = sphi 0, %s65
      %s67 = sphi 0, %s65
      %s68 = sphi 0, %s67
      %s82 = sphi 0, %s68
      %s86 = sphi 0, %s86
      %s88 = sphi 0, %s86
      %s89 = sphi 0, %s88
      %s103 = sphi 0, %s89
      %s109 = sphi 0, %s111
      %s112 = sphi 0, %s109
      %s113 = sphi 0, %s112
      %s129 = sphi 0, %s113
    $region4: #{cnn_student_forward.6} parent=1 // loop_header_branch
      %13 = sbr.rel (%p11) target = $region8
    $region5: #{cnn_student_forward.6} parent=1 // loop_body
      %s15 = ssub.s32 %s10, 1
      %s16 = ssub.s32 %s10, 2
      %s17 = sadd.s32 %s10, 1
      %s19 = sadd.s32 %s18, 1
      %p22 = scmp.eq.s32.totalorder %s10, 3
      %p23 = scmp.ne.s32.totalorder %s18, %s20
      %p24 = scmp.eq.s32.totalorder %s10, 0
      %p25 = por %p23, %p24
      %p26 = scmp.ne.s32.totalorder %s18, %s20
      %p27 = scmp.eq.s32.totalorder %s15, 3
      %p28 = por %p26, %p27
      %p29 = scmp.ne.s32.totalorder %s20, %s21
      %p30 = scmp.eq.s32.totalorder %s15, 0
      %p31 = por %p29, %p30
      %p32 = scmp.ne.s32.totalorder %s20, %s21
      %p33 = scmp.eq.s32.totalorder %s16, 3
      %p34 = por %p32, %p33
      %p36 = scmp.ne.s32.totalorder %s21, %s35
      %p37 = scmp.eq.s32.totalorder %s16, 0
      %p38 = por %p36, %p37
      %s39 = ssub.s32 %s10, %s17
      %p40 = scmp.eq.s32.totalorder %s39, 0
      %s42 = sadd.s32 %s41, 1
      %s43 = scalar_select %p40, %s41, %s42
      %p46 = pneg %p40
      %p47 = scmp.eq.s32.totalorder %s10, 3
      %p48 = por %p46, %p47
      %p49 = scmp.ne.s32.totalorder %s41, %s44
      %p50 = scmp.eq.s32.totalorder %s10, 0
      %p51 = por %p49, %p50
      %p52 = scmp.ne.s32.totalorder %s41, %s44
      %p53 = scmp.eq.s32.totalorder %s15, 3
      %p54 = por %p52, %p53
      %p55 = scmp.ne.s32.totalorder %s44, %s45
      %p56 = scmp.eq.s32.totalorder %s15, 0
      %p57 = por %p55, %p56
      %p58 = scmp.ne.s32.totalorder %s44, %s45
      %p59 = scmp.eq.s32.totalorder %s16, 3
      %p60 = por %p58, %p59
      %p62 = scmp.ne.s32.totalorder %s45, %s61
      %p63 = scmp.eq.s32.totalorder %s16, 0
      %p64 = por %p62, %p63
      %s66 = sadd.s32 %s65, 1
      %p69 = scmp.eq.s32.totalorder %s10, 3
      %p70 = scmp.ne.s32.totalorder %s65, %s67
      %p71 = scmp.eq.s32.totalorder %s10, 0
      %p72 = por %p70, %p71
      %p73 = scmp.ne.s32.totalorder %s65, %s67
      %p74 = scmp.eq.s32.totalorder %s15, 3
      %p75 = por %p73, %p74
      %p76 = scmp.ne.s32.totalorder %s67, %s68
      %p77 = scmp.eq.s32.totalorder %s15, 0
      %p78 = por %p76, %p77
      %p79 = scmp.ne.s32.totalorder %s67, %s68
      %p80 = scmp.eq.s32.totalorder %s16, 3
      %p81 = por %p79, %p80
      %p83 = scmp.ne.s32.totalorder %s68, %s82
      %p84 = scmp.eq.s32.totalorder %s16, 0
      %p85 = por %p83, %p84
      %s87 = sadd.s32 %s86, 1
      %p90 = scmp.eq.s32.totalorder %s10, 3
      %p91 = scmp.ne.s32.totalorder %s86, %s88
      %p92 = scmp.eq.s32.totalorder %s10, 0
      %p93 = por %p91, %p92
      %p94 = scmp.ne.s32.totalorder %s86, %s88
      %p95 = scmp.eq.s32.totalorder %s15, 3
      %p96 = por %p94, %p95
      %p97 = scmp.ne.s32.totalorder %s88, %s89
      %p98 = scmp.eq.s32.totalorder %s15, 0
      %p99 = por %p97, %p98
      %p100 = scmp.ne.s32.totalorder %s88, %s89
      %p101 = scmp.eq.s32.totalorder %s16, 3
      %p102 = por %p100, %p101
      %p104 = scmp.ne.s32.totalorder %s89, %s103
      %p105 = scmp.eq.s32.totalorder %s16, 0
      %p106 = por %p104, %p105
      %s107 = ssub.s32 %s10, %s17
      %p108 = scmp.eq.s32.totalorder %s107, 0
      %s110 = sadd.s32 %s109, 1
      %s111 = scalar_select %p108, %s109, %s110
      %p114 = pneg %p108
      %p115 = scmp.eq.s32.totalorder %s10, 3
      %p116 = por %p114, %p115
      %p117 = scmp.ne.s32.totalorder %s109, %s112
      %p118 = scmp.eq.s32.totalorder %s10, 0
      %p119 = por %p117, %p118
      %p120 = scmp.ne.s32.totalorder %s109, %s112
      %p121 = scmp.eq.s32.totalorder %s15, 3
      %p122 = por %p120, %p121
      %p123 = scmp.ne.s32.totalorder %s112, %s113
      %p124 = scmp.eq.s32.totalorder %s15, 0
      %p125 = por %p123, %p124
      %p126 = scmp.ne.s32.totalorder %s112, %s113
      %p127 = scmp.eq.s32.totalorder %s16, 3
      %p128 = por %p126, %p127
      %p130 = scmp.ne.s32.totalorder %s113, %s129
      %p131 = scmp.eq.s32.totalorder %s16, 0
      %p132 = por %p130, %p131
      %p133 = scmp.le.s32.totalorder 1, %s10
      %p134 = scmp.lt.s32.totalorder %s10, 5
      %p135 = pnand %p133, %p134
      %p136 = pneg %p135
      // Predicated region
      $region9: #{cnn_student_forward.6} parent=5 // pred_check
        _
      $region10: #{cnn_student_forward.6} parent=5 // pred_check_branch
        %138 = sbr.rel (%p135) target = $region12
      $region11: #{cnn_student_forward.6} parent=5 // pred_region
        %s139 = ssub.s32 %s10, 1
        // Predicated region
        $region13: #{cnn_student_forward.6} parent=11 // pred_check
          %p140 = pneg %p31
        $region14: #{cnn_student_forward.6} parent=11 // pred_check_branch
          %142 = sbr.rel (%p140) target = $region16
        $region15: #{cnn_student_forward.6} parent=11 // pred_region
          _
        $region16: #{cnn_student_forward.6} parent=11 // pred_fallthru
          _
        // Predicated region
        $region17: #{cnn_student_forward.6} parent=11 // pred_check
          %p143 = pneg %p78
        $region18: #{cnn_student_forward.6} parent=11 // pred_check_branch
          %145 = sbr.rel (%p143) target = $region20
        $region19: #{cnn_student_forward.6} parent=11 // pred_region
          _
        $region20: #{cnn_student_forward.6} parent=11 // pred_fallthru
          _
        // Predicated region
        $region21: #{cnn_student_forward.6} parent=11 // pred_check
          %p146 = pneg %p99
        $region22: #{cnn_student_forward.6} parent=11 // pred_check_branch
          %148 = sbr.rel (%p146) target = $region24
        $region23: #{cnn_student_forward.6} parent=11 // pred_region
          _
        $region24: #{cnn_student_forward.6} parent=11 // pred_fallthru
          _
      $region12: #{cnn_student_forward.6} parent=5 // pred_fallthru
        _
      %p149 = scmp.lt.s32.totalorder %s10, 4
      // Predicated region
      $region25: #{cnn_student_forward.6} parent=5 // pred_check
        %p150 = pneg %p149
      $region26: #{cnn_student_forward.6} parent=5 // pred_check_branch
        %152 = sbr.rel (%p150) target = $region28
      $region27: #{cnn_student_forward.6} parent=5 // pred_region
        // Predicated region
        $region29: #{cnn_student_forward.6} parent=27 // pred_check
          %p153 = pneg %p51
        $region30: #{cnn_student_forward.6} parent=27 // pred_check_branch
          %155 = sbr.rel (%p153) target = $region32
        $region31: #{cnn_student_forward.6} parent=27 // pred_region
          %s156 = sand.u32 %s41, 1
          %s157 = sand.u32 %s41, 1
          %s158 = smul.addr %s157, 160
          %s159 = scalar_lea.vmem [#allocation2], %s158
          %s160 = smul.u32 4, %s10
          %s161 = smul.addr %s160, 4
          %s162 = scalar_lea.vmem %s1, %s161
          // Predicated region
          $region33: #{cnn_student_forward.6} parent=31 // pred_check
            _
          $region34: #{cnn_student_forward.6} parent=31 // pred_check_branch
            %164 = sbr.rel (0) target = $region36
          $region35: #{cnn_student_forward.6} parent=31 // pred_region
            // Predicated region
            $region37: #{cnn_student_forward.6} parent=35 // pred_check
              _
            $region38: #{cnn_student_forward.6} parent=35 // pred_check_branch
              %166 = sbr.rel (0) target = $region40
            $region39: #{cnn_student_forward.6} parent=35 // pred_region
              loop: start=0, step=1, limit=1
              $region41: #{cnn_student_forward.6} parent=39 // loop_pre_header
                _
              $region42: #{cnn_student_forward.6} parent=39 // loop_header
                %s168 = sphi 0, %s172
                %p169 = scmp.ge.s32.totalorder %s168, 1
                %s173 = sphi %s162, %s162
                %s174 = sphi %s159, %s159
              $region43: #{cnn_student_forward.6} parent=39 // loop_header_branch
                %171 = sbr.rel (%p169) target = $region47
              $region44: #{cnn_student_forward.6} parent=39 // loop_body
                %v175 = vld [vmem:[%s173] sm:$0xff]
                %176 = vst [vmem:[%s174] sm:$0xff] %v175
                %v177 = vld [vmem:[%s173 + $0x8] sm:$0xff]
                %178 = vst [vmem:[%s174 + $0x8] sm:$0xff] %v177
                %v179 = vld [vmem:[%s173 + $0x40] sm:$0xff]
                %180 = vst [vmem:[%s174 + $0x10] sm:$0xff] %v179
                %v181 = vld [vmem:[%s173 + $0x48] sm:$0xff]
                %182 = vst [vmem:[%s174 + $0x18] sm:$0xff] %v181
                %v183 = vld [vmem:[%s173 + $0x80] sm:$0xff]
                %184 = vst [vmem:[%s174 + $0x20] sm:$0xff] %v183
                %v185 = vld [vmem:[%s173 + $0x88] sm:$0xff]
                %186 = vst [vmem:[%s174 + $0x28] sm:$0xff] %v185
                %v187 = vld [vmem:[%s173 + $0xc0] sm:$0xff]
                %188 = vst [vmem:[%s174 + $0x30] sm:$0xff] %v187
                %v189 = vld [vmem:[%s173 + $0xc8] sm:$0xff]
                %190 = vst [vmem:[%s174 + $0x38] sm:$0xff] %v189
                %v191 = vld [vmem:[%s173 + $0x100] sm:$0xff]
                %192 = vst [vmem:[%s174 + $0x40] sm:$0xff] %v191
                %v193 = vld [vmem:[%s173 + $0x108] sm:$0xff]
                %194 = vst [vmem:[%s174 + $0x48] sm:$0xff] %v193
                %v195 = vld [vmem:[%s173 + $0x140] sm:$0xff]
                %196 = vst [vmem:[%s174 + $0x50] sm:$0xff] %v195
                %v197 = vld [vmem:[%s173 + $0x148] sm:$0xff]
                %198 = vst [vmem:[%s174 + $0x58] sm:$0xff] %v197
                %v199 = vld [vmem:[%s173 + $0x180] sm:$0xff]
                %200 = vst [vmem:[%s174 + $0x60] sm:$0xff] %v199
                %v201 = vld [vmem:[%s173 + $0x188] sm:$0xff]
                %202 = vst [vmem:[%s174 + $0x68] sm:$0xff] %v201
                %v203 = vld [vmem:[%s173 + $0x1c0] sm:$0xff]
                %204 = vst [vmem:[%s174 + $0x70] sm:$0xff] %v203
                %v205 = vld [vmem:[%s173 + $0x1c8] sm:$0xff]
                %206 = vst [vmem:[%s174 + $0x78] sm:$0xff] %v205
                %v207 = vld [vmem:[%s173 + $0x200] sm:$0xff]
                %208 = vst [vmem:[%s174 + $0x80] sm:$0xff] %v207
                %v209 = vld [vmem:[%s173 + $0x208] sm:$0xff]
                %210 = vst [vmem:[%s174 + $0x88] sm:$0xff] %v209
                %v211 = vld [vmem:[%s173 + $0x240] sm:$0xff]
                %212 = vst [vmem:[%s174 + $0x90] sm:$0xff] %v211
                %v213 = vld [vmem:[%s173 + $0x248] sm:$0xff]
                %214 = vst [vmem:[%s174 + $0x98] sm:$0xff] %v213
              $region45: #{cnn_student_forward.6} parent=39 // loop_footer
                %s172 = sadd.s32 1, %s168
              $region46: #{cnn_student_forward.6} parent=39 // loop_footer_branch
                %167 = sbr.rel target = $region42
              $region47: #{cnn_student_forward.6} parent=39 // loop_exit
                _
            $region40: #{cnn_student_forward.6} parent=35 // pred_fallthru
              _
            // Predicated region
            $region48: #{cnn_student_forward.6} parent=35 // pred_check
              _
            $region49: #{cnn_student_forward.6} parent=35 // pred_check_branch
              %216 = sbr.rel target = $region51
            $region50: #{cnn_student_forward.6} parent=35 // pred_region
              _
            $region51: #{cnn_student_forward.6} parent=35 // pred_fallthru
              _
          $region36: #{cnn_student_forward.6} parent=31 // pred_fallthru
            _
          %217 = vnop
        $region32: #{cnn_student_forward.6} parent=27 // pred_fallthru
          _
      $region28: #{cnn_student_forward.6} parent=5 // pred_fallthru
        _
      %p218 = scmp.le.s32.totalorder 1, %s10
      %p219 = scmp.lt.s32.totalorder %s10, 5
      %p220 = pnand %p218, %p219
      %p221 = pneg %p220
      // Predicated region
      $region52: #{cnn_student_forward.6} parent=5 // pred_check
        _
      $region53: #{cnn_student_forward.6} parent=5 // pred_check_branch
        %223 = sbr.rel (%p220) target = $region55
      $region54: #{cnn_student_forward.6} parent=5 // pred_region
        %s224 = ssub.s32 %s10, 1
        %s225 = sand.u32 %s44, 1
        %s226 = sand.u32 %s44, 1
        %s227 = smul.addr %s226, 160
        %s228 = scalar_lea.vmem [#allocation2], %s227
        // Predicated region
        $region56: #{cnn_student_forward.6} parent=54 // pred_check
          %p229 = pneg %p57
        $region57: #{cnn_student_forward.6} parent=54 // pred_check_branch
          %231 = sbr.rel (%p229) target = $region59
        $region58: #{cnn_student_forward.6} parent=54 // pred_region
          _
        $region59: #{cnn_student_forward.6} parent=54 // pred_fallthru
          _
        %p232 = pneg %p31
        %p233 = pneg %p28
        %s234 = sand.u32 %s44, 1
        %s235 = sand.u32 %s44, 1
        %s236 = smul.addr %s235, 160
        %s237 = scalar_lea.vmem [#allocation2], %s236
        %p238 = pneg %p57
        %p239 = pneg %p54
        %p240 = pneg %p78
        %p241 = pneg %p75
        %p242 = pneg %p99
        %p243 = pneg %p96
        %p244 = pneg %p125
        %p245 = pneg %p122
        %s246 = sand.u32 %s112, 1
        %s247 = sand.u32 %s112, 1
        %s248 = smul.addr %s247, 64
        %s249 = scalar_lea.vmem [#allocation3], %s248
        %s250 = smul.u32 4, %s15
        %s251 = smul.u32 4, %s15
        %v253 = vld [vmem:[%s0] sm:$0xf]
        %v254 = vld [vmem:[%s0 + $0x4] sm:$0xf]
        %v255 = vld [vmem:[%s0 + $0x8] sm:$0xf]
        %v256 = vld [vmem:[%s0 + $0xc] sm:$0xf]
        %v257 = vld [vmem:[%s228] sm:$0xff]
        %v258 = vld [vmem:[%s228 + $0x8] sm:$0xff]
        %v259 = vld [vmem:[%s228 + $0x10] sm:$0xff]
        %v260 = vld [vmem:[%s228 + $0x18] sm:$0xff]
        %v261 = vld [vmem:[%s228 + $0x20] sm:$0xff]
        %v262 = vld [vmem:[%s228 + $0x28] sm:$0xff]
        %v263 = vld [vmem:[%s228 + $0x30] sm:$0xff]
        %v264 = vld [vmem:[%s228 + $0x38] sm:$0xff]
        %v265 = vld [vmem:[%s228 + $0x40] sm:$0xff]
        %v266 = vld [vmem:[%s228 + $0x48] sm:$0xff]
        %v267 = vld [vmem:[%s228 + $0x50] sm:$0xff]
        %v268 = vld [vmem:[%s228 + $0x58] sm:$0xff]
        %v269 = vld [vmem:[%s228 + $0x60] sm:$0xff]
        %v270 = vld [vmem:[%s228 + $0x68] sm:$0xff]
        %v271 = vld [vmem:[%s228 + $0x70] sm:$0xff]
        %v272 = vld [vmem:[%s228 + $0x78] sm:$0xff]
        %v273 = vld [vmem:[%s228 + $0x80] sm:$0xff]
        %v274 = vld [vmem:[%s228 + $0x88] sm:$0xff]
        %v275 = vld [vmem:[%s228 + $0x90] sm:$0xff]
        %v276 = vld [vmem:[%s228 + $0x98] sm:$0xff]
        %v281 = vunpack.c.l.b16 %v253
        %v282 = vunpack.c.l.b16 %v254
        %v283 = vunpack.c.l.b16 %v255
        %v284 = vunpack.c.l.b16 %v256
        %v285 = vpack.c.b16 %v282, %v281
        %v286 = vpack.c.b16 %v284, %v283
        %v307 = vunpack.c.l.b16 %v257
        %v308 = vunpack.c.h.b16 %v257
        %v309 = vunpack.c.l.b16 %v258
        %v310 = vunpack.c.h.b16 %v258
        %v311 = vunpack.c.l.b16 %v259
        %v312 = vunpack.c.h.b16 %v259
        %v313 = vunpack.c.l.b16 %v260
        %v314 = vunpack.c.h.b16 %v260
        %v315 = vunpack.c.l.b16 %v261
        %v316 = vunpack.c.h.b16 %v261
        %v317 = vunpack.c.l.b16 %v262
        %v318 = vunpack.c.h.b16 %v262
        %v319 = vunpack.c.l.b16 %v263
        %v320 = vunpack.c.h.b16 %v263
        %v321 = vunpack.c.l.b16 %v264
        %v322 = vunpack.c.h.b16 %v264
        %v323 = vunpack.c.l.b16 %v265
        %v324 = vunpack.c.h.b16 %v265
        %v325 = vunpack.c.l.b16 %v266
        %v326 = vunpack.c.h.b16 %v266
        %v327 = vunpack.c.l.b16 %v267
        %v328 = vunpack.c.h.b16 %v267
        %v329 = vunpack.c.l.b16 %v268
        %v330 = vunpack.c.h.b16 %v268
        %v331 = vunpack.c.l.b16 %v269
        %v332 = vunpack.c.h.b16 %v269
        %v333 = vunpack.c.l.b16 %v270
        %v334 = vunpack.c.h.b16 %v270
        %v335 = vunpack.c.l.b16 %v271
        %v336 = vunpack.c.h.b16 %v271
        %v337 = vunpack.c.l.b16 %v272
        %v338 = vunpack.c.h.b16 %v272
        %v339 = vunpack.c.l.b16 %v273
        %v340 = vunpack.c.h.b16 %v273
        %v341 = vunpack.c.l.b16 %v274
        %v342 = vunpack.c.h.b16 %v274
        %v343 = vunpack.c.l.b16 %v275
        %v344 = vunpack.c.h.b16 %v275
        %v345 = vunpack.c.l.b16 %v276
        %v346 = vunpack.c.h.b16 %v276
        %v347 = vpack.c.b16 %v311, %v307
        %v348 = vpack.c.b16 %v312, %v308
        %v349 = vpack.c.b16 %v313, %v309
        %v350 = vpack.c.b16 %v314, %v310
        %v351 = vpack.c.b16 %v319, %v315
        %v352 = vpack.c.b16 %v320, %v316
        %v353 = vpack.c.b16 %v321, %v317
        %v354 = vpack.c.b16 %v322, %v318
        %v355 = vpack.c.b16 %v327, %v323
        %v356 = vpack.c.b16 %v328, %v324
        %v357 = vpack.c.b16 %v329, %v325
        %v358 = vpack.c.b16 %v330, %v326
        %v359 = vpack.c.b16 %v335, %v331
        %v360 = vpack.c.b16 %v336, %v332
        %v361 = vpack.c.b16 %v337, %v333
        %v362 = vpack.c.b16 %v338, %v334
        %v363 = vpack.c.b16 %v343, %v339
        %v364 = vpack.c.b16 %v344, %v340
        %v365 = vpack.c.b16 %v345, %v341
        %v366 = vpack.c.b16 %v346, %v342
        %vm387 = vcmask 654336
        %v389 = vsel %vm387, %v285, 0
        %v392 = vsel %vm387, %v286, 0
        %394 = vmatprep.subr.bf16.mxu0 %v348
        %395 = vmatpush1.bf16.msra.mxu0 %v347
        %396 = vmatprep.subr.bf16.mxu0 %v352
        %397 = vmatpush1.bf16.msra.mxu0 %v351
        %398 = vmatprep.subr.bf16.mxu0 %v356
        %399 = vmatpush1.bf16.msra.mxu0 %v355
        %400 = vmatprep.subr.bf16.mxu0 %v360
        %401 = vmatpush1.bf16.msra.mxu0 %v359
        %402 = vmatprep.subr.bf16.mxu0 %v364
        %403 = vmatpush1.bf16.msra.mxu0 %v363
        %404 = vmatprep.subr.bf16.mxu0 0
        %405 = vmatpush1.bf16.msra.mxu0 0
        %406 = vmatprep.subr.bf16.mxu0 0
        %407 = vmatpush1.bf16.msra.mxu0 0
        %408 = vmatprep.subr.bf16.mxu0 0
        %409 = vmatpush1.bf16.msra.mxu0 0
        %410 = vmatprep.subr.bf16.mxu0 0
        %411 = vmatpush1.bf16.msra.mxu0 0
        %412 = vmatprep.subr.bf16.mxu0 0
        %413 = vmatpush1.bf16.msra.mxu0 0
        %414 = vmatprep.subr.bf16.mxu0 0
        %415 = vmatpush1.bf16.msra.mxu0 0
        %416 = vmatprep.subr.bf16.mxu0 0
        %417 = vmatpush1.bf16.msra.mxu0 0
        %418 = vmatprep.subr.bf16.mxu0 0
        %419 = vmatpush1.bf16.msra.mxu0 0
        %420 = vmatprep.subr.bf16.mxu0 0
        %421 = vmatpush1.bf16.msra.mxu0 0
        %422 = vmatprep.subr.bf16.mxu0 0
        %423 = vmatpush1.bf16.msra.mxu0 0
        %424 = vmatprep.subr.bf16.mxu0 0
        %425 = vmatpush1.bf16.msra.mxu0 0
        %426 = vmatprep.mubr.bf16.mxu0 0
        %427 = vmatmul.mubr.bf16.gmra.mrb[0].mxu0 %v389
        %v428 = vpop.f32.mrb[0].mxu0
        %v429 = vadd.f32 0.0, %v428
        %v430 = vpop.f32.mrb[0].mxu0
        %v431 = vadd.f32 0.0, %v430
        %v432 = vpop.f32.mrb[0].mxu0
        %v433 = vadd.f32 0.0, %v432
        %v434 = vpop.f32.mrb[0].mxu0
        %v435 = vadd.f32 0.0, %v434
        %436 = vmatprep.mubr.bf16.mxu0 0
        %437 = vmatmul.mubr.bf16.gmra.mrb[0].mxu0 %v392
        %v438 = vpop.f32.mrb[0].mxu0
        %v439 = vadd.f32 0.0, %v438
        %v440 = vpop.f32.mrb[0].mxu0
        %v441 = vadd.f32 0.0, %v440
        %v442 = vpop.f32.mrb[0].mxu0
        %v443 = vadd.f32 0.0, %v442
        %v444 = vpop.f32.mrb[0].mxu0
        %v445 = vadd.f32 0.0, %v444
        %446 = vdwg.mxu0
        %447 = vmatprep.subr.bf16.mxu0 %v350
        %448 = vmatpush1.bf16.msra.mxu0 %v349
        %449 = vmatprep.subr.bf16.mxu0 %v354
        %450 = vmatpush1.bf16.msra.mxu0 %v353
        %451 = vmatprep.subr.bf16.mxu0 %v358
        %452 = vmatpush1.bf16.msra.mxu0 %v357
        %453 = vmatprep.subr.bf16.mxu0 %v362
        %454 = vmatpush1.bf16.msra.mxu0 %v361
        %455 = vmatprep.subr.bf16.mxu0 %v366
        %456 = vmatpush1.bf16.msra.mxu0 %v365
        %457 = vmatprep.subr.bf16.mxu0 0
        %458 = vmatpush1.bf16.msra.mxu0 0
        %459 = vmatprep.subr.bf16.mxu0 0
        %460 = vmatpush1.bf16.msra.mxu0 0
        %461 = vmatprep.subr.bf16.mxu0 0
        %462 = vmatpush1.bf16.msra.mxu0 0
        %463 = vmatprep.subr.bf16.mxu0 0
        %464 = vmatpush1.bf16.msra.mxu0 0
        %465 = vmatprep.subr.bf16.mxu0 0
        %466 = vmatpush1.bf16.msra.mxu0 0
        %467 = vmatprep.subr.bf16.mxu0 0
        %468 = vmatpush1.bf16.msra.mxu0 0
        %469 = vmatprep.subr.bf16.mxu0 0
        %470 = vmatpush1.bf16.msra.mxu0 0
        %471 = vmatprep.subr.bf16.mxu0 0
        %472 = vmatpush1.bf16.msra.mxu0 0
        %473 = vmatprep.subr.bf16.mxu0 0
        %474 = vmatpush1.bf16.msra.mxu0 0
        %475 = vmatprep.subr.bf16.mxu0 0
        %476 = vmatpush1.bf16.msra.mxu0 0
        %477 = vmatprep.subr.bf16.mxu0 0
        %478 = vmatpush1.bf16.msra.mxu0 0
        %479 = vmatprep.mubr.bf16.mxu0 0
        %480 = vmatmul.mubr.bf16.gmra.mrb[0].mxu0 %v389
        %v481 = vpop.f32.mrb[0].mxu0
        %v482 = vadd.f32 0.0, %v481
        %v483 = vpop.f32.mrb[0].mxu0
        %v484 = vadd.f32 0.0, %v483
        %v485 = vpop.f32.mrb[0].mxu0
        %v486 = vadd.f32 0.0, %v485
        %v487 = vpop.f32.mrb[0].mxu0
        %v488 = vadd.f32 0.0, %v487
        %489 = vmatprep.mubr.bf16.mxu0 0
        %490 = vmatmul.mubr.bf16.gmra.mrb[0].mxu0 %v392
        %v491 = vpop.f32.mrb[0].mxu0
        %v492 = vadd.f32 0.0, %v491
        %v493 = vpop.f32.mrb[0].mxu0
        %v494 = vadd.f32 0.0, %v493
        %v495 = vpop.f32.mrb[0].mxu0
        %v496 = vadd.f32 0.0, %v495
        %v497 = vpop.f32.mrb[0].mxu0
        %v498 = vadd.f32 0.0, %v497
        %499 = vdwg.mxu0
        %v500 = vld [vmem:[%s2] sm:$0xff]
        %v501 = vld [vmem:[%s2 + $0x8] sm:$0xff]
        %v502 = vld [vmem:[%s2 + $0x10] sm:$0xff]
        %v503 = vld [vmem:[%s2 + $0x18] sm:$0xff]
        %505 = vset.pattern.permute.xlu0 0
        %506 = vperm.xlu0 %505, %v500
        %v507 = vpop.permute.xlu0 %506
        %510 = vset.pattern.permute.xlu0 0
        %511 = vperm.xlu0 %510, %v501
        %v512 = vpop.permute.xlu0 %511
        %515 = vset.pattern.permute.xlu0 0
        %516 = vperm.xlu0 %515, %v502
        %v517 = vpop.permute.xlu0 %516
        %520 = vset.pattern.permute.xlu0 0
        %521 = vperm.xlu0 %520, %v503
        %v522 = vpop.permute.xlu0 %521
        %v524 = vmul.f32 %v429, %v507
        %v525 = vmul.f32 %v431, %v507
        %v526 = vmul.f32 %v482, %v507
        %v527 = vmul.f32 %v484, %v507
        %v528 = vmul.f32 %v433, %v512
        %v529 = vmul.f32 %v435, %v512
        %v530 = vmul.f32 %v486, %v512
        %v531 = vmul.f32 %v488, %v512
        %v532 = vmul.f32 %v439, %v517
        %v533 = vmul.f32 %v441, %v517
        %v534 = vmul.f32 %v492, %v517
        %v535 = vmul.f32 %v494, %v517
        %v536 = vmul.f32 %v443, %v522
        %v537 = vmul.f32 %v445, %v522
        %v538 = vmul.f32 %v496, %v522
        %v539 = vmul.f32 %v498, %v522
        %v540 = vld [vmem:[%s3] sm:$0xff]
        %v541 = vld [vmem:[%s3 + $0x8] sm:$0xff]
        %v542 = vld [vmem:[%s3 + $0x10] sm:$0xff]
        %v543 = vld [vmem:[%s3 + $0x18] sm:$0xff]
        %545 = vset.pattern.permute.xlu0 0
        %546 = vperm.xlu0 %545, %v540
        %v547 = vpop.permute.xlu0 %546
        %550 = vset.pattern.permute.xlu0 0
        %551 = vperm.xlu0 %550, %v541
        %v552 = vpop.permute.xlu0 %551
        %555 = vset.pattern.permute.xlu0 0
        %556 = vperm.xlu0 %555, %v542
        %v557 = vpop.permute.xlu0 %556
        %560 = vset.pattern.permute.xlu0 0
        %561 = vperm.xlu0 %560, %v543
        %v562 = vpop.permute.xlu0 %561
        %v564 = vadd.f32 %v524, %v547
        %v565 = vadd.f32 %v525, %v547
        %v566 = vadd.f32 %v526, %v547
        %v567 = vadd.f32 %v527, %v547
        %v568 = vadd.f32 %v528, %v552
        %v569 = vadd.f32 %v529, %v552
        %v570 = vadd.f32 %v530, %v552
        %v571 = vadd.f32 %v531, %v552
        %v572 = vadd.f32 %v532, %v557
        %v573 = vadd.f32 %v533, %v557
        %v574 = vadd.f32 %v534, %v557
        %v575 = vadd.f32 %v535, %v557
        %v576 = vadd.f32 %v536, %v562
        %v577 = vadd.f32 %v537, %v562
        %v578 = vadd.f32 %v538, %v562
        %v579 = vadd.f32 %v539, %v562
        %v580 = vmax.f32 %v564, 0.0
        %v581 = vmax.f32 %v565, 0.0
        %v582 = vmax.f32 %v566, 0.0
        %v583 = vmax.f32 %v567, 0.0
        %v584 = vmax.f32 %v568, 0.0
        %v585 = vmax.f32 %v569, 0.0
        %v586 = vmax.f32 %v570, 0.0
        %v587 = vmax.f32 %v571, 0.0
        %v588 = vmax.f32 %v572, 0.0
        %v589 = vmax.f32 %v573, 0.0
        %v590 = vmax.f32 %v574, 0.0
        %v591 = vmax.f32 %v575, 0.0
        %v592 = vmax.f32 %v576, 0.0
        %v593 = vmax.f32 %v577, 0.0
        %v594 = vmax.f32 %v578, 0.0
        %v595 = vmax.f32 %v579, 0.0
        %v596 = vpack.c.bf16 %v584, %v580
        %v597 = vpack.c.bf16 %v585, %v581
        %v598 = vpack.c.bf16 %v586, %v582
        %v599 = vpack.c.bf16 %v587, %v583
        %v600 = vpack.c.bf16 %v592, %v588
        %v601 = vpack.c.bf16 %v593, %v589
        %v602 = vpack.c.bf16 %v594, %v590
        %v603 = vpack.c.bf16 %v595, %v591
        %v612 = vunpack.c.l.b16 %v596
        %v613 = vunpack.c.l.b16 %v597
        %v614 = vunpack.c.l.b16 %v598
        %v615 = vunpack.c.l.b16 %v599
        %v616 = vunpack.c.h.b16 %v596
        %v617 = vunpack.c.h.b16 %v597
        %v618 = vunpack.c.h.b16 %v598
        %v619 = vunpack.c.h.b16 %v599
        %v620 = vunpack.c.l.b16 %v600
        %v621 = vunpack.c.l.b16 %v601
        %v622 = vunpack.c.l.b16 %v602
        %v623 = vunpack.c.l.b16 %v603
        %v624 = vunpack.c.h.b16 %v600
        %v625 = vunpack.c.h.b16 %v601
        %v626 = vunpack.c.h.b16 %v602
        %v627 = vunpack.c.h.b16 %v603
        %v628 = vpack.c.b16 %v613, %v612
        %v629 = vpack.c.b16 %v615, %v614
        %v630 = vpack.c.b16 %v617, %v616
        %v631 = vpack.c.b16 %v619, %v618
        %v632 = vpack.c.b16 %v621, %v620
        %v633 = vpack.c.b16 %v623, %v622
        %v634 = vpack.c.b16 %v625, %v624
        %v635 = vpack.c.b16 %v627, %v626
        %644 = vst [vmem:[%s249] sm:$0xff] %v628
        %645 = vst [vmem:[%s249 + $0x8] sm:$0xff] %v629
        %646 = vst [vmem:[%s249 + $0x10] sm:$0xff] %v630
        %647 = vst [vmem:[%s249 + $0x18] sm:$0xff] %v631
        %648 = vst [vmem:[%s249 + $0x20] sm:$0xff] %v632
        %649 = vst [vmem:[%s249 + $0x28] sm:$0xff] %v633
        %650 = vst [vmem:[%s249 + $0x30] sm:$0xff] %v634
        %651 = vst [vmem:[%s249 + $0x38] sm:$0xff] %v635
        %s652 = sand.u32 %s112, 1
        %s653 = sand.u32 %s112, 1
        %s654 = smul.addr %s653, 64
        %s655 = scalar_lea.vmem [#allocation3], %s654
        // Predicated region
        $region60: #{cnn_student_forward.6} parent=54 // pred_check
          %p656 = pneg %p122
        $region61: #{cnn_student_forward.6} parent=54 // pred_check_branch
          %658 = sbr.rel (%p656) target = $region63
        $region62: #{cnn_student_forward.6} parent=54 // pred_region
          %s659 = smul.u32 4, %s15
          %s660 = smul.addr %s659, 4
          %s661 = scalar_lea.vmem %s4, %s660
          // Predicated region
          $region64: #{cnn_student_forward.6} parent=62 // pred_check
            _
          $region65: #{cnn_student_forward.6} parent=62 // pred_check_branch
            %663 = sbr.rel (0) target = $region67
          $region66: #{cnn_student_forward.6} parent=62 // pred_region
            // Predicated region
            $region68: #{cnn_student_forward.6} parent=66 // pred_check
              _
            $region69: #{cnn_student_forward.6} parent=66 // pred_check_branch
              %665 = sbr.rel (0) target = $region71
            $region70: #{cnn_student_forward.6} parent=66 // pred_region
              loop: start=0, step=1, limit=1
              $region72: #{cnn_student_forward.6} parent=70 // loop_pre_header
                _
              $region73: #{cnn_student_forward.6} parent=70 // loop_header
                %s667 = sphi 0, %s671
                %p668 = scmp.ge.s32.totalorder %s667, 1
                %s672 = sphi %s655, %s655
                %s673 = sphi %s661, %s661
              $region74: #{cnn_student_forward.6} parent=70 // loop_header_branch
                %670 = sbr.rel (%p668) target = $region78
              $region75: #{cnn_student_forward.6} parent=70 // loop_body
                %v674 = vld [vmem:[%s672] sm:$0xff]
                %675 = vst [vmem:[%s673] sm:$0xff] %v674
                %v676 = vld [vmem:[%s672 + $0x8] sm:$0xff]
                %677 = vst [vmem:[%s673 + $0x8] sm:$0xff] %v676
                %v678 = vld [vmem:[%s672 + $0x10] sm:$0xff]
                %679 = vst [vmem:[%s673 + $0x40] sm:$0xff] %v678
                %v680 = vld [vmem:[%s672 + $0x18] sm:$0xff]
                %681 = vst [vmem:[%s673 + $0x48] sm:$0xff] %v680
                %v682 = vld [vmem:[%s672 + $0x20] sm:$0xff]
                %683 = vst [vmem:[%s673 + $0x80] sm:$0xff] %v682
                %v684 = vld [vmem:[%s672 + $0x28] sm:$0xff]
                %685 = vst [vmem:[%s673 + $0x88] sm:$0xff] %v684
                %v686 = vld [vmem:[%s672 + $0x30] sm:$0xff]
                %687 = vst [vmem:[%s673 + $0xc0] sm:$0xff] %v686
                %v688 = vld [vmem:[%s672 + $0x38] sm:$0xff]
                %689 = vst [vmem:[%s673 + $0xc8] sm:$0xff] %v688
              $region76: #{cnn_student_forward.6} parent=70 // loop_footer
                %s671 = sadd.s32 1, %s667
              $region77: #{cnn_student_forward.6} parent=70 // loop_footer_branch
                %666 = sbr.rel target = $region73
              $region78: #{cnn_student_forward.6} parent=70 // loop_exit
                _
            $region71: #{cnn_student_forward.6} parent=66 // pred_fallthru
              _
            // Predicated region
            $region79: #{cnn_student_forward.6} parent=66 // pred_check
              _
            $region80: #{cnn_student_forward.6} parent=66 // pred_check_branch
              %691 = sbr.rel target = $region82
            $region81: #{cnn_student_forward.6} parent=66 // pred_region
              _
            $region82: #{cnn_student_forward.6} parent=66 // pred_fallthru
              _
          $region67: #{cnn_student_forward.6} parent=62 // pred_fallthru
            _
          %692 = vnop
        $region63: #{cnn_student_forward.6} parent=54 // pred_fallthru
          _
      $region55: #{cnn_student_forward.6} parent=5 // pred_fallthru
        _
      %p693 = scmp.le.s32.totalorder 2, %s10
      // Predicated region
      $region83: #{cnn_student_forward.6} parent=5 // pred_check
        %p694 = pneg %p693
      $region84: #{cnn_student_forward.6} parent=5 // pred_check_branch
        %696 = sbr.rel (%p694) target = $region86
      $region85: #{cnn_student_forward.6} parent=5 // pred_region
        %s697 = ssub.s32 %s10, 2
        // Predicated region
        $region87: #{cnn_student_forward.6} parent=85 // pred_check
          %p698 = pneg %p128
        $region88: #{cnn_student_forward.6} parent=85 // pred_check_branch
          %700 = sbr.rel (%p698) target = $region90
        $region89: #{cnn_student_forward.6} parent=85 // pred_region
          %s701 = sand.u32 %s113, 1
          %s702 = sand.u32 %s113, 1
          %s703 = smul.addr %s702, 64
          %s704 = scalar_lea.vmem [#allocation3], %s703
        $region90: #{cnn_student_forward.6} parent=85 // pred_fallthru
          _
      $region86: #{cnn_student_forward.6} parent=5 // pred_fallthru
        _
    $region6: #{cnn_student_forward.6} parent=1 // loop_footer
      %s14 = sadd.s32 1, %s10
    $region7: #{cnn_student_forward.6} parent=1 // loop_footer_branch
      %9 = sbr.rel target = $region3
    $region8: #{cnn_student_forward.6} parent=1 // loop_exit
      _

// kernel: cnn_student_forward.7
$region0: #{cnn_student_forward.7}
  #allocation0 [shape = 'u32[]', space=smem, size = 0x4, offset = 0x4, fixed_abs, tag = 'smem constant byte address 0x4 - core index']
  #allocation1 [shape = 'u32[144,128]{1,0:T(1,128)}', space=vmem, size = 0x12000, scoped, tag = 'internal scratch']
  %s0 = inlined_call_operand.vmem [shape: bf16[64,800], index: 0, kind: input, shape index: {}]
  %s1 = inlined_call_operand.vmem [shape: bf16[800,1536], index: 1, kind: input, shape index: {}]
  %s2 = inlined_call_operand.vmem [shape: f32[64,1], index: 2, kind: input, shape index: {}]
  %s3 = inlined_call_operand.vmem [shape: f32[64,1], index: 3, kind: input, shape index: {}]
  %s4 = inlined_call_operand.vmem [shape: bf16[64,1536], index: 4, kind: output, shape index: {}]
  %s5 = sld [smem:[#allocation0]]
  $region91: #{cnn_student_forward.7} parent=0
    _
  %s7 = ssub.s32 1, %s5
  %s8 = scalar_select 0, %s7, %s5
  $region1: #{cnn_student_forward.7} parent=0
    #allocation2 [shape = 'u8[1638400]{0}', space=vmem, size = 0x190000, scoped, tag = 'input window, operand 1']
    #allocation3 [shape = 'u8[131072]{0}', space=vmem, size = 0x20000, scoped, tag = 'output window, operand 0']
    loop: start=0, step=1, limit=5
    $region2: #{cnn_student_forward.7} parent=1 // loop_pre_header
      _
    $region3: #{cnn_student_forward.7} parent=1 // loop_header
      %s10 = sphi 0, %s14
      %p11 = scmp.ge.s32.totalorder %s10, 5
      %s18 = sphi 0, %s18
      %s20 = sphi 0, %s18
      %s21 = sphi 0, %s20
      %s35 = sphi 0, %s21
      %s41 = sphi 0, %s43
      %s44 = sphi 0, %s41
      %s45 = sphi 0, %s44
      %s61 = sphi 0, %s45
      %s65 = sphi 0, %s65
      %s67 = sphi 0, %s65
      %s68 = sphi 0, %s67
      %s82 = sphi 0, %s68
      %s86 = sphi 0, %s86
      %s88 = sphi 0, %s86
      %s89 = sphi 0, %s88
      %s103 = sphi 0, %s89
      %s109 = sphi 0, %s111
      %s112 = sphi 0, %s109
      %s113 = sphi 0, %s112
      %s129 = sphi 0, %s113
    $region4: #{cnn_student_forward.7} parent=1 // loop_header_branch
      %13 = sbr.rel (%p11) target = $region8
    $region5: #{cnn_student_forward.7} parent=1 // loop_body
      %s15 = ssub.s32 %s10, 1
      %s16 = ssub.s32 %s10, 2
      %s17 = sadd.s32 %s10, 1
      %s19 = sadd.s32 %s18, 1
      %p22 = scmp.eq.s32.totalorder %s10, 2
      %p23 = scmp.ne.s32.totalorder %s18, %s20
      %p24 = scmp.eq.s32.totalorder %s10, 0
      %p25 = por %p23, %p24
      %p26 = scmp.ne.s32.totalorder %s18, %s20
      %p27 = scmp.eq.s32.totalorder %s15, 2
      %p28 = por %p26, %p27
      %p29 = scmp.ne.s32.totalorder %s20, %s21
      %p30 = scmp.eq.s32.totalorder %s15, 0
      %p31 = por %p29, %p30
      %p32 = scmp.ne.s32.totalorder %s20, %s21
      %p33 = scmp.eq.s32.totalorder %s16, 2
      %p34 = por %p32, %p33
      %p36 = scmp.ne.s32.totalorder %s21, %s35
      %p37 = scmp.eq.s32.totalorder %s16, 0
      %p38 = por %p36, %p37
      %s39 = ssub.s32 %s10, %s17
      %p40 = scmp.eq.s32.totalorder %s39, 0
      %s42 = sadd.s32 %s41, 1
      %s43 = scalar_select %p40, %s41, %s42
      %p46 = pneg %p40
      %p47 = scmp.eq.s32.totalorder %s10, 2
      %p48 = por %p46, %p47
      %p49 = scmp.ne.s32.totalorder %s41, %s44
      %p50 = scmp.eq.s32.totalorder %s10, 0
      %p51 = por %p49, %p50
      %p52 = scmp.ne.s32.totalorder %s41, %s44
      %p53 = scmp.eq.s32.totalorder %s15, 2
      %p54 = por %p52, %p53
      %p55 = scmp.ne.s32.totalorder %s44, %s45
      %p56 = scmp.eq.s32.totalorder %s15, 0
      %p57 = por %p55, %p56
      %p58 = scmp.ne.s32.totalorder %s44, %s45
      %p59 = scmp.eq.s32.totalorder %s16, 2
      %p60 = por %p58, %p59
      %p62 = scmp.ne.s32.totalorder %s45, %s61
      %p63 = scmp.eq.s32.totalorder %s16, 0
      %p64 = por %p62, %p63
      %s66 = sadd.s32 %s65, 1
      %p69 = scmp.eq.s32.totalorder %s10, 2
      %p70 = scmp.ne.s32.totalorder %s65, %s67
      %p71 = scmp.eq.s32.totalorder %s10, 0
      %p72 = por %p70, %p71
      %p73 = scmp.ne.s32.totalorder %s65, %s67
      %p74 = scmp.eq.s32.totalorder %s15, 2
      %p75 = por %p73, %p74
      %p76 = scmp.ne.s32.totalorder %s67, %s68
      %p77 = scmp.eq.s32.totalorder %s15, 0
      %p78 = por %p76, %p77
      %p79 = scmp.ne.s32.totalorder %s67, %s68
      %p80 = scmp.eq.s32.totalorder %s16, 2
      %p81 = por %p79, %p80
      %p83 = scmp.ne.s32.totalorder %s68, %s82
      %p84 = scmp.eq.s32.totalorder %s16, 0
      %p85 = por %p83, %p84
      %s87 = sadd.s32 %s86, 1
      %p90 = scmp.eq.s32.totalorder %s10, 2
      %p91 = scmp.ne.s32.totalorder %s86, %s88
      %p92 = scmp.eq.s32.totalorder %s10, 0
      %p93 = por %p91, %p92
      %p94 = scmp.ne.s32.totalorder %s86, %s88
      %p95 = scmp.eq.s32.totalorder %s15, 2
      %p96 = por %p94, %p95
      %p97 = scmp.ne.s32.totalorder %s88, %s89
      %p98 = scmp.eq.s32.totalorder %s15, 0
      %p99 = por %p97, %p98
      %p100 = scmp.ne.s32.totalorder %s88, %s89
      %p101 = scmp.eq.s32.totalorder %s16, 2
      %p102 = por %p100, %p101
      %p104 = scmp.ne.s32.totalorder %s89, %s103
      %p105 = scmp.eq.s32.totalorder %s16, 0
      %p106 = por %p104, %p105
      %s107 = ssub.s32 %s10, %s17
      %p108 = scmp.eq.s32.totalorder %s107, 0
      %s110 = sadd.s32 %s109, 1
      %s111 = scalar_select %p108, %s109, %s110
      %p114 = pneg %p108
      %p115 = scmp.eq.s32.totalorder %s10, 2
      %p116 = por %p114, %p115
      %p117 = scmp.ne.s32.totalorder %s109, %s112
      %p118 = scmp.eq.s32.totalorder %s10, 0
      %p119 = por %p117, %p118
      %p120 = scmp.ne.s32.totalorder %s109, %s112
      %p121 = scmp.eq.s32.totalorder %s15, 2
      %p122 = por %p120, %p121
      %p123 = scmp.ne.s32.totalorder %s112, %s113
      %p124 = scmp.eq.s32.totalorder %s15, 0
      %p125 = por %p123, %p124
      %p126 = scmp.ne.s32.totalorder %s112, %s113
      %p127 = scmp.eq.s32.totalorder %s16, 2
      %p128 = por %p126, %p127
      %p130 = scmp.ne.s32.totalorder %s113, %s129
      %p131 = scmp.eq.s32.totalorder %s16, 0
      %p132 = por %p130, %p131
      %p133 = scmp.le.s32.totalorder 1, %s10
      %p134 = scmp.lt.s32.totalorder %s10, 4
      %p135 = pnand %p133, %p134
      %p136 = pneg %p135
      // Predicated region
      $region9: #{cnn_student_forward.7} parent=5 // pred_check
        _
      $region10: #{cnn_student_forward.7} parent=5 // pred_check_branch
        %138 = sbr.rel (%p135) target = $region12
      $region11: #{cnn_student_forward.7} parent=5 // pred_region
        %s139 = ssub.s32 %s10, 1
        // Predicated region
        $region13: #{cnn_student_forward.7} parent=11 // pred_check
          %p140 = pneg %p31
        $region14: #{cnn_student_forward.7} parent=11 // pred_check_branch
          %142 = sbr.rel (%p140) target = $region16
        $region15: #{cnn_student_forward.7} parent=11 // pred_region
          _
        $region16: #{cnn_student_forward.7} parent=11 // pred_fallthru
          _
        // Predicated region
        $region17: #{cnn_student_forward.7} parent=11 // pred_check
          %p143 = pneg %p78
        $region18: #{cnn_student_forward.7} parent=11 // pred_check_branch
          %145 = sbr.rel (%p143) target = $region20
        $region19: #{cnn_student_forward.7} parent=11 // pred_region
          _
        $region20: #{cnn_student_forward.7} parent=11 // pred_fallthru
          _
        // Predicated region
        $region21: #{cnn_student_forward.7} parent=11 // pred_check
          %p146 = pneg %p99
        $region22: #{cnn_student_forward.7} parent=11 // pred_check_branch
          %148 = sbr.rel (%p146) target = $region24
        $region23: #{cnn_student_forward.7} parent=11 // pred_region
          _
        $region24: #{cnn_student_forward.7} parent=11 // pred_fallthru
          _
      $region12: #{cnn_student_forward.7} parent=5 // pred_fallthru
        _
      %p149 = scmp.lt.s32.totalorder %s10, 3
      // Predicated region
      $region25: #{cnn_student_forward.7} parent=5 // pred_check
        %p150 = pneg %p149
      $region26: #{cnn_student_forward.7} parent=5 // pred_check_branch
        %152 = sbr.rel (%p150) target = $region28
      $region27: #{cnn_student_forward.7} parent=5 // pred_region
        // Predicated region
        $region29: #{cnn_student_forward.7} parent=27 // pred_check
          %p153 = pneg %p51
        $region30: #{cnn_student_forward.7} parent=27 // pred_check_branch
          %155 = sbr.rel (%p153) target = $region32
        $region31: #{cnn_student_forward.7} parent=27 // pred_region
          %s156 = sand.u32 %s41, 1
          %s157 = sand.u32 %s41, 1
          %s158 = smul.addr %s157, 1600
          %s159 = scalar_lea.vmem [#allocation2], %s158
          %s160 = smul.u32 4, %s10
          %s161 = smul.addr %s160, 4
          %s162 = scalar_lea.vmem %s1, %s161
          // Predicated region
          $region33: #{cnn_student_forward.7} parent=31 // pred_check
            _
          $region34: #{cnn_student_forward.7} parent=31 // pred_check_branch
            %164 = sbr.rel (0) target = $region36
          $region35: #{cnn_student_forward.7} parent=31 // pred_region
            // Predicated region
            $region37: #{cnn_student_forward.7} parent=35 // pred_check
              _
            $region38: #{cnn_student_forward.7} parent=35 // pred_check_branch
              %166 = sbr.rel (0) target = $region40
            $region39: #{cnn_student_forward.7} parent=35 // pred_region
              loop: start=0, step=1, limit=1
              $region41: #{cnn_student_forward.7} parent=39 // loop_pre_header
                _
              $region42: #{cnn_student_forward.7} parent=39 // loop_header
                %s168 = sphi 0, %s172
                %p169 = scmp.ge.s32.totalorder %s168, 1
                %s173 = sphi %s162, %s162
                %s174 = sphi %s159, %s159
              $region43: #{cnn_student_forward.7} parent=39 // loop_header_branch
                %171 = sbr.rel (%p169) target = $region47
              $region44: #{cnn_student_forward.7} parent=39 // loop_body
                %v175 = vld [vmem:[%s173] sm:$0xff]
                %176 = vst [vmem:[%s174] sm:$0xff] %v175
                %v177 = vld [vmem:[%s173 + $0x8] sm:$0xff]
                %178 = vst [vmem:[%s174 + $0x8] sm:$0xff] %v177
                %v179 = vld [vmem:[%s173 + $0x30] sm:$0xff]
                %180 = vst [vmem:[%s174 + $0x10] sm:$0xff] %v179
                %v181 = vld [vmem:[%s173 + $0x38] sm:$0xff]
                %182 = vst [vmem:[%s174 + $0x18] sm:$0xff] %v181
                %v183 = vld [vmem:[%s173 + $0x60] sm:$0xff]
                %184 = vst [vmem:[%s174 + $0x20] sm:$0xff] %v183
                %v185 = vld [vmem:[%s173 + $0x68] sm:$0xff]
                %186 = vst [vmem:[%s174 + $0x28] sm:$0xff] %v185
                %v187 = vld [vmem:[%s173 + $0x90] sm:$0xff]
                %188 = vst [vmem:[%s174 + $0x30] sm:$0xff] %v187
                %v189 = vld [vmem:[%s173 + $0x98] sm:$0xff]
                %190 = vst [vmem:[%s174 + $0x38] sm:$0xff] %v189
                %v191 = vld [vmem:[%s173 + $0xc0] sm:$0xff]
                %192 = vst [vmem:[%s174 + $0x40] sm:$0xff] %v191
                %v193 = vld [vmem:[%s173 + $0xc8] sm:$0xff]
                %194 = vst [vmem:[%s174 + $0x48] sm:$0xff] %v193
                %v195 = vld [vmem:[%s173 + $0xf0] sm:$0xff]
                %196 = vst [vmem:[%s174 + $0x50] sm:$0xff] %v195
                %v197 = vld [vmem:[%s173 + $0xf8] sm:$0xff]
                %198 = vst [vmem:[%s174 + $0x58] sm:$0xff] %v197
                %v199 = vld [vmem:[%s173 + $0x120] sm:$0xff]
                %200 = vst [vmem:[%s174 + $0x60] sm:$0xff] %v199
                %v201 = vld [vmem:[%s173 + $0x128] sm:$0xff]
                %202 = vst [vmem:[%s174 + $0x68] sm:$0xff] %v201
                %v203 = vld [vmem:[%s173 + $0x150] sm:$0xff]
                %204 = vst [vmem:[%s174 + $0x70] sm:$0xff] %v203
                %v205 = vld [vmem:[%s173 + $0x158] sm:$0xff]
                %206 = vst [vmem:[%s174 + $0x78] sm:$0xff] %v205
                %v207 = vld [vmem:[%s173 + $0x180] sm:$0xff]
                %208 = vst [vmem:[%s174 + $0x80] sm:$0xff] %v207
                %v209 = vld [vmem:[%s173 + $0x188] sm:$0xff]
                %210 = vst [vmem:[%s174 + $0x88] sm:$0xff] %v209
                %v211 = vld [vmem:[%s173 + $0x1b0] sm:$0xff]
                %212 = vst [vmem:[%s174 + $0x90] sm:$0xff] %v211
                %v213 = vld [vmem:[%s173 + $0x1b8] sm:$0xff]
                %214 = vst [vmem:[%s174 + $0x98] sm:$0xff] %v213
                %v215 = vld [vmem:[%s173 + $0x1e0] sm:$0xff]
                %216 = vst [vmem:[%s174 + $0xa0] sm:$0xff] %v215
                %v217 = vld [vmem:[%s173 + $0x1e8] sm:$0xff]
                %218 = vst [vmem:[%s174 + $0xa8] sm:$0xff] %v217
                %v219 = vld [vmem:[%s173 + $0x210] sm:$0xff]
                %220 = vst [vmem:[%s174 + $0xb0] sm:$0xff] %v219
                %v221 = vld [vmem:[%s173 + $0x218] sm:$0xff]
                %222 = vst [vmem:[%s174 + $0xb8] sm:$0xff] %v221
                %v223 = vld [vmem:[%s173 + $0x240] sm:$0xff]
                %224 = vst [vmem:[%s174 + $0xc0] sm:$0xff] %v223
                %v225 = vld [vmem:[%s173 + $0x248] sm:$0xff]
                %226 = vst [vmem:[%s174 + $0xc8] sm:$0xff] %v225
                %v227 = vld [vmem:[%s173 + $0x270] sm:$0xff]
                %228 = vst [vmem:[%s174 + $0xd0] sm:$0xff] %v227
                %v229 = vld [vmem:[%s173 + $0x278] sm:$0xff]
                %230 = vst [vmem:[%s174 + $0xd8] sm:$0xff] %v229
                %v231 = vld [vmem:[%s173 + $0x2a0] sm:$0xff]
                %232 = vst [vmem:[%s174 + $0xe0] sm:$0xff] %v231
                %v233 = vld [vmem:[%s173 + $0x2a8] sm:$0xff]
                %234 = vst [vmem:[%s174 + $0xe8] sm:$0xff] %v233
                %v235 = vld [vmem:[%s173 + $0x2d0] sm:$0xff]
                %236 = vst [vmem:[%s174 + $0xf0] sm:$0xff] %v235
                %v237 = vld [vmem:[%s173 + $0x2d8] sm:$0xff]
                %238 = vst [vmem:[%s174 + $0xf8] sm:$0xff] %v237
                %v239 = vld [vmem:[%s173 + $0x300] sm:$0xff]
                %240 = vst [vmem:[%s174 + $0x100] sm:$0xff] %v239
                %v241 = vld [vmem:[%s173 + $0x308] sm:$0xff]
                %242 = vst [vmem:[%s174 + $0x108] sm:$0xff] %v241
                %v243 = vld [vmem:[%s173 + $0x330] sm:$0xff]
                %244 = vst [vmem:[%s174 + $0x110] sm:$0xff] %v243
                %v245 = vld [vmem:[%s173 + $0x338] sm:$0xff]
                %246 = vst [vmem:[%s174 + $0x118] sm:$0xff] %v245
                %v247 = vld [vmem:[%s173 + $0x360] sm:$0xff]
                %248 = vst [vmem:[%s174 + $0x120] sm:$0xff] %v247
                %v249 = vld [vmem:[%s173 + $0x368] sm:$0xff]
                %250 = vst [vmem:[%s174 + $0x128] sm:$0xff] %v249
                %v251 = vld [vmem:[%s173 + $0x390] sm:$0xff]
                %252 = vst [vmem:[%s174 + $0x130] sm:$0xff] %v251
                %v253 = vld [vmem:[%s173 + $0x398] sm:$0xff]
                %254 = vst [vmem:[%s174 + $0x138] sm:$0xff] %v253
                %v255 = vld [vmem:[%s173 + $0x3c0] sm:$0xff]
                %256 = vst [vmem:[%s174 + $0x140] sm:$0xff] %v255
                %v257 = vld [vmem:[%s173 + $0x3c8] sm:$0xff]
                %258 = vst [vmem:[%s174 + $0x148] sm:$0xff] %v257
                %v259 = vld [vmem:[%s173 + $0x3f0] sm:$0xff]
                %260 = vst [vmem:[%s174 + $0x150] sm:$0xff] %v259
                %v261 = vld [vmem:[%s173 + $0x3f8] sm:$0xff]
                %262 = vst [vmem:[%s174 + $0x158] sm:$0xff] %v261
                %v263 = vld [vmem:[%s173 + $0x420] sm:$0xff]
                %264 = vst [vmem:[%s174 + $0x160] sm:$0xff] %v263
                %v265 = vld [vmem:[%s173 + $0x428] sm:$0xff]
                %266 = vst [vmem:[%s174 + $0x168] sm:$0xff] %v265
                %v267 = vld [vmem:[%s173 + $0x450] sm:$0xff]
                %268 = vst [vmem:[%s174 + $0x170] sm:$0xff] %v267
                %v269 = vld [vmem:[%s173 + $0x458] sm:$0xff]
                %270 = vst [vmem:[%s174 + $0x178] sm:$0xff] %v269
                %v271 = vld [vmem:[%s173 + $0x480] sm:$0xff]
                %272 = vst [vmem:[%s174 + $0x180] sm:$0xff] %v271
                %v273 = vld [vmem:[%s173 + $0x488] sm:$0xff]
                %274 = vst [vmem:[%s174 + $0x188] sm:$0xff] %v273
                %v275 = vld [vmem:[%s173 + $0x4b0] sm:$0xff]
                %276 = vst [vmem:[%s174 + $0x190] sm:$0xff] %v275
                %v277 = vld [vmem:[%s173 + $0x4b8] sm:$0xff]
                %278 = vst [vmem:[%s174 + $0x198] sm:$0xff] %v277
                %v279 = vld [vmem:[%s173 + $0x4e0] sm:$0xff]
                %280 = vst [vmem:[%s174 + $0x1a0] sm:$0xff] %v279
                %v281 = vld [vmem:[%s173 + $0x4e8] sm:$0xff]
                %282 = vst [vmem:[%s174 + $0x1a8] sm:$0xff] %v281
                %v283 = vld [vmem:[%s173 + $0x510] sm:$0xff]
                %284 = vst [vmem:[%s174 + $0x1b0] sm:$0xff] %v283
                %v285 = vld [vmem:[%s173 + $0x518] sm:$0xff]
                %286 = vst [vmem:[%s174 + $0x1b8] sm:$0xff] %v285
                %v287 = vld [vmem:[%s173 + $0x540] sm:$0xff]
                %288 = vst [vmem:[%s174 + $0x1c0] sm:$0xff] %v287
                %v289 = vld [vmem:[%s173 + $0x548] sm:$0xff]
                %290 = vst [vmem:[%s174 + $0x1c8] sm:$0xff] %v289
                %v291 = vld [vmem:[%s173 + $0x570] sm:$0xff]
                %292 = vst [vmem:[%s174 + $0x1d0] sm:$0xff] %v291
                %v293 = vld [vmem:[%s173 + $0x578] sm:$0xff]
                %294 = vst [vmem:[%s174 + $0x1d8] sm:$0xff] %v293
                %v295 = vld [vmem:[%s173 + $0x5a0] sm:$0xff]
                %296 = vst [vmem:[%s174 + $0x1e0] sm:$0xff] %v295
                %v297 = vld [vmem:[%s173 + $0x5a8] sm:$0xff]
                %298 = vst [vmem:[%s174 + $0x1e8] sm:$0xff] %v297
                %v299 = vld [vmem:[%s173 + $0x5d0] sm:$0xff]
                %300 = vst [vmem:[%s174 + $0x1f0] sm:$0xff] %v299
                %v301 = vld [vmem:[%s173 + $0x5d8] sm:$0xff]
                %302 = vst [vmem:[%s174 + $0x1f8] sm:$0xff] %v301
                %v303 = vld [vmem:[%s173 + $0x600] sm:$0xff]
                %304 = vst [vmem:[%s174 + $0x200] sm:$0xff] %v303
                %v305 = vld [vmem:[%s173 + $0x608] sm:$0xff]
                %306 = vst [vmem:[%s174 + $0x208] sm:$0xff] %v305
                %v307 = vld [vmem:[%s173 + $0x630] sm:$0xff]
                %308 = vst [vmem:[%s174 + $0x210] sm:$0xff] %v307
                %v309 = vld [vmem:[%s173 + $0x638] sm:$0xff]
                %310 = vst [vmem:[%s174 + $0x218] sm:$0xff] %v309
                %v311 = vld [vmem:[%s173 + $0x660] sm:$0xff]
                %312 = vst [vmem:[%s174 + $0x220] sm:$0xff] %v311
                %v313 = vld [vmem:[%s173 + $0x668] sm:$0xff]
                %314 = vst [vmem:[%s174 + $0x228] sm:$0xff] %v313
                %v315 = vld [vmem:[%s173 + $0x690] sm:$0xff]
                %316 = vst [vmem:[%s174 + $0x230] sm:$0xff] %v315
                %v317 = vld [vmem:[%s173 + $0x698] sm:$0xff]
                %318 = vst [vmem:[%s174 + $0x238] sm:$0xff] %v317
                %v319 = vld [vmem:[%s173 + $0x6c0] sm:$0xff]
                %320 = vst [vmem:[%s174 + $0x240] sm:$0xff] %v319
                %v321 = vld [vmem:[%s173 + $0x6c8] sm:$0xff]
                %322 = vst [vmem:[%s174 + $0x248] sm:$0xff] %v321
                %v323 = vld [vmem:[%s173 + $0x6f0] sm:$0xff]
                %324 = vst [vmem:[%s174 + $0x250] sm:$0xff] %v323
                %v325 = vld [vmem:[%s173 + $0x6f8] sm:$0xff]
                %326 = vst [vmem:[%s174 + $0x258] sm:$0xff] %v325
                %v327 = vld [vmem:[%s173 + $0x720] sm:$0xff]
                %328 = vst [vmem:[%s174 + $0x260] sm:$0xff] %v327
                %v329 = vld [vmem:[%s173 + $0x728] sm:$0xff]
                %330 = vst [vmem:[%s174 + $0x268] sm:$0xff] %v329
                %v331 = vld [vmem:[%s173 + $0x750] sm:$0xff]
                %332 = vst [vmem:[%s174 + $0x270] sm:$0xff] %v331
                %v333 = vld [vmem:[%s173 + $0x758] sm:$0xff]
                %334 = vst [vmem:[%s174 + $0x278] sm:$0xff] %v333
                %v335 = vld [vmem:[%s173 + $0x780] sm:$0xff]
                %336 = vst [vmem:[%s174 + $0x280] sm:$0xff] %v335
                %v337 = vld [vmem:[%s173 + $0x788] sm:$0xff]
                %338 = vst [vmem:[%s174 + $0x288] sm:$0xff] %v337
                %v339 = vld [vmem:[%s173 + $0x7b0] sm:$0xff]
                %340 = vst [vmem:[%s174 + $0x290] sm:$0xff] %v339
                %v341 = vld [vmem:[%s173 + $0x7b8] sm:$0xff]
                %342 = vst [vmem:[%s174 + $0x298] sm:$0xff] %v341
                %v343 = vld [vmem:[%s173 + $0x7e0] sm:$0xff]
                %344 = vst [vmem:[%s174 + $0x2a0] sm:$0xff] %v343
                %v345 = vld [vmem:[%s173 + $0x7e8] sm:$0xff]
                %346 = vst [vmem:[%s174 + $0x2a8] sm:$0xff] %v345
                %v347 = vld [vmem:[%s173 + $0x810] sm:$0xff]
                %348 = vst [vmem:[%s174 + $0x2b0] sm:$0xff] %v347
                %v349 = vld [vmem:[%s173 + $0x818] sm:$0xff]
                %350 = vst [vmem:[%s174 + $0x2b8] sm:$0xff] %v349
                %v351 = vld [vmem:[%s173 + $0x840] sm:$0xff]
                %352 = vst [vmem:[%s174 + $0x2c0] sm:$0xff] %v351
                %v353 = vld [vmem:[%s173 + $0x848] sm:$0xff]
                %354 = vst [vmem:[%s174 + $0x2c8] sm:$0xff] %v353
                %v355 = vld [vmem:[%s173 + $0x870] sm:$0xff]
                %356 = vst [vmem:[%s174 + $0x2d0] sm:$0xff] %v355
                %v357 = vld [vmem:[%s173 + $0x878] sm:$0xff]
                %358 = vst [vmem:[%s174 + $0x2d8] sm:$0xff] %v357
                %v359 = vld [vmem:[%s173 + $0x8a0] sm:$0xff]
                %360 = vst [vmem:[%s174 + $0x2e0] sm:$0xff] %v359
                %v361 = vld [vmem:[%s173 + $0x8a8] sm:$0xff]
                %362 = vst [vmem:[%s174 + $0x2e8] sm:$0xff] %v361
                %v363 = vld [vmem:[%s173 + $0x8d0] sm:$0xff]
                %364 = vst [vmem:[%s174 + $0x2f0] sm:$0xff] %v363
                %v365 = vld [vmem:[%s173 + $0x8d8] sm:$0xff]
                %366 = vst [vmem:[%s174 + $0x2f8] sm:$0xff] %v365
                %v367 = vld [vmem:[%s173 + $0x900] sm:$0xff]
                %368 = vst [vmem:[%s174 + $0x300] sm:$0xff] %v367
                %v369 = vld [vmem:[%s173 + $0x908] sm:$0xff]
                %370 = vst [vmem:[%s174 + $0x308] sm:$0xff] %v369
                %v371 = vld [vmem:[%s173 + $0x930] sm:$0xff]
                %372 = vst [vmem:[%s174 + $0x310] sm:$0xff] %v371
                %v373 = vld [vmem:[%s173 + $0x938] sm:$0xff]
                %374 = vst [vmem:[%s174 + $0x318] sm:$0xff] %v373
                %v375 = vld [vmem:[%s173 + $0x960] sm:$0xff]
                %376 = vst [vmem:[%s174 + $0x320] sm:$0xff] %v375
                %v377 = vld [vmem:[%s173 + $0x968] sm:$0xff]
                %378 = vst [vmem:[%s174 + $0x328] sm:$0xff] %v377
                %v379 = vld [vmem:[%s173 + $0x990] sm:$0xff]
                %380 = vst [vmem:[%s174 + $0x330] sm:$0xff] %v379
                %v381 = vld [vmem:[%s173 + $0x998] sm:$0xff]
                %382 = vst [vmem:[%s174 + $0x338] sm:$0xff] %v381
                %v383 = vld [vmem:[%s173 + $0x9c0] sm:$0xff]
                %384 = vst [vmem:[%s174 + $0x340] sm:$0xff] %v383
                %v385 = vld [vmem:[%s173 + $0x9c8] sm:$0xff]
                %386 = vst [vmem:[%s174 + $0x348] sm:$0xff] %v385
                %v387 = vld [vmem:[%s173 + $0x9f0] sm:$0xff]
                %388 = vst [vmem:[%s174 + $0x350] sm:$0xff] %v387
                %v389 = vld [vmem:[%s173 + $0x9f8] sm:$0xff]
                %390 = vst [vmem:[%s174 + $0x358] sm:$0xff] %v389
                %v391 = vld [vmem:[%s173 + $0xa20] sm:$0xff]
                %392 = vst [vmem:[%s174 + $0x360] sm:$0xff] %v391
                %v393 = vld [vmem:[%s173 + $0xa28] sm:$0xff]
                %394 = vst [vmem:[%s174 + $0x368] sm:$0xff] %v393
                %v395 = vld [vmem:[%s173 + $0xa50] sm:$0xff]
                %396 = vst [vmem:[%s174 + $0x370] sm:$0xff] %v395
                %v397 = vld [vmem:[%s173 + $0xa58] sm:$0xff]
                %398 = vst [vmem:[%s174 + $0x378] sm:$0xff] %v397
                %v399 = vld [vmem:[%s173 + $0xa80] sm:$0xff]
                %400 = vst [vmem:[%s174 + $0x380] sm:$0xff] %v399
                %v401 = vld [vmem:[%s173 + $0xa88] sm:$0xff]
                %402 = vst [vmem:[%s174 + $0x388] sm:$0xff] %v401
                %v403 = vld [vmem:[%s173 + $0xab0] sm:$0xff]
                %404 = vst [vmem:[%s174 + $0x390] sm:$0xff] %v403
                %v405 = vld [vmem:[%s173 + $0xab8] sm:$0xff]
                %406 = vst [vmem:[%s174 + $0x398] sm:$0xff] %v405
                %v407 = vld [vmem:[%s173 + $0xae0] sm:$0xff]
                %408 = vst [vmem:[%s174 + $0x3a0] sm:$0xff] %v407
                %v409 = vld [vmem:[%s173 + $0xae8] sm:$0xff]
                %410 = vst [vmem:[%s174 + $0x3a8] sm:$0xff] %v409
                %v411 = vld [vmem:[%s173 + $0xb10] sm:$0xff]
                %412 = vst [vmem:[%s174 + $0x3b0] sm:$0xff] %v411
                %v413 = vld [vmem:[%s173 + $0xb18] sm:$0xff]
                %414 = vst [vmem:[%s174 + $0x3b8] sm:$0xff] %v413
                %v415 = vld [vmem:[%s173 + $0xb40] sm:$0xff]
                %416 = vst [vmem:[%s174 + $0x3c0] sm:$0xff] %v415
                %v417 = vld [vmem:[%s173 + $0xb48] sm:$0xff]
                %418 = vst [vmem:[%s174 + $0x3c8] sm:$0xff] %v417
                %v419 = vld [vmem:[%s173 + $0xb70] sm:$0xff]
                %420 = vst [vmem:[%s174 + $0x3d0] sm:$0xff] %v419
                %v421 = vld [vmem:[%s173 + $0xb78] sm:$0xff]
                %422 = vst [vmem:[%s174 + $0x3d8] sm:$0xff] %v421
                %v423 = vld [vmem:[%s173 + $0xba0] sm:$0xff]
                %424 = vst [vmem:[%s174 + $0x3e0] sm:$0xff] %v423
                %v425 = vld [vmem:[%s173 + $0xba8] sm:$0xff]
                %426 = vst [vmem:[%s174 + $0x3e8] sm:$0xff] %v425
                %v427 = vld [vmem:[%s173 + $0xbd0] sm:$0xff]
                %428 = vst [vmem:[%s174 + $0x3f0] sm:$0xff] %v427
                %v429 = vld [vmem:[%s173 + $0xbd8] sm:$0xff]
                %430 = vst [vmem:[%s174 + $0x3f8] sm:$0xff] %v429
                %v431 = vld [vmem:[%s173 + $0xc00] sm:$0xff]
                %432 = vst [vmem:[%s174 + $0x400] sm:$0xff] %v431
                %v433 = vld [vmem:[%s173 + $0xc08] sm:$0xff]
                %434 = vst [vmem:[%s174 + $0x408] sm:$0xff] %v433
                %v435 = vld [vmem:[%s173 + $0xc30] sm:$0xff]
                %436 = vst [vmem:[%s174 + $0x410] sm:$0xff] %v435
                %v437 = vld [vmem:[%s173 + $0xc38] sm:$0xff]
                %438 = vst [vmem:[%s174 + $0x418] sm:$0xff] %v437
                %v439 = vld [vmem:[%s173 + $0xc60] sm:$0xff]
                %440 = vst [vmem:[%s174 + $0x420] sm:$0xff] %v439
                %v441 = vld [vmem:[%s173 + $0xc68] sm:$0xff]
                %442 = vst [vmem:[%s174 + $0x428] sm:$0xff] %v441
                %v443 = vld [vmem:[%s173 + $0xc90] sm:$0xff]
                %444 = vst [vmem:[%s174 + $0x430] sm:$0xff] %v443
                %v445 = vld [vmem:[%s173 + $0xc98] sm:$0xff]
                %446 = vst [vmem:[%s174 + $0x438] sm:$0xff] %v445
                %v447 = vld [vmem:[%s173 + $0xcc0] sm:$0xff]
                %448 = vst [vmem:[%s174 + $0x440] sm:$0xff] %v447
                %v449 = vld [vmem:[%s173 + $0xcc8] sm:$0xff]
                %450 = vst [vmem:[%s174 + $0x448] sm:$0xff] %v449
                %v451 = vld [vmem:[%s173 + $0xcf0] sm:$0xff]
                %452 = vst [vmem:[%s174 + $0x450] sm:$0xff] %v451
                %v453 = vld [vmem:[%s173 + $0xcf8] sm:$0xff]
                %454 = vst [vmem:[%s174 + $0x458] sm:$0xff] %v453
                %v455 = vld [vmem:[%s173 + $0xd20] sm:$0xff]
                %456 = vst [vmem:[%s174 + $0x460] sm:$0xff] %v455
                %v457 = vld [vmem:[%s173 + $0xd28] sm:$0xff]
                %458 = vst [vmem:[%s174 + $0x468] sm:$0xff] %v457
                %v459 = vld [vmem:[%s173 + $0xd50] sm:$0xff]
                %460 = vst [vmem:[%s174 + $0x470] sm:$0xff] %v459
                %v461 = vld [vmem:[%s173 + $0xd58] sm:$0xff]
                %462 = vst [vmem:[%s174 + $0x478] sm:$0xff] %v461
                %v463 = vld [vmem:[%s173 + $0xd80] sm:$0xff]
                %464 = vst [vmem:[%s174 + $0x480] sm:$0xff] %v463
                %v465 = vld [vmem:[%s173 + $0xd88] sm:$0xff]
                %466 = vst [vmem:[%s174 + $0x488] sm:$0xff] %v465
                %v467 = vld [vmem:[%s173 + $0xdb0] sm:$0xff]
                %468 = vst [vmem:[%s174 + $0x490] sm:$0xff] %v467
                %v469 = vld [vmem:[%s173 + $0xdb8] sm:$0xff]
                %470 = vst [vmem:[%s174 + $0x498] sm:$0xff] %v469
                %v471 = vld [vmem:[%s173 + $0xde0] sm:$0xff]
                %472 = vst [vmem:[%s174 + $0x4a0] sm:$0xff] %v471
                %v473 = vld [vmem:[%s173 + $0xde8] sm:$0xff]
                %474 = vst [vmem:[%s174 + $0x4a8] sm:$0xff] %v473
                %v475 = vld [vmem:[%s173 + $0xe10] sm:$0xff]
                %476 = vst [vmem:[%s174 + $0x4b0] sm:$0xff] %v475
                %v477 = vld [vmem:[%s173 + $0xe18] sm:$0xff]
                %478 = vst [vmem:[%s174 + $0x4b8] sm:$0xff] %v477
                %v479 = vld [vmem:[%s173 + $0xe40] sm:$0xff]
                %480 = vst [vmem:[%s174 + $0x4c0] sm:$0xff] %v479
                %v481 = vld [vmem:[%s173 + $0xe48] sm:$0xff]
                %482 = vst [vmem:[%s174 + $0x4c8] sm:$0xff] %v481
                %v483 = vld [vmem:[%s173 + $0xe70] sm:$0xff]
                %484 = vst [vmem:[%s174 + $0x4d0] sm:$0xff] %v483
                %v485 = vld [vmem:[%s173 + $0xe78] sm:$0xff]
                %486 = vst [vmem:[%s174 + $0x4d8] sm:$0xff] %v485
                %v487 = vld [vmem:[%s173 + $0xea0] sm:$0xff]
                %488 = vst [vmem:[%s174 + $0x4e0] sm:$0xff] %v487
                %v489 = vld [vmem:[%s173 + $0xea8] sm:$0xff]
                %490 = vst [vmem:[%s174 + $0x4e8] sm:$0xff] %v489
                %v491 = vld [vmem:[%s173 + $0xed0] sm:$0xff]
                %492 = vst [vmem:[%s174 + $0x4f0] sm:$0xff] %v491
                %v493 = vld [vmem:[%s173 + $0xed8] sm:$0xff]
                %494 = vst [vmem:[%s174 + $0x4f8] sm:$0xff] %v493
                %v495 = vld [vmem:[%s173 + $0xf00] sm:$0xff]
                %496 = vst [vmem:[%s174 + $0x500] sm:$0xff] %v495
                %v497 = vld [vmem:[%s173 + $0xf08] sm:$0xff]
                %498 = vst [vmem:[%s174 + $0x508] sm:$0xff] %v497
                %v499 = vld [vmem:[%s173 + $0xf30] sm:$0xff]
                %500 = vst [vmem:[%s174 + $0x510] sm:$0xff] %v499
                %v501 = vld [vmem:[%s173 + $0xf38] sm:$0xff]
                %502 = vst [vmem:[%s174 + $0x518] sm:$0xff] %v501
                %v503 = vld [vmem:[%s173 + $0xf60] sm:$0xff]
                %504 = vst [vmem:[%s174 + $0x520] sm:$0xff] %v503
                %v505 = vld [vmem:[%s173 + $0xf68] sm:$0xff]
                %506 = vst [vmem:[%s174 + $0x528] sm:$0xff] %v505
                %v507 = vld [vmem:[%s173 + $0xf90] sm:$0xff]
                %508 = vst [vmem:[%s174 + $0x530] sm:$0xff] %v507
                %v509 = vld [vmem:[%s173 + $0xf98] sm:$0xff]
                %510 = vst [vmem:[%s174 + $0x538] sm:$0xff] %v509
                %v511 = vld [vmem:[%s173 + $0xfc0] sm:$0xff]
                %512 = vst [vmem:[%s174 + $0x540] sm:$0xff] %v511
                %v513 = vld [vmem:[%s173 + $0xfc8] sm:$0xff]
                %514 = vst [vmem:[%s174 + $0x548] sm:$0xff] %v513
                %v515 = vld [vmem:[%s173 + $0xff0] sm:$0xff]
                %516 = vst [vmem:[%s174 + $0x550] sm:$0xff] %v515
                %v517 = vld [vmem:[%s173 + $0xff8] sm:$0xff]
                %518 = vst [vmem:[%s174 + $0x558] sm:$0xff] %v517
                %v519 = vld [vmem:[%s173 + $0x1020] sm:$0xff]
                %520 = vst [vmem:[%s174 + $0x560] sm:$0xff] %v519
                %v521 = vld [vmem:[%s173 + $0x1028] sm:$0xff]
                %522 = vst [vmem:[%s174 + $0x568] sm:$0xff] %v521
                %v523 = vld [vmem:[%s173 + $0x1050] sm:$0xff]
                %524 = vst [vmem:[%s174 + $0x570] sm:$0xff] %v523
                %v525 = vld [vmem:[%s173 + $0x1058] sm:$0xff]
                %526 = vst [vmem:[%s174 + $0x578] sm:$0xff] %v525
                %v527 = vld [vmem:[%s173 + $0x1080] sm:$0xff]
                %528 = vst [vmem:[%s174 + $0x580] sm:$0xff] %v527
                %v529 = vld [vmem:[%s173 + $0x1088] sm:$0xff]
                %530 = vst [vmem:[%s174 + $0x588] sm:$0xff] %v529
                %v531 = vld [vmem:[%s173 + $0x10b0] sm:$0xff]
                %532 = vst [vmem:[%s174 + $0x590] sm:$0xff] %v531
                %v533 = vld [vmem:[%s173 + $0x10b8] sm:$0xff]
                %534 = vst [vmem:[%s174 + $0x598] sm:$0xff] %v533
                %v535 = vld [vmem:[%s173 + $0x10e0] sm:$0xff]
                %536 = vst [vmem:[%s174 + $0x5a0] sm:$0xff] %v535
                %v537 = vld [vmem:[%s173 + $0x10e8] sm:$0xff]
                %538 = vst [vmem:[%s174 + $0x5a8] sm:$0xff] %v537
                %v539 = vld [vmem:[%s173 + $0x1110] sm:$0xff]
                %540 = vst [vmem:[%s174 + $0x5b0] sm:$0xff] %v539
                %v541 = vld [vmem:[%s173 + $0x1118] sm:$0xff]
                %542 = vst [vmem:[%s174 + $0x5b8] sm:$0xff] %v541
                %v543 = vld [vmem:[%s173 + $0x1140] sm:$0xff]
                %544 = vst [vmem:[%s174 + $0x5c0] sm:$0xff] %v543
                %v545 = vld [vmem:[%s173 + $0x1148] sm:$0xff]
                %546 = vst [vmem:[%s174 + $0x5c8] sm:$0xff] %v545
                %v547 = vld [vmem:[%s173 + $0x1170] sm:$0xff]
                %548 = vst [vmem:[%s174 + $0x5d0] sm:$0xff] %v547
                %v549 = vld [vmem:[%s173 + $0x1178] sm:$0xff]
                %550 = vst [vmem:[%s174 + $0x5d8] sm:$0xff] %v549
                %v551 = vld [vmem:[%s173 + $0x11a0] sm:$0xff]
                %552 = vst [vmem:[%s174 + $0x5e0] sm:$0xff] %v551
                %v553 = vld [vmem:[%s173 + $0x11a8] sm:$0xff]
                %554 = vst [vmem:[%s174 + $0x5e8] sm:$0xff] %v553
                %v555 = vld [vmem:[%s173 + $0x11d0] sm:$0xff]
                %556 = vst [vmem:[%s174 + $0x5f0] sm:$0xff] %v555
                %v557 = vld [vmem:[%s173 + $0x11d8] sm:$0xff]
                %558 = vst [vmem:[%s174 + $0x5f8] sm:$0xff] %v557
                %v559 = vld [vmem:[%s173 + $0x1200] sm:$0xff]
                %560 = vst [vmem:[%s174 + $0x600] sm:$0xff] %v559
                %v561 = vld [vmem:[%s173 + $0x1208] sm:$0xff]
                %562 = vst [vmem:[%s174 + $0x608] sm:$0xff] %v561
                %v563 = vld [vmem:[%s173 + $0x1230] sm:$0xff]
                %564 = vst [vmem:[%s174 + $0x610] sm:$0xff] %v563
                %v565 = vld [vmem:[%s173 + $0x1238] sm:$0xff]
                %566 = vst [vmem:[%s174 + $0x618] sm:$0xff] %v565
                %v567 = vld [vmem:[%s173 + $0x1260] sm:$0xff]
                %568 = vst [vmem:[%s174 + $0x620] sm:$0xff] %v567
                %v569 = vld [vmem:[%s173 + $0x1268] sm:$0xff]
                %570 = vst [vmem:[%s174 + $0x628] sm:$0xff] %v569
                %v571 = vld [vmem:[%s173 + $0x1290] sm:$0xff]
                %572 = vst [vmem:[%s174 + $0x630] sm:$0xff] %v571
                %v573 = vld [vmem:[%s173 + $0x1298] sm:$0xff]
                %574 = vst [vmem:[%s174 + $0x638] sm:$0xff] %v573
              $region45: #{cnn_student_forward.7} parent=39 // loop_footer
                %s172 = sadd.s32 1, %s168
              $region46: #{cnn_student_forward.7} parent=39 // loop_footer_branch
                %167 = sbr.rel target = $region42
              $region47: #{cnn_student_forward.7} parent=39 // loop_exit
                _
            $region40: #{cnn_student_forward.7} parent=35 // pred_fallthru
              _
            // Predicated region
            $region48: #{cnn_student_forward.7} parent=35 // pred_check
              _
            $region49: #{cnn_student_forward.7} parent=35 // pred_check_branch
              %576 = sbr.rel target = $region51
            $region50: #{cnn_student_forward.7} parent=35 // pred_region
              _
            $region51: #{cnn_student_forward.7} parent=35 // pred_fallthru
              _
          $region36: #{cnn_student_forward.7} parent=31 // pred_fallthru
            _
          %577 = vnop
        $region32: #{cnn_student_forward.7} parent=27 // pred_fallthru
          _
      $region28: #{cnn_student_forward.7} parent=5 // pred_fallthru
        _
      %p578 = scmp.le.s32.totalorder 1, %s10
      %p579 = scmp.lt.s32.totalorder %s10, 4
      %p580 = pnand %p578, %p579
      %p581 = pneg %p580
      // Predicated region
      $region52: #{cnn_student_forward.7} parent=5 // pred_check
        _
      $region53: #{cnn_student_forward.7} parent=5 // pred_check_branch
        %583 = sbr.rel (%p580) target = $region55
      $region54: #{cnn_student_forward.7} parent=5 // pred_region
        %s584 = ssub.s32 %s10, 1
        %s585 = sand.u32 %s44, 1
        %s586 = sand.u32 %s44, 1
        %s587 = smul.addr %s586, 1600
        %s588 = scalar_lea.vmem [#allocation2], %s587
        // Predicated region
        $region56: #{cnn_student_forward.7} parent=54 // pred_check
          %p589 = pneg %p57
        $region57: #{cnn_student_forward.7} parent=54 // pred_check_branch
          %591 = sbr.rel (%p589) target = $region59
        $region58: #{cnn_student_forward.7} parent=54 // pred_region
          _
        $region59: #{cnn_student_forward.7} parent=54 // pred_fallthru
          _
        %p592 = pneg %p31
        %p593 = pneg %p28
        %s594 = sand.u32 %s44, 1
        %s595 = sand.u32 %s44, 1
        %s596 = smul.addr %s595, 1600
        %s597 = scalar_lea.vmem [#allocation2], %s596
        %p598 = pneg %p57
        %p599 = pneg %p54
        %p600 = pneg %p78
        %p601 = pneg %p75
        %p602 = pneg %p99
        %p603 = pneg %p96
        %p604 = pneg %p125
        %p605 = pneg %p122
        %s606 = sand.u32 %s112, 1
        %s607 = sand.u32 %s112, 1
        %s608 = smul.addr %s607, 128
        %s609 = scalar_lea.vmem [#allocation3], %s608
        %s610 = smul.u32 4, %s15
        %s611 = smul.u32 4, %s15
        %v613 = vld [vmem:[%s0] sm:$0xff]
        %v614 = vld [vmem:[%s0 + $0x8] sm:$0xff]
        %v615 = vld [vmem:[%s0 + $0x10] sm:$0xff]
        %v616 = vld [vmem:[%s0 + $0x18] sm:$0xf]
        %v617 = vld [vmem:[%s0 + $0x1c] sm:$0xff]
        %v618 = vld [vmem:[%s0 + $0x24] sm:$0xff]
        %v619 = vld [vmem:[%s0 + $0x2c] sm:$0xff]
        %v620 = vld [vmem:[%s0 + $0x34] sm:$0xf]
        %v621 = vld [vmem:[%s0 + $0x38] sm:$0xff]
        %v622 = vld [vmem:[%s0 + $0x40] sm:$0xff]
        %v623 = vld [vmem:[%s0 + $0x48] sm:$0xff]
        %v624 = vld [vmem:[%s0 + $0x50] sm:$0xf]
        %v625 = vld [vmem:[%s0 + $0x54] sm:$0xff]
        %v626 = vld [vmem:[%s0 + $0x5c] sm:$0xff]
        %v627 = vld [vmem:[%s0 + $0x64] sm:$0xff]
        %v628 = vld [vmem:[%s0 + $0x6c] sm:$0xf]
        %v629 = vld [vmem:[%s0 + $0x70] sm:$0xff]
        %v630 = vld [vmem:[%s0 + $0x78] sm:$0xff]
        %v631 = vld [vmem:[%s0 + $0x80] sm:$0xff]
        %v632 = vld [vmem:[%s0 + $0x88] sm:$0xf]
        %v633 = vld [vmem:[%s0 + $0x8c] sm:$0xff]
        %v634 = vld [vmem:[%s0 + $0x94] sm:$0xff]
        %v635 = vld [vmem:[%s0 + $0x9c] sm:$0xff]
        %v636 = vld [vmem:[%s0 + $0xa4] sm:$0xf]
        %v637 = vld [vmem:[%s0 + $0xa8] sm:$0xff]
        %v638 = vld [vmem:[%s0 + $0xb0] sm:$0xff]
        %v639 = vld [vmem:[%s0 + $0xb8] sm:$0xff]
        %v640 = vld [vmem:[%s0 + $0xc0] sm:$0xf]
        %v641 = vld [vmem:[%s0 + $0xc4] sm:$0xff]
        %v642 = vld [vmem:[%s0 + $0xcc] sm:$0xff]
        %v643 = vld [vmem:[%s0 + $0xd4] sm:$0xff]
        %v644 = vld [vmem:[%s0 + $0xdc] sm:$0xf]
        %v645 = vld [vmem:[%s588] sm:$0xff]
        %v646 = vld [vmem:[%s588 + $0x8] sm:$0xff]
        %v647 = vld [vmem:[%s588 + $0x10] sm:$0xff]
        %v648 = vld [vmem:[%s588 + $0x18] sm:$0xff]
        %v649 = vld [vmem:[%s588 + $0x20] sm:$0xff]
        %v650 = vld [vmem:[%s588 + $0x28] sm:$0xff]
        %v651 = vld [vmem:[%s588 + $0x30] sm:$0xff]
        %v652 = vld [vmem:[%s588 + $0x38] sm:$0xff]
        %v653 = vld [vmem:[%s588 + $0x40] sm:$0xff]
        %v654 = vld [vmem:[%s588 + $0x48] sm:$0xff]
        %v655 = vld [vmem:[%s588 + $0x50] sm:$0xff]
        %v656 = vld [vmem:[%s588 + $0x58] sm:$0xff]
        %v657 = vld [vmem:[%s588 + $0x60] sm:$0xff]
        %v658 = vld [vmem:[%s588 + $0x68] sm:$0xff]
        %v659 = vld [vmem:[%s588 + $0x70] sm:$0xff]
        %v660 = vld [vmem:[%s588 + $0x78] sm:$0xff]
        %v661 = vld [vmem:[%s588 + $0x80] sm:$0xff]
        %v662 = vld [vmem:[%s588 + $0x88] sm:$0xff]
        %v663 = vld [vmem:[%s588 + $0x90] sm:$0xff]
        %v664 = vld [vmem:[%s588 + $0x98] sm:$0xff]
        %v665 = vld [vmem:[%s588 + $0xa0] sm:$0xff]
        %v666 = vld [vmem:[%s588 + $0xa8] sm:$0xff]
        %v667 = vld [vmem:[%s588 + $0xb0] sm:$0xff]
        %v668 = vld [vmem:[%s588 + $0xb8] sm:$0xff]
        %v669 = vld [vmem:[%s588 + $0xc0] sm:$0xff]
        %v670 = vld [vmem:[%s588 + $0xc8] sm:$0xff]
        %v671 = vld [vmem:[%s588 + $0xd0] sm:$0xff]
        %v672 = vld [vmem:[%s588 + $0xd8] sm:$0xff]
        %v673 = vld [vmem:[%s588 + $0xe0] sm:$0xff]
        %v674 = vld [vmem:[%s588 + $0xe8] sm:$0xff]
        %v675 = vld [vmem:[%s588 + $0xf0] sm:$0xff]
        %v676 = vld [vmem:[%s588 + $0xf8] sm:$0xff]
        %v677 = vld [vmem:[%s588 + $0x100] sm:$0xff]
        %v678 = vld [vmem:[%s588 + $0x108] sm:$0xff]
        %v679 = vld [vmem:[%s588 + $0x110] sm:$0xff]
        %v680 = vld [vmem:[%s588 + $0x118] sm:$0xff]
        %v681 = vld [vmem:[%s588 + $0x120] sm:$0xff]
        %v682 = vld [vmem:[%s588 + $0x128] sm:$0xff]
        %v683 = vld [vmem:[%s588 + $0x130] sm:$0xff]
        %v684 = vld [vmem:[%s588 + $0x138] sm:$0xff]
        %v685 = vld [vmem:[%s588 + $0x140] sm:$0xff]
        %v686 = vld [vmem:[%s588 + $0x148] sm:$0xff]
        %v687 = vld [vmem:[%s588 + $0x150] sm:$0xff]
        %v688 = vld [vmem:[%s588 + $0x158] sm:$0xff]
        %v689 = vld [vmem:[%s588 + $0x160] sm:$0xff]
        %v690 = vld [vmem:[%s588 + $0x168] sm:$0xff]
        %v691 = vld [vmem:[%s588 + $0x170] sm:$0xff]
        %v692 = vld [vmem:[%s588 + $0x178] sm:$0xff]
        %v693 = vld [vmem:[%s588 + $0x180] sm:$0xff]
        %v694 = vld [vmem:[%s588 + $0x188] sm:$0xff]
        %v695 = vld [vmem:[%s588 + $0x190] sm:$0xff]
        %v696 = vld [vmem:[%s588 + $0x198] sm:$0xff]
        %v697 = vld [vmem:[%s588 + $0x1a0] sm:$0xff]
        %v698 = vld [vmem:[%s588 + $0x1a8] sm:$0xff]
        %v699 = vld [vmem:[%s588 + $0x1b0] sm:$0xff]
        %v700 = vld [vmem:[%s588 + $0x1b8] sm:$0xff]
        %v701 = vld [vmem:[%s588 + $0x1c0] sm:$0xff]
        %v702 = vld [vmem:[%s588 + $0x1c8] sm:$0xff]
        %v703 = vld [vmem:[%s588 + $0x1d0] sm:$0xff]
        %v704 = vld [vmem:[%s588 + $0x1d8] sm:$0xff]
        %v705 = vld [vmem:[%s588 + $0x1e0] sm:$0xff]
        %v706 = vld [vmem:[%s588 + $0x1e8] sm:$0xff]
        %v707 = vld [vmem:[%s588 + $0x1f0] sm:$0xff]
        %v708 = vld [vmem:[%s588 + $0x1f8] sm:$0xff]
        %v709 = vld [vmem:[%s588 + $0x200] sm:$0xff]
        %v710 = vld [vmem:[%s588 + $0x208] sm:$0xff]
        %v711 = vld [vmem:[%s588 + $0x210] sm:$0xff]
        %v712 = vld [vmem:[%s588 + $0x218] sm:$0xff]
        %v713 = vld [vmem:[%s588 + $0x220] sm:$0xff]
        %v714 = vld [vmem:[%s588 + $0x228] sm:$0xff]
        %v715 = vld [vmem:[%s588 + $0x230] sm:$0xff]
        %v716 = vld [vmem:[%s588 + $0x238] sm:$0xff]
        %v717 = vld [vmem:[%s588 + $0x240] sm:$0xff]
        %v718 = vld [vmem:[%s588 + $0x248] sm:$0xff]
        %v719 = vld [vmem:[%s588 + $0x250] sm:$0xff]
        %v720 = vld [vmem:[%s588 + $0x258] sm:$0xff]
        %v721 = vld [vmem:[%s588 + $0x260] sm:$0xff]
        %v722 = vld [vmem:[%s588 + $0x268] sm:$0xff]
        %v723 = vld [vmem:[%s588 + $0x270] sm:$0xff]
        %v724 = vld [vmem:[%s588 + $0x278] sm:$0xff]
        %v725 = vld [vmem:[%s588 + $0x280] sm:$0xff]
        %v726 = vld [vmem:[%s588 + $0x288] sm:$0xff]
        %v727 = vld [vmem:[%s588 + $0x290] sm:$0xff]
        %v728 = vld [vmem:[%s588 + $0x298] sm:$0xff]
        %v729 = vld [vmem:[%s588 + $0x2a0] sm:$0xff]
        %v730 = vld [vmem:[%s588 + $0x2a8] sm:$0xff]
        %v731 = vld [vmem:[%s588 + $0x2b0] sm:$0xff]
        %v732 = vld [vmem:[%s588 + $0x2b8] sm:$0xff]
        %v733 = vld [vmem:[%s588 + $0x2c0] sm:$0xff]
        %v734 = vld [vmem:[%s588 + $0x2c8] sm:$0xff]
        %v735 = vld [vmem:[%s588 + $0x2d0] sm:$0xff]
        %v736 = vld [vmem:[%s588 + $0x2d8] sm:$0xff]
        %v737 = vld [vmem:[%s588 + $0x2e0] sm:$0xff]
        %v738 = vld [vmem:[%s588 + $0x2e8] sm:$0xff]
        %v739 = vld [vmem:[%s588 + $0x2f0] sm:$0xff]
        %v740 = vld [vmem:[%s588 + $0x2f8] sm:$0xff]
        %v741 = vld [vmem:[%s588 + $0x300] sm:$0xff]
        %v742 = vld [vmem:[%s588 + $0x308] sm:$0xff]
        %v743 = vld [vmem:[%s588 + $0x310] sm:$0xff]
        %v744 = vld [vmem:[%s588 + $0x318] sm:$0xff]
        %v745 = vld [vmem:[%s588 + $0x320] sm:$0xff]
        %v746 = vld [vmem:[%s588 + $0x328] sm:$0xff]
        %v747 = vld [vmem:[%s588 + $0x330] sm:$0xff]
        %v748 = vld [vmem:[%s588 + $0x338] sm:$0xff]
        %v749 = vld [vmem:[%s588 + $0x340] sm:$0xff]
        %v750 = vld [vmem:[%s588 + $0x348] sm:$0xff]
        %v751 = vld [vmem:[%s588 + $0x350] sm:$0xff]
        %v752 = vld [vmem:[%s588 + $0x358] sm:$0xff]
        %v753 = vld [vmem:[%s588 + $0x360] sm:$0xff]
        %v754 = vld [vmem:[%s588 + $0x368] sm:$0xff]
        %v755 = vld [vmem:[%s588 + $0x370] sm:$0xff]
        %v756 = vld [vmem:[%s588 + $0x378] sm:$0xff]
        %v757 = vld [vmem:[%s588 + $0x380] sm:$0xff]
        %v758 = vld [vmem:[%s588 + $0x388] sm:$0xff]
        %v759 = vld [vmem:[%s588 + $0x390] sm:$0xff]
        %v760 = vld [vmem:[%s588 + $0x398] sm:$0xff]
        %v761 = vld [vmem:[%s588 + $0x3a0] sm:$0xff]
        %v762 = vld [vmem:[%s588 + $0x3a8] sm:$0xff]
        %v763 = vld [vmem:[%s588 + $0x3b0] sm:$0xff]
        %v764 = vld [vmem:[%s588 + $0x3b8] sm:$0xff]
        %v765 = vld [vmem:[%s588 + $0x3c0] sm:$0xff]
        %v766 = vld [vmem:[%s588 + $0x3c8] sm:$0xff]
        %v767 = vld [vmem:[%s588 + $0x3d0] sm:$0xff]
        %v768 = vld [vmem:[%s588 + $0x3d8] sm:$0xff]
        %v769 = vld [vmem:[%s588 + $0x3e0] sm:$0xff]
        %v770 = vld [vmem:[%s588 + $0x3e8] sm:$0xff]
        %v771 = vld [vmem:[%s588 + $0x3f0] sm:$0xff]
        %v772 = vld [vmem:[%s588 + $0x3f8] sm:$0xff]
        %v773 = vld [vmem:[%s588 + $0x400] sm:$0xff]
        %v774 = vld [vmem:[%s588 + $0x408] sm:$0xff]
        %v775 = vld [vmem:[%s588 + $0x410] sm:$0xff]
        %v776 = vld [vmem:[%s588 + $0x418] sm:$0xff]
        %v777 = vld [vmem:[%s588 + $0x420] sm:$0xff]
        %v778 = vld [vmem:[%s588 + $0x428] sm:$0xff]
        %v779 = vld [vmem:[%s588 + $0x430] sm:$0xff]
        %v780 = vld [vmem:[%s588 + $0x438] sm:$0xff]
        %v781 = vld [vmem:[%s588 + $0x440] sm:$0xff]
        %v782 = vld [vmem:[%s588 + $0x448] sm:$0xff]
        %v783 = vld [vmem:[%s588 + $0x450] sm:$0xff]
        %v784 = vld [vmem:[%s588 + $0x458] sm:$0xff]
        %v785 = vld [vmem:[%s588 + $0x460] sm:$0xff]
        %v786 = vld [vmem:[%s588 + $0x468] sm:$0xff]
        %v787 = vld [vmem:[%s588 + $0x470] sm:$0xff]
        %v788 = vld [vmem:[%s588 + $0x478] sm:$0xff]
        %v789 = vld [vmem:[%s588 + $0x480] sm:$0xff]
        %v790 = vld [vmem:[%s588 + $0x488] sm:$0xff]
        %v791 = vld [vmem:[%s588 + $0x490] sm:$0xff]
        %v792 = vld [vmem:[%s588 + $0x498] sm:$0xff]
        %v793 = vld [vmem:[%s588 + $0x4a0] sm:$0xff]
        %v794 = vld [vmem:[%s588 + $0x4a8] sm:$0xff]
        %v795 = vld [vmem:[%s588 + $0x4b0] sm:$0xff]
        %v796 = vld [vmem:[%s588 + $0x4b8] sm:$0xff]
        %v797 = vld [vmem:[%s588 + $0x4c0] sm:$0xff]
        %v798 = vld [vmem:[%s588 + $0x4c8] sm:$0xff]
        %v799 = vld [vmem:[%s588 + $0x4d0] sm:$0xff]
        %v800 = vld [vmem:[%s588 + $0x4d8] sm:$0xff]
        %v801 = vld [vmem:[%s588 + $0x4e0] sm:$0xff]
        %v802 = vld [vmem:[%s588 + $0x4e8] sm:$0xff]
        %v803 = vld [vmem:[%s588 + $0x4f0] sm:$0xff]
        %v804 = vld [vmem:[%s588 + $0x4f8] sm:$0xff]
        %v805 = vld [vmem:[%s588 + $0x500] sm:$0xff]
        %v806 = vld [vmem:[%s588 + $0x508] sm:$0xff]
        %v807 = vld [vmem:[%s588 + $0x510] sm:$0xff]
        %v808 = vld [vmem:[%s588 + $0x518] sm:$0xff]
        %v809 = vld [vmem:[%s588 + $0x520] sm:$0xff]
        %v810 = vld [vmem:[%s588 + $0x528] sm:$0xff]
        %v811 = vld [vmem:[%s588 + $0x530] sm:$0xff]
        %v812 = vld [vmem:[%s588 + $0x538] sm:$0xff]
        %v813 = vld [vmem:[%s588 + $0x540] sm:$0xff]
        %v814 = vld [vmem:[%s588 + $0x548] sm:$0xff]
        %v815 = vld [vmem:[%s588 + $0x550] sm:$0xff]
        %v816 = vld [vmem:[%s588 + $0x558] sm:$0xff]
        %v817 = vld [vmem:[%s588 + $0x560] sm:$0xff]
        %v818 = vld [vmem:[%s588 + $0x568] sm:$0xff]
        %v819 = vld [vmem:[%s588 + $0x570] sm:$0xff]
        %v820 = vld [vmem:[%s588 + $0x578] sm:$0xff]
        %v821 = vld [vmem:[%s588 + $0x580] sm:$0xff]
        %v822 = vld [vmem:[%s588 + $0x588] sm:$0xff]
        %v823 = vld [vmem:[%s588 + $0x590] sm:$0xff]
        %v824 = vld [vmem:[%s588 + $0x598] sm:$0xff]
        %v825 = vld [vmem:[%s588 + $0x5a0] sm:$0xff]
        %v826 = vld [vmem:[%s588 + $0x5a8] sm:$0xff]
        %v827 = vld [vmem:[%s588 + $0x5b0] sm:$0xff]
        %v828 = vld [vmem:[%s588 + $0x5b8] sm:$0xff]
        %v829 = vld [vmem:[%s588 + $0x5c0] sm:$0xff]
        %v830 = vld [vmem:[%s588 + $0x5c8] sm:$0xff]
        %v831 = vld [vmem:[%s588 + $0x5d0] sm:$0xff]
        %v832 = vld [vmem:[%s588 + $0x5d8] sm:$0xff]
        %v833 = vld [vmem:[%s588 + $0x5e0] sm:$0xff]
        %v834 = vld [vmem:[%s588 + $0x5e8] sm:$0xff]
        %v835 = vld [vmem:[%s588 + $0x5f0] sm:$0xff]
        %v836 = vld [vmem:[%s588 + $0x5f8] sm:$0xff]
        %v837 = vld [vmem:[%s588 + $0x600] sm:$0xff]
        %v838 = vld [vmem:[%s588 + $0x608] sm:$0xff]
        %v839 = vld [vmem:[%s588 + $0x610] sm:$0xff]
        %v840 = vld [vmem:[%s588 + $0x618] sm:$0xff]
        %v841 = vld [vmem:[%s588 + $0x620] sm:$0xff]
        %v842 = vld [vmem:[%s588 + $0x628] sm:$0xff]
        %v843 = vld [vmem:[%s588 + $0x630] sm:$0xff]
        %v844 = vld [vmem:[%s588 + $0x638] sm:$0xff]
        %v877 = vunpack.c.l.b16 %v613
        %v878 = vunpack.c.h.b16 %v613
        %v879 = vunpack.c.l.b16 %v614
        %v880 = vunpack.c.h.b16 %v614
        %v881 = vunpack.c.l.b16 %v615
        %v882 = vunpack.c.h.b16 %v615
        %v883 = vunpack.c.l.b16 %v616
        %v884 = vunpack.c.l.b16 %v617
        %v885 = vunpack.c.h.b16 %v617
        %v886 = vunpack.c.l.b16 %v618
        %v887 = vunpack.c.h.b16 %v618
        %v888 = vunpack.c.l.b16 %v619
        %v889 = vunpack.c.h.b16 %v619
        %v890 = vunpack.c.l.b16 %v620
        %v891 = vunpack.c.l.b16 %v621
        %v892 = vunpack.c.h.b16 %v621
        %v893 = vunpack.c.l.b16 %v622
        %v894 = vunpack.c.h.b16 %v622
        %v895 = vunpack.c.l.b16 %v623
        %v896 = vunpack.c.h.b16 %v623
        %v897 = vunpack.c.l.b16 %v624
        %v898 = vunpack.c.l.b16 %v625
        %v899 = vunpack.c.h.b16 %v625
        %v900 = vunpack.c.l.b16 %v626
        %v901 = vunpack.c.h.b16 %v626
        %v902 = vunpack.c.l.b16 %v627
        %v903 = vunpack.c.h.b16 %v627
        %v904 = vunpack.c.l.b16 %v628
        %v905 = vunpack.c.l.b16 %v629
        %v906 = vunpack.c.h.b16 %v629
        %v907 = vunpack.c.l.b16 %v630
        %v908 = vunpack.c.h.b16 %v630
        %v909 = vunpack.c.l.b16 %v631
        %v910 = vunpack.c.h.b16 %v631
        %v911 = vunpack.c.l.b16 %v632
        %v912 = vunpack.c.l.b16 %v633
        %v913 = vunpack.c.h.b16 %v633
        %v914 = vunpack.c.l.b16 %v634
        %v915 = vunpack.c.h.b16 %v634
        %v916 = vunpack.c.l.b16 %v635
        %v917 = vunpack.c.h.b16 %v635
        %v918 = vunpack.c.l.b16 %v636
        %v919 = vunpack.c.l.b16 %v637
        %v920 = vunpack.c.h.b16 %v637
        %v921 = vunpack.c.l.b16 %v638
        %v922 = vunpack.c.h.b16 %v638
        %v923 = vunpack.c.l.b16 %v639
        %v924 = vunpack.c.h.b16 %v639
        %v925 = vunpack.c.l.b16 %v640
        %v926 = vunpack.c.l.b16 %v641
        %v927 = vunpack.c.h.b16 %v641
        %v928 = vunpack.c.l.b16 %v642
        %v929 = vunpack.c.h.b16 %v642
        %v930 = vunpack.c.l.b16 %v643
        %v931 = vunpack.c.h.b16 %v643
        %v932 = vunpack.c.l.b16 %v644
        %v933 = vpack.c.b16 %v884, %v877
        %v934 = vpack.c.b16 %v885, %v878
        %v935 = vpack.c.b16 %v886, %v879
        %v936 = vpack.c.b16 %v887, %v880
        %v937 = vpack.c.b16 %v888, %v881
        %v938 = vpack.c.b16 %v889, %v882
        %v939 = vpack.c.b16 %v890, %v883
        %v940 = vpack.c.b16 %v898, %v891
        %v941 = vpack.c.b16 %v899, %v892
        %v942 = vpack.c.b16 %v900, %v893
        %v943 = vpack.c.b16 %v901, %v894
        %v944 = vpack.c.b16 %v902, %v895
        %v945 = vpack.c.b16 %v903, %v896
        %v946 = vpack.c.b16 %v904, %v897
        %v947 = vpack.c.b16 %v912, %v905
        %v948 = vpack.c.b16 %v913, %v906
        %v949 = vpack.c.b16 %v914, %v907
        %v950 = vpack.c.b16 %v915, %v908
        %v951 = vpack.c.b16 %v916, %v909
        %v952 = vpack.c.b16 %v917, %v910
        %v953 = vpack.c.b16 %v918, %v911
        %v954 = vpack.c.b16 %v926, %v919
        %v955 = vpack.c.b16 %v927, %v920
        %v956 = vpack.c.b16 %v928, %v921
        %v957 = vpack.c.b16 %v929, %v922
        %v958 = vpack.c.b16 %v930, %v923
        %v959 = vpack.c.b16 %v931, %v924
        %v960 = vpack.c.b16 %v932, %v925
        %v1185 = vunpack.c.l.b16 %v645
        %v1186 = vunpack.c.h.b16 %v645
        %v1187 = vunpack.c.l.b16 %v646
        %v1188 = vunpack.c.h.b16 %v646
        %v1189 = vunpack.c.l.b16 %v647
        %v1190 = vunpack.c.h.b16 %v647
        %v1191 = vunpack.c.l.b16 %v648
        %v1192 = vunpack.c.h.b16 %v648
        %v1193 = vunpack.c.l.b16 %v649
        %v1194 = vunpack.c.h.b16 %v649
        %v1195 = vunpack.c.l.b16 %v650
        %v1196 = vunpack.c.h.b16 %v650
        %v1197 = vunpack.c.l.b16 %v651
        %v1198 = vunpack.c.h.b16 %v651
        %v1199 = vunpack.c.l.b16 %v652
        %v1200 = vunpack.c.h.b16 %v652
        %v1201 = vunpack.c.l.b16 %v653
        %v1202 = vunpack.c.h.b16 %v653
        %v1203 = vunpack.c.l.b16 %v654
        %v1204 = vunpack.c.h.b16 %v654
        %v1205 = vunpack.c.l.b16 %v655
        %v1206 = vunpack.c.h.b16 %v655
        %v1207 = vunpack.c.l.b16 %v656
        %v1208 = vunpack.c.h.b16 %v656
        %v1209 = vunpack.c.l.b16 %v657
        %v1210 = vunpack.c.h.b16 %v657
        %v1211 = vunpack.c.l.b16 %v658
        %v1212 = vunpack.c.h.b16 %v658
        %v1213 = vunpack.c.l.b16 %v659
        %v1214 = vunpack.c.h.b16 %v659
        %v1215 = vunpack.c.l.b16 %v660
        %v1216 = vunpack.c.h.b16 %v660
        %v1217 = vunpack.c.l.b16 %v661
        %v1218 = vunpack.c.h.b16 %v661
        %v1219 = vunpack.c.l.b16 %v662
        %v1220 = vunpack.c.h.b16 %v662
        %v1221 = vunpack.c.l.b16 %v663
        %v1222 = vunpack.c.h.b16 %v663
        %v1223 = vunpack.c.l.b16 %v664
        %v1224 = vunpack.c.h.b16 %v664
        %v1225 = vunpack.c.l.b16 %v665
        %v1226 = vunpack.c.h.b16 %v665
        %v1227 = vunpack.c.l.b16 %v666
        %v1228 = vunpack.c.h.b16 %v666
        %v1229 = vunpack.c.l.b16 %v667
        %v1230 = vunpack.c.h.b16 %v667
        %v1231 = vunpack.c.l.b16 %v668
        %v1232 = vunpack.c.h.b16 %v668
        %v1233 = vunpack.c.l.b16 %v669
        %v1234 = vunpack.c.h.b16 %v669
        %v1235 = vunpack.c.l.b16 %v670
        %v1236 = vunpack.c.h.b16 %v670
        %v1237 = vunpack.c.l.b16 %v671
        %v1238 = vunpack.c.h.b16 %v671
        %v1239 = vunpack.c.l.b16 %v672
        %v1240 = vunpack.c.h.b16 %v672
        %v1241 = vunpack.c.l.b16 %v673
        %v1242 = vunpack.c.h.b16 %v673
        %v1243 = vunpack.c.l.b16 %v674
        %v1244 = vunpack.c.h.b16 %v674
        %v1245 = vunpack.c.l.b16 %v675
        %v1246 = vunpack.c.h.b16 %v675
        %v1247 = vunpack.c.l.b16 %v676
        %v1248 = vunpack.c.h.b16 %v676
        %v1249 = vunpack.c.l.b16 %v677
        %v1250 = vunpack.c.h.b16 %v677
        %v1251 = vunpack.c.l.b16 %v678
        %v1252 = vunpack.c.h.b16 %v678
        %v1253 = vunpack.c.l.b16 %v679
        %v1254 = vunpack.c.h.b16 %v679
        %v1255 = vunpack.c.l.b16 %v680
        %v1256 = vunpack.c.h.b16 %v680
        %v1257 = vunpack.c.l.b16 %v681
        %v1258 = vunpack.c.h.b16 %v681
        %v1259 = vunpack.c.l.b16 %v682
        %v1260 = vunpack.c.h.b16 %v682
        %v1261 = vunpack.c.l.b16 %v683
        %v1262 = vunpack.c.h.b16 %v683
        %v1263 = vunpack.c.l.b16 %v684
        %v1264 = vunpack.c.h.b16 %v684
        %v1265 = vunpack.c.l.b16 %v685
        %v1266 = vunpack.c.h.b16 %v685
        %v1267 = vunpack.c.l.b16 %v686
        %v1268 = vunpack.c.h.b16 %v686
        %v1269 = vunpack.c.l.b16 %v687
        %v1270 = vunpack.c.h.b16 %v687
        %v1271 = vunpack.c.l.b16 %v688
        %v1272 = vunpack.c.h.b16 %v688
        %v1273 = vunpack.c.l.b16 %v689
        %v1274 = vunpack.c.h.b16 %v689
        %v1275 = vunpack.c.l.b16 %v690
        %v1276 = vunpack.c.h.b16 %v690
        %v1277 = vunpack.c.l.b16 %v691
        %v1278 = vunpack.c.h.b16 %v691
        %v1279 = vunpack.c.l.b16 %v692
        %v1280 = vunpack.c.h.b16 %v692
        %v1281 = vunpack.c.l.b16 %v693
        %v1282 = vunpack.c.h.b16 %v693
        %v1283 = vunpack.c.l.b16 %v694
        %v1284 = vunpack.c.h.b16 %v694
        %v1285 = vunpack.c.l.b16 %v695
        %v1286 = vunpack.c.h.b16 %v695
        %v1287 = vunpack.c.l.b16 %v696
        %v1288 = vunpack.c.h.b16 %v696
        %v1289 = vunpack.c.l.b16 %v697
        %v1290 = vunpack.c.h.b16 %v697
        %v1291 = vunpack.c.l.b16 %v698
        %v1292 = vunpack.c.h.b16 %v698
        %v1293 = vunpack.c.l.b16 %v699
        %v1294 = vunpack.c.h.b16 %v699
        %v1295 = vunpack.c.l.b16 %v700
        %v1296 = vunpack.c.h.b16 %v700
        %v1297 = vunpack.c.l.b16 %v701
        %v1298 = vunpack.c.h.b16 %v701
        %v1299 = vunpack.c.l.b16 %v702
        %v1300 = vunpack.c.h.b16 %v702
        %v1301 = vunpack.c.l.b16 %v703
        %v1302 = vunpack.c.h.b16 %v703
        %v1303 = vunpack.c.l.b16 %v704
        %v1304 = vunpack.c.h.b16 %v704
        %v1305 = vunpack.c.l.b16 %v705
        %v1306 = vunpack.c.h.b16 %v705
        %v1307 = vunpack.c.l.b16 %v706
        %v1308 = vunpack.c.h.b16 %v706
        %v1309 = vunpack.c.l.b16 %v707
        %v1310 = vunpack.c.h.b16 %v707
        %v1311 = vunpack.c.l.b16 %v708
        %v1312 = vunpack.c.h.b16 %v708
        %v1313 = vunpack.c.l.b16 %v709
        %v1314 = vunpack.c.h.b16 %v709
        %v1315 = vunpack.c.l.b16 %v710
        %v1316 = vunpack.c.h.b16 %v710
        %v1317 = vunpack.c.l.b16 %v711
        %v1318 = vunpack.c.h.b16 %v711
        %v1319 = vunpack.c.l.b16 %v712
        %v1320 = vunpack.c.h.b16 %v712
        %v1321 = vunpack.c.l.b16 %v713
        %v1322 = vunpack.c.h.b16 %v713
        %v1323 = vunpack.c.l.b16 %v714
        %v1324 = vunpack.c.h.b16 %v714
        %v1325 = vunpack.c.l.b16 %v715
        %v1326 = vunpack.c.h.b16 %v715
        %v1327 = vunpack.c.l.b16 %v716
        %v1328 = vunpack.c.h.b16 %v716
        %v1329 = vunpack.c.l.b16 %v717
        %v1330 = vunpack.c.h.b16 %v717
        %v1331 = vunpack.c.l.b16 %v718
        %v1332 = vunpack.c.h.b16 %v718
        %v1333 = vunpack.c.l.b16 %v719
        %v1334 = vunpack.c.h.b16 %v719
        %v1335 = vunpack.c.l.b16 %v720
        %v1336 = vunpack.c.h.b16 %v720
        %v1337 = vunpack.c.l.b16 %v721
        %v1338 = vunpack.c.h.b16 %v721
        %v1339 = vunpack.c.l.b16 %v722
        %v1340 = vunpack.c.h.b16 %v722
        %v1341 = vunpack.c.l.b16 %v723
        %v1342 = vunpack.c.h.b16 %v723
        %v1343 = vunpack.c.l.b16 %v724
        %v1344 = vunpack.c.h.b16 %v724
        %v1345 = vunpack.c.l.b16 %v725
        %v1346 = vunpack.c.h.b16 %v725
        %v1347 = vunpack.c.l.b16 %v726
        %v1348 = vunpack.c.h.b16 %v726
        %v1349 = vunpack.c.l.b16 %v727
        %v1350 = vunpack.c.h.b16 %v727
        %v1351 = vunpack.c.l.b16 %v728
        %v1352 = vunpack.c.h.b16 %v728
        %v1353 = vunpack.c.l.b16 %v729
        %v1354 = vunpack.c.h.b16 %v729
        %v1355 = vunpack.c.l.b16 %v730
        %v1356 = vunpack.c.h.b16 %v730
        %v1357 = vunpack.c.l.b16 %v731
        %v1358 = vunpack.c.h.b16 %v731
        %v1359 = vunpack.c.l.b16 %v732
        %v1360 = vunpack.c.h.b16 %v732
        %v1361 = vunpack.c.l.b16 %v733
        %v1362 = vunpack.c.h.b16 %v733
        %v1363 = vunpack.c.l.b16 %v734
        %v1364 = vunpack.c.h.b16 %v734
        %v1365 = vunpack.c.l.b16 %v735
        %v1366 = vunpack.c.h.b16 %v735
        %v1367 = vunpack.c.l.b16 %v736
        %v1368 = vunpack.c.h.b16 %v736
        %v1369 = vunpack.c.l.b16 %v737
        %v1370 = vunpack.c.h.b16 %v737
        %v1371 = vunpack.c.l.b16 %v738
        %v1372 = vunpack.c.h.b16 %v738
        %v1373 = vunpack.c.l.b16 %v739
        %v1374 = vunpack.c.h.b16 %v739
        %v1375 = vunpack.c.l.b16 %v740
        %v1376 = vunpack.c.h.b16 %v740
        %v1377 = vunpack.c.l.b16 %v741
        %v1378 = vunpack.c.h.b16 %v741
        %v1379 = vunpack.c.l.b16 %v742
        %v1380 = vunpack.c.h.b16 %v742
        %v1381 = vunpack.c.l.b16 %v743
        %v1382 = vunpack.c.h.b16 %v743
        %v1383 = vunpack.c.l.b16 %v744
        %v1384 = vunpack.c.h.b16 %v744
        %v1385 = vunpack.c.l.b16 %v745
        %v1386 = vunpack.c.h.b16 %v745
        %v1387 = vunpack.c.l.b16 %v746
        %v1388 = vunpack.c.h.b16 %v746
        %v1389 = vunpack.c.l.b16 %v747
        %v1390 = vunpack.c.h.b16 %v747
        %v1391 = vunpack.c.l.b16 %v748
        %v1392 = vunpack.c.h.b16 %v748
        %v1393 = vunpack.c.l.b16 %v749
        %v1394 = vunpack.c.h.b16 %v749
        %v1395 = vunpack.c.l.b16 %v750
        %v1396 = vunpack.c.h.b16 %v750
        %v1397 = vunpack.c.l.b16 %v751
        %v1398 = vunpack.c.h.b16 %v751
        %v1399 = vunpack.c.l.b16 %v752
        %v1400 = vunpack.c.h.b16 %v752
        %v1401 = vunpack.c.l.b16 %v753
        %v1402 = vunpack.c.h.b16 %v753
        %v1403 = vunpack.c.l.b16 %v754
        %v1404 = vunpack.c.h.b16 %v754
        %v1405 = vunpack.c.l.b16 %v755
        %v1406 = vunpack.c.h.b16 %v755
        %v1407 = vunpack.c.l.b16 %v756
        %v1408 = vunpack.c.h.b16 %v756
        %v1409 = vunpack.c.l.b16 %v757
        %v1410 = vunpack.c.h.b16 %v757
        %v1411 = vunpack.c.l.b16 %v758
        %v1412 = vunpack.c.h.b16 %v758
        %v1413 = vunpack.c.l.b16 %v759
        %v1414 = vunpack.c.h.b16 %v759
        %v1415 = vunpack.c.l.b16 %v760
        %v1416 = vunpack.c.h.b16 %v760
        %v1417 = vunpack.c.l.b16 %v761
        %v1418 = vunpack.c.h.b16 %v761
        %v1419 = vunpack.c.l.b16 %v762
        %v1420 = vunpack.c.h.b16 %v762
        %v1421 = vunpack.c.l.b16 %v763
        %v1422 = vunpack.c.h.b16 %v763
        %v1423 = vunpack.c.l.b16 %v764
        %v1424 = vunpack.c.h.b16 %v764
        %v1425 = vunpack.c.l.b16 %v765
        %v1426 = vunpack.c.h.b16 %v765
        %v1427 = vunpack.c.l.b16 %v766
        %v1428 = vunpack.c.h.b16 %v766
        %v1429 = vunpack.c.l.b16 %v767
        %v1430 = vunpack.c.h.b16 %v767
        %v1431 = vunpack.c.l.b16 %v768
        %v1432 = vunpack.c.h.b16 %v768
        %v1433 = vunpack.c.l.b16 %v769
        %v1434 = vunpack.c.h.b16 %v769
        %v1435 = vunpack.c.l.b16 %v770
        %v1436 = vunpack.c.h.b16 %v770
        %v1437 = vunpack.c.l.b16 %v771
        %v1438 = vunpack.c.h.b16 %v771
        %v1439 = vunpack.c.l.b16 %v772
        %v1440 = vunpack.c.h.b16 %v772
        %v1441 = vunpack.c.l.b16 %v773
        %v1442 = vunpack.c.h.b16 %v773
        %v1443 = vunpack.c.l.b16 %v774
        %v1444 = vunpack.c.h.b16 %v774
        %v1445 = vunpack.c.l.b16 %v775
        %v1446 = vunpack.c.h.b16 %v775
        %v1447 = vunpack.c.l.b16 %v776
        %v1448 = vunpack.c.h.b16 %v776
        %v1449 = vunpack.c.l.b16 %v777
        %v1450 = vunpack.c.h.b16 %v777
        %v1451 = vunpack.c.l.b16 %v778
        %v1452 = vunpack.c.h.b16 %v778
        %v1453 = vunpack.c.l.b16 %v779
        %v1454 = vunpack.c.h.b16 %v779
        %v1455 = vunpack.c.l.b16 %v780
        %v1456 = vunpack.c.h.b16 %v780
        %v1457 = vunpack.c.l.b16 %v781
        %v1458 = vunpack.c.h.b16 %v781
        %v1459 = vunpack.c.l.b16 %v782
        %v1460 = vunpack.c.h.b16 %v782
        %v1461 = vunpack.c.l.b16 %v783
        %v1462 = vunpack.c.h.b16 %v783
        %v1463 = vunpack.c.l.b16 %v784
        %v1464 = vunpack.c.h.b16 %v784
        %v1465 = vunpack.c.l.b16 %v785
        %v1466 = vunpack.c.h.b16 %v785
        %v1467 = vunpack.c.l.b16 %v786
        %v1468 = vunpack.c.h.b16 %v786
        %v1469 = vunpack.c.l.b16 %v787
        %v1470 = vunpack.c.h.b16 %v787
        %v1471 = vunpack.c.l.b16 %v788
        %v1472 = vunpack.c.h.b16 %v788
        %v1473 = vunpack.c.l.b16 %v789
        %v1474 = vunpack.c.h.b16 %v789
        %v1475 = vunpack.c.l.b16 %v790
        %v1476 = vunpack.c.h.b16 %v790
        %v1477 = vunpack.c.l.b16 %v791
        %v1478 = vunpack.c.h.b16 %v791
        %v1479 = vunpack.c.l.b16 %v792
        %v1480 = vunpack.c.h.b16 %v792
        %v1481 = vunpack.c.l.b16 %v793
        %v1482 = vunpack.c.h.b16 %v793
        %v1483 = vunpack.c.l.b16 %v794
        %v1484 = vunpack.c.h.b16 %v794
        %v1485 = vunpack.c.l.b16 %v795
        %v1486 = vunpack.c.h.b16 %v795
        %v1487 = vunpack.c.l.b16 %v796
        %v1488 = vunpack.c.h.b16 %v796
        %v1489 = vunpack.c.l.b16 %v797
        %v1490 = vunpack.c.h.b16 %v797
        %v1491 = vunpack.c.l.b16 %v798
        %v1492 = vunpack.c.h.b16 %v798
        %v1493 = vunpack.c.l.b16 %v799
        %v1494 = vunpack.c.h.b16 %v799
        %v1495 = vunpack.c.l.b16 %v800
        %v1496 = vunpack.c.h.b16 %v800
        %v1497 = vunpack.c.l.b16 %v801
        %v1498 = vunpack.c.h.b16 %v801
        %v1499 = vunpack.c.l.b16 %v802
        %v1500 = vunpack.c.h.b16 %v802
        %v1501 = vunpack.c.l.b16 %v803
        %v1502 = vunpack.c.h.b16 %v803
        %v1503 = vunpack.c.l.b16 %v804
        %v1504 = vunpack.c.h.b16 %v804
        %v1505 = vunpack.c.l.b16 %v805
        %v1506 = vunpack.c.h.b16 %v805
        %v1507 = vunpack.c.l.b16 %v806
        %v1508 = vunpack.c.h.b16 %v806
        %v1509 = vunpack.c.l.b16 %v807
        %v1510 = vunpack.c.h.b16 %v807
        %v1511 = vunpack.c.l.b16 %v808
        %v1512 = vunpack.c.h.b16 %v808
        %v1513 = vunpack.c.l.b16 %v809
        %v1514 = vunpack.c.h.b16 %v809
        %v1515 = vunpack.c.l.b16 %v810
        %v1516 = vunpack.c.h.b16 %v810
        %v1517 = vunpack.c.l.b16 %v811
        %v1518 = vunpack.c.h.b16 %v811
        %v1519 = vunpack.c.l.b16 %v812
        %v1520 = vunpack.c.h.b16 %v812
        %v1521 = vunpack.c.l.b16 %v813
        %v1522 = vunpack.c.h.b16 %v813
        %v1523 = vunpack.c.l.b16 %v814
        %v1524 = vunpack.c.h.b16 %v814
        %v1525 = vunpack.c.l.b16 %v815
        %v1526 = vunpack.c.h.b16 %v815
        %v1527 = vunpack.c.l.b16 %v816
        %v1528 = vunpack.c.h.b16 %v816
        %v1529 = vunpack.c.l.b16 %v817
        %v1530 = vunpack.c.h.b16 %v817
        %v1531 = vunpack.c.l.b16 %v818
        %v1532 = vunpack.c.h.b16 %v818
        %v1533 = vunpack.c.l.b16 %v819
        %v1534 = vunpack.c.h.b16 %v819
        %v1535 = vunpack.c.l.b16 %v820
        %v1536 = vunpack.c.h.b16 %v820
        %v1537 = vunpack.c.l.b16 %v821
        %v1538 = vunpack.c.h.b16 %v821
        %v1539 = vunpack.c.l.b16 %v822
        %v1540 = vunpack.c.h.b16 %v822
        %v1541 = vunpack.c.l.b16 %v823
        %v1542 = vunpack.c.h.b16 %v823
        %v1543 = vunpack.c.l.b16 %v824
        %v1544 = vunpack.c.h.b16 %v824
        %v1545 = vunpack.c.l.b16 %v825
        %v1546 = vunpack.c.h.b16 %v825
        %v1547 = vunpack.c.l.b16 %v826
        %v1548 = vunpack.c.h.b16 %v826
        %v1549 = vunpack.c.l.b16 %v827
        %v1550 = vunpack.c.h.b16 %v827
        %v1551 = vunpack.c.l.b16 %v828
        %v1552 = vunpack.c.h.b16 %v828
        %v1553 = vunpack.c.l.b16 %v829
        %v1554 = vunpack.c.h.b16 %v829
        %v1555 = vunpack.c.l.b16 %v830
        %v1556 = vunpack.c.h.b16 %v830
        %v1557 = vunpack.c.l.b16 %v831
        %v1558 = vunpack.c.h.b16 %v831
        %v1559 = vunpack.c.l.b16 %v832
        %v1560 = vunpack.c.h.b16 %v832
        %v1561 = vunpack.c.l.b16 %v833
        %v1562 = vunpack.c.h.b16 %v833
        %v1563 = vunpack.c.l.b16 %v834
        %v1564 = vunpack.c.h.b16 %v834
        %v1565 = vunpack.c.l.b16 %v835
        %v1566 = vunpack.c.h.b16 %v835
        %v1567 = vunpack.c.l.b16 %v836
        %v1568 = vunpack.c.h.b16 %v836
        %v1569 = vunpack.c.l.b16 %v837
        %v1570 = vunpack.c.h.b16 %v837
        %v1571 = vunpack.c.l.b16 %v838
        %v1572 = vunpack.c.h.b16 %v838
        %v1573 = vunpack.c.l.b16 %v839
        %v1574 = vunpack.c.h.b16 %v839
        %v1575 = vunpack.c.l.b16 %v840
        %v1576 = vunpack.c.h.b16 %v840
        %v1577 = vunpack.c.l.b16 %v841
        %v1578 = vunpack.c.h.b16 %v841
        %v1579 = vunpack.c.l.b16 %v842
        %v1580 = vunpack.c.h.b16 %v842
        %v1581 = vunpack.c.l.b16 %v843
        %v1582 = vunpack.c.h.b16 %v843
        %v1583 = vunpack.c.l.b16 %v844
        %v1584 = vunpack.c.h.b16 %v844
        %v1585 = vpack.c.b16 %v1189, %v1185
        %v1586 = vpack.c.b16 %v1190, %v1186
        %v1587 = vpack.c.b16 %v1191, %v1187
        %v1588 = vpack.c.b16 %v1192, %v1188
        %v1589 = vpack.c.b16 %v1197, %v1193
        %v1590 = vpack.c.b16 %v1198, %v1194
        %v1591 = vpack.c.b16 %v1199, %v1195
        %v1592 = vpack.c.b16 %v1200, %v1196
        %v1593 = vpack.c.b16 %v1205, %v1201
        %v1594 = vpack.c.b16 %v1206, %v1202
        %v1595 = vpack.c.b16 %v1207, %v1203
        %v1596 = vpack.c.b16 %v1208, %v1204
        %v1597 = vpack.c.b16 %v1213, %v1209
        %v1598 = vpack.c.b16 %v1214, %v1210
        %v1599 = vpack.c.b16 %v1215, %v1211
        %v1600 = vpack.c.b16 %v1216, %v1212
        %v1601 = vpack.c.b16 %v1221, %v1217
        %v1602 = vpack.c.b16 %v1222, %v1218
        %v1603 = vpack.c.b16 %v1223, %v1219
        %v1604 = vpack.c.b16 %v1224, %v1220
        %v1605 = vpack.c.b16 %v1229, %v1225
        %v1606 = vpack.c.b16 %v1230, %v1226
        %v1607 = vpack.c.b16 %v1231, %v1227
        %v1608 = vpack.c.b16 %v1232, %v1228
        %v1609 = vpack.c.b16 %v1237, %v1233
        %v1610 = vpack.c.b16 %v1238, %v1234
        %v1611 = vpack.c.b16 %v1239, %v1235
        %v1612 = vpack.c.b16 %v1240, %v1236
        %v1613 = vpack.c.b16 %v1245, %v1241
        %v1614 = vpack.c.b16 %v1246, %v1242
        %v1615 = vpack.c.b16 %v1247, %v1243
        %v1616 = vpack.c.b16 %v1248, %v1244
        %v1617 = vpack.c.b16 %v1253, %v1249
        %v1618 = vpack.c.b16 %v1254, %v1250
        %v1619 = vpack.c.b16 %v1255, %v1251
        %v1620 = vpack.c.b16 %v1256, %v1252
        %v1621 = vpack.c.b16 %v1261, %v1257
        %v1622 = vpack.c.b16 %v1262, %v1258
        %v1623 = vpack.c.b16 %v1263, %v1259
        %v1624 = vpack.c.b16 %v1264, %v1260
        %v1625 = vpack.c.b16 %v1269, %v1265
        %v1626 = vpack.c.b16 %v1270, %v1266
        %v1627 = vpack.c.b16 %v1271, %v1267
        %v1628 = vpack.c.b16 %v1272, %v1268
        %v1629 = vpack.c.b16 %v1277, %v1273
        %v1630 = vpack.c.b16 %v1278, %v1274
        %v1631 = vpack.c.b16 %v1279, %v1275
        %v1632 = vpack.c.b16 %v1280, %v1276
        %v1633 = vpack.c.b16 %v1285, %v1281
        %v1634 = vpack.c.b16 %v1286, %v1282
        %v1635 = vpack.c.b16 %v1287, %v1283
        %v1636 = vpack.c.b16 %v1288, %v1284
        %v1637 = vpack.c.b16 %v1293, %v1289
        %v1638 = vpack.c.b16 %v1294, %v1290
        %v1639 = vpack.c.b16 %v1295, %v1291
        %v1640 = vpack.c.b16 %v1296, %v1292
        %v1641 = vpack.c.b16 %v1301, %v1297
        %v1642 = vpack.c.b16 %v1302, %v1298
        %v1643 = vpack.c.b16 %v1303, %v1299
        %v1644 = vpack.c.b16 %v1304, %v1300
        %v1645 = vpack.c.b16 %v1309, %v1305
        %v1646 = vpack.c.b16 %v1310, %v1306
        %v1647 = vpack.c.b16 %v1311, %v1307
        %v1648 = vpack.c.b16 %v1312, %v1308
        %v1649 = vpack.c.b16 %v1317, %v1313
        %v1650 = vpack.c.b16 %v1318, %v1314
        %v1651 = vpack.c.b16 %v1319, %v1315
        %v1652 = vpack.c.b16 %v1320, %v1316
        %v1653 = vpack.c.b16 %v1325, %v1321
        %v1654 = vpack.c.b16 %v1326, %v1322
        %v1655 = vpack.c.b16 %v1327, %v1323
        %v1656 = vpack.c.b16 %v1328, %v1324
        %v1657 = vpack.c.b16 %v1333, %v1329
        %v1658 = vpack.c.b16 %v1334, %v1330
        %v1659 = vpack.c.b16 %v1335, %v1331
        %v1660 = vpack.c.b16 %v1336, %v1332
        %v1661 = vpack.c.b16 %v1341, %v1337
        %v1662 = vpack.c.b16 %v1342, %v1338
        %v1663 = vpack.c.b16 %v1343, %v1339
        %v1664 = vpack.c.b16 %v1344, %v1340
        %v1665 = vpack.c.b16 %v1349, %v1345
        %v1666 = vpack.c.b16 %v1350, %v1346
        %v1667 = vpack.c.b16 %v1351, %v1347
        %v1668 = vpack.c.b16 %v1352, %v1348
        %v1669 = vpack.c.b16 %v1357, %v1353
        %v1670 = vpack.c.b16 %v1358, %v1354
        %v1671 = vpack.c.b16 %v1359, %v1355
        %v1672 = vpack.c.b16 %v1360, %v1356
        %v1673 = vpack.c.b16 %v1365, %v1361
        %v1674 = vpack.c.b16 %v1366, %v1362
        %v1675 = vpack.c.b16 %v1367, %v1363
        %v1676 = vpack.c.b16 %v1368, %v1364
        %v1677 = vpack.c.b16 %v1373, %v1369
        %v1678 = vpack.c.b16 %v1374, %v1370
        %v1679 = vpack.c.b16 %v1375, %v1371
        %v1680 = vpack.c.b16 %v1376, %v1372
        %v1681 = vpack.c.b16 %v1381, %v1377
        %v1682 = vpack.c.b16 %v1382, %v1378
        %v1683 = vpack.c.b16 %v1383, %v1379
        %v1684 = vpack.c.b16 %v1384, %v1380
        %v1685 = vpack.c.b16 %v1389, %v1385
        %v1686 = vpack.c.b16 %v1390, %v1386
        %v1687 = vpack.c.b16 %v1391, %v1387
        %v1688 = vpack.c.b16 %v1392, %v1388
        %v1689 = vpack.c.b16 %v1397, %v1393
        %v1690 = vpack.c.b16 %v1398, %v1394
        %v1691 = vpack.c.b16 %v1399, %v1395
        %v1692 = vpack.c.b16 %v1400, %v1396
        %v1693 = vpack.c.b16 %v1405, %v1401
        %v1694 = vpack.c.b16 %v1406, %v1402
        %v1695 = vpack.c.b16 %v1407, %v1403
        %v1696 = vpack.c.b16 %v1408, %v1404
        %v1697 = vpack.c.b16 %v1413, %v1409
        %v1698 = vpack.c.b16 %v1414, %v1410
        %v1699 = vpack.c.b16 %v1415, %v1411
        %v1700 = vpack.c.b16 %v1416, %v1412
        %v1701 = vpack.c.b16 %v1421, %v1417
        %v1702 = vpack.c.b16 %v1422, %v1418
        %v1703 = vpack.c.b16 %v1423, %v1419
        %v1704 = vpack.c.b16 %v1424, %v1420
        %v1705 = vpack.c.b16 %v1429, %v1425
        %v1706 = vpack.c.b16 %v1430, %v1426
        %v1707 = vpack.c.b16 %v1431, %v1427
        %v1708 = vpack.c.b16 %v1432, %v1428
        %v1709 = vpack.c.b16 %v1437, %v1433
        %v1710 = vpack.c.b16 %v1438, %v1434
        %v1711 = vpack.c.b16 %v1439, %v1435
        %v1712 = vpack.c.b16 %v1440, %v1436
        %v1713 = vpack.c.b16 %v1445, %v1441
        %v1714 = vpack.c.b16 %v1446, %v1442
        %v1715 = vpack.c.b16 %v1447, %v1443
        %v1716 = vpack.c.b16 %v1448, %v1444
        %v1717 = vpack.c.b16 %v1453, %v1449
        %v1718 = vpack.c.b16 %v1454, %v1450
        %v1719 = vpack.c.b16 %v1455, %v1451
        %v1720 = vpack.c.b16 %v1456, %v1452
        %v1721 = vpack.c.b16 %v1461, %v1457
        %v1722 = vpack.c.b16 %v1462, %v1458
        %v1723 = vpack.c.b16 %v1463, %v1459
        %v1724 = vpack.c.b16 %v1464, %v1460
        %v1725 = vpack.c.b16 %v1469, %v1465
        %v1726 = vpack.c.b16 %v1470, %v1466
        %v1727 = vpack.c.b16 %v1471, %v1467
        %v1728 = vpack.c.b16 %v1472, %v1468
        %v1729 = vpack.c.b16 %v1477, %v1473
        %v1730 = vpack.c.b16 %v1478, %v1474
        %v1731 = vpack.c.b16 %v1479, %v1475
        %v1732 = vpack.c.b16 %v1480, %v1476
        %v1733 = vpack.c.b16 %v1485, %v1481
        %v1734 = vpack.c.b16 %v1486, %v1482
        %v1735 = vpack.c.b16 %v1487, %v1483
        %v1736 = vpack.c.b16 %v1488, %v1484
        %v1737 = vpack.c.b16 %v1493, %v1489
        %v1738 = vpack.c.b16 %v1494, %v1490
        %v1739 = vpack.c.b16 %v1495, %v1491
        %v1740 = vpack.c.b16 %v1496, %v1492
        %v1741 = vpack.c.b16 %v1501, %v1497
        %v1742 = vpack.c.b16 %v1502, %v1498
        %v1743 = vpack.c.b16 %v1503, %v1499
        %v1744 = vpack.c.b16 %v1504, %v1500
        %v1745 = vpack.c.b16 %v1509, %v1505
        %v1746 = vpack.c.b16 %v1510, %v1506
        %v1747 = vpack.c.b16 %v1511, %v1507
        %v1748 = vpack.c.b16 %v1512, %v1508
        %v1749 = vpack.c.b16 %v1517, %v1513
        %v1750 = vpack.c.b16 %v1518, %v1514
        %v1751 = vpack.c.b16 %v1519, %v1515
        %v1752 = vpack.c.b16 %v1520, %v1516
        %v1753 = vpack.c.b16 %v1525, %v1521
        %v1754 = vpack.c.b16 %v1526, %v1522
        %v1755 = vpack.c.b16 %v1527, %v1523
        %v1756 = vpack.c.b16 %v1528, %v1524
        %v1757 = vpack.c.b16 %v1533, %v1529
        %v1758 = vpack.c.b16 %v1534, %v1530
        %v1759 = vpack.c.b16 %v1535, %v1531
        %v1760 = vpack.c.b16 %v1536, %v1532
        %v1761 = vpack.c.b16 %v1541, %v1537
        %v1762 = vpack.c.b16 %v1542, %v1538
        %v1763 = vpack.c.b16 %v1543, %v1539
        %v1764 = vpack.c.b16 %v1544, %v1540
        %v1765 = vpack.c.b16 %v1549, %v1545
        %v1766 = vpack.c.b16 %v1550, %v1546
        %v1767 = vpack.c.b16 %v1551, %v1547
        %v1768 = vpack.c.b16 %v1552, %v1548
        %v1769 = vpack.c.b16 %v1557, %v1553
        %v1770 = vpack.c.b16 %v1558, %v1554
        %v1771 = vpack.c.b16 %v1559, %v1555
        %v1772 = vpack.c.b16 %v1560, %v1556
        %v1773 = vpack.c.b16 %v1565, %v1561
        %v1774 = vpack.c.b16 %v1566, %v1562
        %v1775 = vpack.c.b16 %v1567, %v1563
        %v1776 = vpack.c.b16 %v1568, %v1564
        %v1777 = vpack.c.b16 %v1573, %v1569
        %v1778 = vpack.c.b16 %v1574, %v1570
        %v1779 = vpack.c.b16 %v1575, %v1571
        %v1780 = vpack.c.b16 %v1576, %v1572
        %v1781 = vpack.c.b16 %v1581, %v1577
        %v1782 = vpack.c.b16 %v1582, %v1578
        %v1783 = vpack.c.b16 %v1583, %v1579
        %v1784 = vpack.c.b16 %v1584, %v1580
        %vm1985 = vcmask 261120
        %v1987 = vsel %vm1985, %v939, 0
        %v1990 = vsel %vm1985, %v946, 0
        %v1993 = vsel %vm1985, %v953, 0
        %v1996 = vsel %vm1985, %v960, 0
        %1998 = vmatprep.subr.bf16.mxu0 %v1586
        %1999 = vmatpush1.bf16.msra.mxu0 %v1585
        %2000 = vmatprep.subr.bf16.mxu0 %v1590
        %2001 = vmatpush1.bf16.msra.mxu0 %v1589
        %2002 = vmatprep.subr.bf16.mxu0 %v1594
        %2003 = vmatpush1.bf16.msra.mxu0 %v1593
        %2004 = vmatprep.subr.bf16.mxu0 %v1598
        %2005 = vmatpush1.bf16.msra.mxu0 %v1597
        %2006 = vmatprep.subr.bf16.mxu0 %v1602
        %2007 = vmatpush1.bf16.msra.mxu0 %v1601
        %2008 = vmatprep.subr.bf16.mxu0 %v1606
        %2009 = vmatpush1.bf16.msra.mxu0 %v1605
        %2010 = vmatprep.subr.bf16.mxu0 %v1610
        %2011 = vmatpush1.bf16.msra.mxu0 %v1609
        %2012 = vmatprep.subr.bf16.mxu0 %v1614
        %2013 = vmatpush1.bf16.msra.mxu0 %v1613
        %2014 = vmatprep.subr.bf16.mxu0 %v1618
        %2015 = vmatpush1.bf16.msra.mxu0 %v1617
        %2016 = vmatprep.subr.bf16.mxu0 %v1622
        %2017 = vmatpush1.bf16.msra.mxu0 %v1621
        %2018 = vmatprep.subr.bf16.mxu0 %v1626
        %2019 = vmatpush1.bf16.msra.mxu0 %v1625
        %2020 = vmatprep.subr.bf16.mxu0 %v1630
        %2021 = vmatpush1.bf16.msra.mxu0 %v1629
        %2022 = vmatprep.subr.bf16.mxu0 %v1634
        %2023 = vmatpush1.bf16.msra.mxu0 %v1633
        %2024 = vmatprep.subr.bf16.mxu0 %v1638
        %2025 = vmatpush1.bf16.msra.mxu0 %v1637
        %2026 = vmatprep.subr.bf16.mxu0 %v1642
        %2027 = vmatpush1.bf16.msra.mxu0 %v1641
        %2028 = vmatprep.subr.bf16.mxu0 %v1646
        %2029 = vmatpush1.bf16.msra.mxu0 %v1645
        %2030 = vmatprep.mubr.bf16.mxu0 %v934
        %2031 = vmatmul.mubr.bf16.gmra.mrb[0].mxu0 %v933
        %v2032 = vpop.f32.mrb[0].mxu0
        %v2033 = vadd.f32 0.0, %v2032
        %v2034 = vpop.f32.mrb[0].mxu0
        %v2035 = vadd.f32 0.0, %v2034
        %v2036 = vpop.f32.mrb[0].mxu0
        %v2037 = vadd.f32 0.0, %v2036
        %v2038 = vpop.f32.mrb[0].mxu0
        %v2039 = vadd.f32 0.0, %v2038
        %2040 = vmatprep.mubr.bf16.mxu0 %v941
        %2041 = vmatmul.mubr.bf16.gmra.mrb[0].mxu0 %v940
        %v2042 = vpop.f32.mrb[0].mxu0
        %v2043 = vadd.f32 0.0, %v2042
        %v2044 = vpop.f32.mrb[0].mxu0
        %v2045 = vadd.f32 0.0, %v2044
        %v2046 = vpop.f32.mrb[0].mxu0
        %v2047 = vadd.f32 0.0, %v2046
        %v2048 = vpop.f32.mrb[0].mxu0
        %v2049 = vadd.f32 0.0, %v2048
        %2050 = vmatprep.mubr.bf16.mxu0 %v948
        %2051 = vmatmul.mubr.bf16.gmra.mrb[0].mxu0 %v947
        %v2052 = vpop.f32.mrb[0].mxu0
        %v2053 = vadd.f32 0.0, %v2052
        %v2054 = vpop.f32.mrb[0].mxu0
        %v2055 = vadd.f32 0.0, %v2054
        %v2056 = vpop.f32.mrb[0].mxu0
        %v2057 = vadd.f32 0.0, %v2056
        %v2058 = vpop.f32.mrb[0].mxu0
        %v2059 = vadd.f32 0.0, %v2058
        %2060 = vmatprep.mubr.bf16.mxu0 %v955
        %2061 = vmatmul.mubr.bf16.gmra.mrb[0].mxu0 %v954
        %v2062 = vpop.f32.mrb[0].mxu0
        %v2063 = vadd.f32 0.0, %v2062
        %v2064 = vpop.f32.mrb[0].mxu0
        %v2065 = vadd.f32 0.0, %v2064
        %v2066 = vpop.f32.mrb[0].mxu0
        %v2067 = vadd.f32 0.0, %v2066
        %v2068 = vpop.f32.mrb[0].mxu0
        %v2069 = vadd.f32 0.0, %v2068
        %2070 = vdwg.mxu0
        %2071 = vmatprep.subr.bf16.mxu0 %v1650
        %2072 = vmatpush1.bf16.msra.mxu0 %v1649
        %2073 = vmatprep.subr.bf16.mxu0 %v1654
        %2074 = vmatpush1.bf16.msra.mxu0 %v1653
        %2075 = vmatprep.subr.bf16.mxu0 %v1658
        %2076 = vmatpush1.bf16.msra.mxu0 %v1657
        %2077 = vmatprep.subr.bf16.mxu0 %v1662
        %2078 = vmatpush1.bf16.msra.mxu0 %v1661
        %2079 = vmatprep.subr.bf16.mxu0 %v1666
        %2080 = vmatpush1.bf16.msra.mxu0 %v1665
        %2081 = vmatprep.subr.bf16.mxu0 %v1670
        %2082 = vmatpush1.bf16.msra.mxu0 %v1669
        %2083 = vmatprep.subr.bf16.mxu0 %v1674
        %2084 = vmatpush1.bf16.msra.mxu0 %v1673
        %2085 = vmatprep.subr.bf16.mxu0 %v1678
        %2086 = vmatpush1.bf16.msra.mxu0 %v1677
        %2087 = vmatprep.subr.bf16.mxu0 %v1682
        %2088 = vmatpush1.bf16.msra.mxu0 %v1681
        %2089 = vmatprep.subr.bf16.mxu0 %v1686
        %2090 = vmatpush1.bf16.msra.mxu0 %v1685
        %2091 = vmatprep.subr.bf16.mxu0 %v1690
        %2092 = vmatpush1.bf16.msra.mxu0 %v1689
        %2093 = vmatprep.subr.bf16.mxu0 %v1694
        %2094 = vmatpush1.bf16.msra.mxu0 %v1693
        %2095 = vmatprep.subr.bf16.mxu0 %v1698
        %2096 = vmatpush1.bf16.msra.mxu0 %v1697
        %2097 = vmatprep.subr.bf16.mxu0 %v1702
        %2098 = vmatpush1.bf16.msra.mxu0 %v1701
        %2099 = vmatprep.subr.bf16.mxu0 %v1706
        %2100 = vmatpush1.bf16.msra.mxu0 %v1705
        %2101 = vmatprep.subr.bf16.mxu0 %v1710
        %2102 = vmatpush1.bf16.msra.mxu0 %v1709
        %2103 = vmatprep.mubr.bf16.mxu0 %v936
        %2104 = vmatmul.mubr.bf16.gmra.mrb[0].mxu0 %v935
        %v2105 = vpop.f32.mrb[0].mxu0
        %v2106 = vadd.f32 %v2033, %v2105
        %v2107 = vpop.f32.mrb[0].mxu0
        %v2108 = vadd.f32 %v2035, %v2107
        %v2109 = vpop.f32.mrb[0].mxu0
        %v2110 = vadd.f32 %v2037, %v2109
        %v2111 = vpop.f32.mrb[0].mxu0
        %v2112 = vadd.f32 %v2039, %v2111
        %2113 = vmatprep.mubr.bf16.mxu0 %v943
        %2114 = vmatmul.mubr.bf16.gmra.mrb[0].mxu0 %v942
        %v2115 = vpop.f32.mrb[0].mxu0
        %v2116 = vadd.f32 %v2043, %v2115
        %v2117 = vpop.f32.mrb[0].mxu0
        %v2118 = vadd.f32 %v2045, %v2117
        %v2119 = vpop.f32.mrb[0].mxu0
        %v2120 = vadd.f32 %v2047, %v2119
        %v2121 = vpop.f32.mrb[0].mxu0
        %v2122 = vadd.f32 %v2049, %v2121
        %2123 = vmatprep.mubr.bf16.mxu0 %v950
        %2124 = vmatmul.mubr.bf16.gmra.mrb[0].mxu0 %v949
        %v2125 = vpop.f32.mrb[0].mxu0
        %v2126 = vadd.f32 %v2053, %v2125
        %v2127 = vpop.f32.mrb[0].mxu0
        %v2128 = vadd.f32 %v2055, %v2127
        %v2129 = vpop.f32.mrb[0].mxu0
        %v2130 = vadd.f32 %v2057, %v2129
        %v2131 = vpop.f32.mrb[0].mxu0
        %v2132 = vadd.f32 %v2059, %v2131
        %2133 = vmatprep.mubr.bf16.mxu0 %v957
        %2134 = vmatmul.mubr.bf16.gmra.mrb[0].mxu0 %v956
        %v2135 = vpop.f32.mrb[0].mxu0
        %v2136 = vadd.f32 %v2063, %v2135
        %v2137 = vpop.f32.mrb[0].mxu0
        %v2138 = vadd.f32 %v2065, %v2137
        %v2139 = vpop.f32.mrb[0].mxu0
        %v2140 = vadd.f32 %v2067, %v2139
        %v2141 = vpop.f32.mrb[0].mxu0
        %v2142 = vadd.f32 %v2069, %v2141
        %2143 = vdwg.mxu0
        %2144 = vmatprep.subr.bf16.mxu0 %v1714
        %2145 = vmatpush1.bf16.msra.mxu0 %v1713
        %2146 = vmatprep.subr.bf16.mxu0 %v1718
        %2147 = vmatpush1.bf16.msra.mxu0 %v1717
        %2148 = vmatprep.subr.bf16.mxu0 %v1722
        %2149 = vmatpush1.bf16.msra.mxu0 %v1721
        %2150 = vmatprep.subr.bf16.mxu0 %v1726
        %2151 = vmatpush1.bf16.msra.mxu0 %v1725
        %2152 = vmatprep.subr.bf16.mxu0 %v1730
        %2153 = vmatpush1.bf16.msra.mxu0 %v1729
        %2154 = vmatprep.subr.bf16.mxu0 %v1734
        %2155 = vmatpush1.bf16.msra.mxu0 %v1733
        %2156 = vmatprep.subr.bf16.mxu0 %v1738
        %2157 = vmatpush1.bf16.msra.mxu0 %v1737
        %2158 = vmatprep.subr.bf16.mxu0 %v1742
        %2159 = vmatpush1.bf16.msra.mxu0 %v1741
        %2160 = vmatprep.subr.bf16.mxu0 %v1746
        %2161 = vmatpush1.bf16.msra.mxu0 %v1745
        %2162 = vmatprep.subr.bf16.mxu0 %v1750
        %2163 = vmatpush1.bf16.msra.mxu0 %v1749
        %2164 = vmatprep.subr.bf16.mxu0 %v1754
        %2165 = vmatpush1.bf16.msra.mxu0 %v1753
        %2166 = vmatprep.subr.bf16.mxu0 %v1758
        %2167 = vmatpush1.bf16.msra.mxu0 %v1757
        %2168 = vmatprep.subr.bf16.mxu0 %v1762
        %2169 = vmatpush1.bf16.msra.mxu0 %v1761
        %2170 = vmatprep.subr.bf16.mxu0 %v1766
        %2171 = vmatpush1.bf16.msra.mxu0 %v1765
        %2172 = vmatprep.subr.bf16.mxu0 %v1770
        %2173 = vmatpush1.bf16.msra.mxu0 %v1769
        %2174 = vmatprep.subr.bf16.mxu0 %v1774
        %2175 = vmatpush1.bf16.msra.mxu0 %v1773
        %2176 = vmatprep.mubr.bf16.mxu0 %v938
        %2177 = vmatmul.mubr.bf16.gmra.mrb[0].mxu0 %v937
        %v2178 = vpop.f32.mrb[0].mxu0
        %v2179 = vadd.f32 %v2106, %v2178
        %v2180 = vpop.f32.mrb[0].mxu0
        %v2181 = vadd.f32 %v2108, %v2180
        %v2182 = vpop.f32.mrb[0].mxu0
        %v2183 = vadd.f32 %v2110, %v2182
        %v2184 = vpop.f32.mrb[0].mxu0
        %v2185 = vadd.f32 %v2112, %v2184
        %2186 = vmatprep.mubr.bf16.mxu0 %v945
        %2187 = vmatmul.mubr.bf16.gmra.mrb[0].mxu0 %v944
        %v2188 = vpop.f32.mrb[0].mxu0
        %v2189 = vadd.f32 %v2116, %v2188
        %v2190 = vpop.f32.mrb[0].mxu0
        %v2191 = vadd.f32 %v2118, %v2190
        %v2192 = vpop.f32.mrb[0].mxu0
        %v2193 = vadd.f32 %v2120, %v2192
        %v2194 = vpop.f32.mrb[0].mxu0
        %v2195 = vadd.f32 %v2122, %v2194
        %2196 = vmatprep.mubr.bf16.mxu0 %v952
        %2197 = vmatmul.mubr.bf16.gmra.mrb[0].mxu0 %v951
        %v2198 = vpop.f32.mrb[0].mxu0
        %v2199 = vadd.f32 %v2126, %v2198
        %v2200 = vpop.f32.mrb[0].mxu0
        %v2201 = vadd.f32 %v2128, %v2200
        %v2202 = vpop.f32.mrb[0].mxu0
        %v2203 = vadd.f32 %v2130, %v2202
        %v2204 = vpop.f32.mrb[0].mxu0
        %v2205 = vadd.f32 %v2132, %v2204
        %2206 = vmatprep.mubr.bf16.mxu0 %v959
        %2207 = vmatmul.mubr.bf16.gmra.mrb[0].mxu0 %v958
        %v2208 = vpop.f32.mrb[0].mxu0
        %v2209 = vadd.f32 %v2136, %v2208
        %v2210 = vpop.f32.mrb[0].mxu0
        %v2211 = vadd.f32 %v2138, %v2210
        %v2212 = vpop.f32.mrb[0].mxu0
        %v2213 = vadd.f32 %v2140, %v2212
        %v2214 = vpop.f32.mrb[0].mxu0
        %v2215 = vadd.f32 %v2142, %v2214
        %2216 = vdwg.mxu0
        %2217 = vmatprep.subr.bf16.mxu0 %v1778
        %2218 = vmatpush1.bf16.msra.mxu0 %v1777
        %2219 = vmatprep.subr.bf16.mxu0 %v1782
        %2220 = vmatpush1.bf16.msra.mxu0 %v1781
        %2221 = vmatprep.subr.bf16.mxu0 0
        %2222 = vmatpush1.bf16.msra.mxu0 0
        %2223 = vmatprep.subr.bf16.mxu0 0
        %2224 = vmatpush1.bf16.msra.mxu0 0
        %2225 = vmatprep.subr.bf16.mxu0 0
        %2226 = vmatpush1.bf16.msra.mxu0 0
        %2227 = vmatprep.subr.bf16.mxu0 0
        %2228 = vmatpush1.bf16.msra.mxu0 0
        %2229 = vmatprep.subr.bf16.mxu0 0
        %2230 = vmatpush1.bf16.msra.mxu0 0
        %2231 = vmatprep.subr.bf16.mxu0 0
        %2232 = vmatpush1.bf16.msra.mxu0 0
        %2233 = vmatprep.subr.bf16.mxu0 0
        %2234 = vmatpush1.bf16.msra.mxu0 0
        %2235 = vmatprep.subr.bf16.mxu0 0
        %2236 = vmatpush1.bf16.msra.mxu0 0
        %2237 = vmatprep.subr.bf16.mxu0 0
        %2238 = vmatpush1.bf16.msra.mxu0 0
        %2239 = vmatprep.subr.bf16.mxu0 0
        %2240 = vmatpush1.bf16.msra.mxu0 0
        %2241 = vmatprep.subr.bf16.mxu0 0
        %2242 = vmatpush1.bf16.msra.mxu0 0
        %2243 = vmatprep.subr.bf16.mxu0 0
        %2244 = vmatpush1.bf16.msra.mxu0 0
        %2245 = vmatprep.subr.bf16.mxu0 0
        %2246 = vmatpush1.bf16.msra.mxu0 0
        %2247 = vmatprep.subr.bf16.mxu0 0
        %2248 = vmatpush1.bf16.msra.mxu0 0
        %2249 = vmatprep.mubr.bf16.mxu0 0
        %2250 = vmatmul.mubr.bf16.gmra.mrb[0].mxu0 %v1987
        %v2251 = vpop.f32.mrb[0].mxu0
        %v2252 = vadd.f32 %v2179, %v2251
        %v2253 = vpop.f32.mrb[0].mxu0
        %v2254 = vadd.f32 %v2181, %v2253
        %v2255 = vpop.f32.mrb[0].mxu0
        %v2256 = vadd.f32 %v2183, %v2255
        %v2257 = vpop.f32.mrb[0].mxu0
        %v2258 = vadd.f32 %v2185, %v2257
        %2259 = vmatprep.mubr.bf16.mxu0 0
        %2260 = vmatmul.mubr.bf16.gmra.mrb[0].mxu0 %v1990
        %v2261 = vpop.f32.mrb[0].mxu0
        %v2262 = vadd.f32 %v2189, %v2261
        %v2263 = vpop.f32.mrb[0].mxu0
        %v2264 = vadd.f32 %v2191, %v2263
        %v2265 = vpop.f32.mrb[0].mxu0
        %v2266 = vadd.f32 %v2193, %v2265
        %v2267 = vpop.f32.mrb[0].mxu0
        %v2268 = vadd.f32 %v2195, %v2267
        %2269 = vmatprep.mubr.bf16.mxu0 0
        %2270 = vmatmul.mubr.bf16.gmra.mrb[0].mxu0 %v1993
        %v2271 = vpop.f32.mrb[0].mxu0
        %v2272 = vadd.f32 %v2199, %v2271
        %v2273 = vpop.f32.mrb[0].mxu0
        %v2274 = vadd.f32 %v2201, %v2273
        %v2275 = vpop.f32.mrb[0].mxu0
        %v2276 = vadd.f32 %v2203, %v2275
        %v2277 = vpop.f32.mrb[0].mxu0
        %v2278 = vadd.f32 %v2205, %v2277
        %2279 = vmatprep.mubr.bf16.mxu0 0
        %2280 = vmatmul.mubr.bf16.gmra.mrb[0].mxu0 %v1996
        %v2281 = vpop.f32.mrb[0].mxu0
        %v2282 = vadd.f32 %v2209, %v2281
        %v2283 = vpop.f32.mrb[0].mxu0
        %v2284 = vadd.f32 %v2211, %v2283
        %v2285 = vpop.f32.mrb[0].mxu0
        %v2286 = vadd.f32 %v2213, %v2285
        %v2287 = vpop.f32.mrb[0].mxu0
        %v2288 = vadd.f32 %v2215, %v2287
        %2289 = vdwg.mxu0
        %2290 = vmatprep.subr.bf16.mxu0 %v1588
        %2291 = vmatpush1.bf16.msra.mxu0 %v1587
        %2292 = vmatprep.subr.bf16.mxu0 %v1592
        %2293 = vmatpush1.bf16.msra.mxu0 %v1591
        %2294 = vmatprep.subr.bf16.mxu0 %v1596
        %2295 = vmatpush1.bf16.msra.mxu0 %v1595
        %2296 = vmatprep.subr.bf16.mxu0 %v1600
        %2297 = vmatpush1.bf16.msra.mxu0 %v1599
        %2298 = vmatprep.subr.bf16.mxu0 %v1604
        %2299 = vmatpush1.bf16.msra.mxu0 %v1603
        %2300 = vmatprep.subr.bf16.mxu0 %v1608
        %2301 = vmatpush1.bf16.msra.mxu0 %v1607
        %2302 = vmatprep.subr.bf16.mxu0 %v1612
        %2303 = vmatpush1.bf16.msra.mxu0 %v1611
        %2304 = vmatprep.subr.bf16.mxu0 %v1616
        %2305 = vmatpush1.bf16.msra.mxu0 %v1615
        %2306 = vmatprep.subr.bf16.mxu0 %v1620
        %2307 = vmatpush1.bf16.msra.mxu0 %v1619
        %2308 = vmatprep.subr.bf16.mxu0 %v1624
        %2309 = vmatpush1.bf16.msra.mxu0 %v1623
        %2310 = vmatprep.subr.bf16.mxu0 %v1628
        %2311 = vmatpush1.bf16.msra.mxu0 %v1627
        %2312 = vmatprep.subr.bf16.mxu0 %v1632
        %2313 = vmatpush1.bf16.msra.mxu0 %v1631
        %2314 = vmatprep.subr.bf16.mxu0 %v1636
        %2315 = vmatpush1.bf16.msra.mxu0 %v1635
        %2316 = vmatprep.subr.bf16.mxu0 %v1640
        %2317 = vmatpush1.bf16.msra.mxu0 %v1639
        %2318 = vmatprep.subr.bf16.mxu0 %v1644
        %2319 = vmatpush1.bf16.msra.mxu0 %v1643
        %2320 = vmatprep.subr.bf16.mxu0 %v1648
        %2321 = vmatpush1.bf16.msra.mxu0 %v1647
        %2322 = vmatprep.mubr.bf16.mxu0 %v934
        %2323 = vmatmul.mubr.bf16.gmra.mrb[0].mxu0 %v933
        %v2324 = vpop.f32.mrb[0].mxu0
        %v2325 = vadd.f32 0.0, %v2324
        %v2326 = vpop.f32.mrb[0].mxu0
        %v2327 = vadd.f32 0.0, %v2326
        %v2328 = vpop.f32.mrb[0].mxu0
        %v2329 = vadd.f32 0.0, %v2328
        %v2330 = vpop.f32.mrb[0].mxu0
        %v2331 = vadd.f32 0.0, %v2330
        %2332 = vmatprep.mubr.bf16.mxu0 %v941
        %2333 = vmatmul.mubr.bf16.gmra.mrb[0].mxu0 %v940
        %v2334 = vpop.f32.mrb[0].mxu0
        %v2335 = vadd.f32 0.0, %v2334
        %v2336 = vpop.f32.mrb[0].mxu0
        %v2337 = vadd.f32 0.0, %v2336
        %v2338 = vpop.f32.mrb[0].mxu0
        %v2339 = vadd.f32 0.0, %v2338
        %v2340 = vpop.f32.mrb[0].mxu0
        %v2341 = vadd.f32 0.0, %v2340
        %2342 = vmatprep.mubr.bf16.mxu0 %v948
        %2343 = vmatmul.mubr.bf16.gmra.mrb[0].mxu0 %v947
        %v2344 = vpop.f32.mrb[0].mxu0
        %v2345 = vadd.f32 0.0, %v2344
        %v2346 = vpop.f32.mrb[0].mxu0
        %v2347 = vadd.f32 0.0, %v2346
        %v2348 = vpop.f32.mrb[0].mxu0
        %v2349 = vadd.f32 0.0, %v2348
        %v2350 = vpop.f32.mrb[0].mxu0
        %v2351 = vadd.f32 0.0, %v2350
        %2352 = vmatprep.mubr.bf16.mxu0 %v955
        %2353 = vmatmul.mubr.bf16.gmra.mrb[0].mxu0 %v954
        %v2354 = vpop.f32.mrb[0].mxu0
        %v2355 = vadd.f32 0.0, %v2354
        %v2356 = vpop.f32.mrb[0].mxu0
        %v2357 = vadd.f32 0.0, %v2356
        %v2358 = vpop.f32.mrb[0].mxu0
        %v2359 = vadd.f32 0.0, %v2358
        %v2360 = vpop.f32.mrb[0].mxu0
        %v2361 = vadd.f32 0.0, %v2360
        %2362 = vdwg.mxu0
        %2363 = vmatprep.subr.bf16.mxu0 %v1652
        %2364 = vmatpush1.bf16.msra.mxu0 %v1651
        %2365 = vmatprep.subr.bf16.mxu0 %v1656
        %2366 = vmatpush1.bf16.msra.mxu0 %v1655
        %2367 = vmatprep.subr.bf16.mxu0 %v1660
        %2368 = vmatpush1.bf16.msra.mxu0 %v1659
        %2369 = vmatprep.subr.bf16.mxu0 %v1664
        %2370 = vmatpush1.bf16.msra.mxu0 %v1663
        %2371 = vmatprep.subr.bf16.mxu0 %v1668
        %2372 = vmatpush1.bf16.msra.mxu0 %v1667
        %2373 = vmatprep.subr.bf16.mxu0 %v1672
        %2374 = vmatpush1.bf16.msra.mxu0 %v1671
        %2375 = vmatprep.subr.bf16.mxu0 %v1676
        %2376 = vmatpush1.bf16.msra.mxu0 %v1675
        %2377 = vmatprep.subr.bf16.mxu0 %v1680
        %2378 = vmatpush1.bf16.msra.mxu0 %v1679
        %2379 = vmatprep.subr.bf16.mxu0 %v1684
        %2380 = vmatpush1.bf16.msra.mxu0 %v1683
        %2381 = vmatprep.subr.bf16.mxu0 %v1688
        %2382 = vmatpush1.bf16.msra.mxu0 %v1687
        %2383 = vmatprep.subr.bf16.mxu0 %v1692
        %2384 = vmatpush1.bf16.msra.mxu0 %v1691
        %2385 = vmatprep.subr.bf16.mxu0 %v1696
        %2386 = vmatpush1.bf16.msra.mxu0 %v1695
        %2387 = vmatprep.subr.bf16.mxu0 %v1700
        %2388 = vmatpush1.bf16.msra.mxu0 %v1699
        %2389 = vmatprep.subr.bf16.mxu0 %v1704
        %2390 = vmatpush1.bf16.msra.mxu0 %v1703
        %2391 = vmatprep.subr.bf16.mxu0 %v1708
        %2392 = vmatpush1.bf16.msra.mxu0 %v1707
        %2393 = vmatprep.subr.bf16.mxu0 %v1712
        %2394 = vmatpush1.bf16.msra.mxu0 %v1711
        %2395 = vmatprep.mubr.bf16.mxu0 %v936
        %2396 = vmatmul.mubr.bf16.gmra.mrb[0].mxu0 %v935
        %v2397 = vpop.f32.mrb[0].mxu0
        %v2398 = vadd.f32 %v2325, %v2397
        %v2399 = vpop.f32.mrb[0].mxu0
        %v2400 = vadd.f32 %v2327, %v2399
        %v2401 = vpop.f32.mrb[0].mxu0
        %v2402 = vadd.f32 %v2329, %v2401
        %v2403 = vpop.f32.mrb[0].mxu0
        %v2404 = vadd.f32 %v2331, %v2403
        %2405 = vmatprep.mubr.bf16.mxu0 %v943
        %2406 = vmatmul.mubr.bf16.gmra.mrb[0].mxu0 %v942
        %v2407 = vpop.f32.mrb[0].mxu0
        %v2408 = vadd.f32 %v2335, %v2407
        %v2409 = vpop.f32.mrb[0].mxu0
        %v2410 = vadd.f32 %v2337, %v2409
        %v2411 = vpop.f32.mrb[0].mxu0
        %v2412 = vadd.f32 %v2339, %v2411
        %v2413 = vpop.f32.mrb[0].mxu0
        %v2414 = vadd.f32 %v2341, %v2413
        %2415 = vmatprep.mubr.bf16.mxu0 %v950
        %2416 = vmatmul.mubr.bf16.gmra.mrb[0].mxu0 %v949
        %v2417 = vpop.f32.mrb[0].mxu0
        %v2418 = vadd.f32 %v2345, %v2417
        %v2419 = vpop.f32.mrb[0].mxu0
        %v2420 = vadd.f32 %v2347, %v2419
        %v2421 = vpop.f32.mrb[0].mxu0
        %v2422 = vadd.f32 %v2349, %v2421
        %v2423 = vpop.f32.mrb[0].mxu0
        %v2424 = vadd.f32 %v2351, %v2423
        %2425 = vmatprep.mubr.bf16.mxu0 %v957
        %2426 = vmatmul.mubr.bf16.gmra.mrb[0].mxu0 %v956
        %v2427 = vpop.f32.mrb[0].mxu0
        %v2428 = vadd.f32 %v2355, %v2427
        %v2429 = vpop.f32.mrb[0].mxu0
        %v2430 = vadd.f32 %v2357, %v2429
        %v2431 = vpop.f32.mrb[0].mxu0
        %v2432 = vadd.f32 %v2359, %v2431
        %v2433 = vpop.f32.mrb[0].mxu0
        %v2434 = vadd.f32 %v2361, %v2433
        %2435 = vdwg.mxu0
        %2436 = vmatprep.subr.bf16.mxu0 %v1716
        %2437 = vmatpush1.bf16.msra.mxu0 %v1715
        %2438 = vmatprep.subr.bf16.mxu0 %v1720
        %2439 = vmatpush1.bf16.msra.mxu0 %v1719
        %2440 = vmatprep.subr.bf16.mxu0 %v1724
        %2441 = vmatpush1.bf16.msra.mxu0 %v1723
        %2442 = vmatprep.subr.bf16.mxu0 %v1728
        %2443 = vmatpush1.bf16.msra.mxu0 %v1727
        %2444 = vmatprep.subr.bf16.mxu0 %v1732
        %2445 = vmatpush1.bf16.msra.mxu0 %v1731
        %2446 = vmatprep.subr.bf16.mxu0 %v1736
        %2447 = vmatpush1.bf16.msra.mxu0 %v1735
        %2448 = vmatprep.subr.bf16.mxu0 %v1740
        %2449 = vmatpush1.bf16.msra.mxu0 %v1739
        %2450 = vmatprep.subr.bf16.mxu0 %v1744
        %2451 = vmatpush1.bf16.msra.mxu0 %v1743
        %2452 = vmatprep.subr.bf16.mxu0 %v1748
        %2453 = vmatpush1.bf16.msra.mxu0 %v1747
        %2454 = vmatprep.subr.bf16.mxu0 %v1752
        %2455 = vmatpush1.bf16.msra.mxu0 %v1751
        %2456 = vmatprep.subr.bf16.mxu0 %v1756
        %2457 = vmatpush1.bf16.msra.mxu0 %v1755
        %2458 = vmatprep.subr.bf16.mxu0 %v1760
        %2459 = vmatpush1.bf16.msra.mxu0 %v1759
        %2460 = vmatprep.subr.bf16.mxu0 %v1764
        %2461 = vmatpush1.bf16.msra.mxu0 %v1763
        %2462 = vmatprep.subr.bf16.mxu0 %v1768
        %2463 = vmatpush1.bf16.msra.mxu0 %v1767
        %2464 = vmatprep.subr.bf16.mxu0 %v1772
        %2465 = vmatpush1.bf16.msra.mxu0 %v1771
        %2466 = vmatprep.subr.bf16.mxu0 %v1776
        %2467 = vmatpush1.bf16.msra.mxu0 %v1775
        %2468 = vmatprep.mubr.bf16.mxu0 %v938
        %2469 = vmatmul.mubr.bf16.gmra.mrb[0].mxu0 %v937
        %v2470 = vpop.f32.mrb[0].mxu0
        %v2471 = vadd.f32 %v2398, %v2470
        %v2472 = vpop.f32.mrb[0].mxu0
        %v2473 = vadd.f32 %v2400, %v2472
        %v2474 = vpop.f32.mrb[0].mxu0
        %v2475 = vadd.f32 %v2402, %v2474
        %v2476 = vpop.f32.mrb[0].mxu0
        %v2477 = vadd.f32 %v2404, %v2476
        %2478 = vmatprep.mubr.bf16.mxu0 %v945
        %2479 = vmatmul.mubr.bf16.gmra.mrb[0].mxu0 %v944
        %v2480 = vpop.f32.mrb[0].mxu0
        %v2481 = vadd.f32 %v2408, %v2480
        %v2482 = vpop.f32.mrb[0].mxu0
        %v2483 = vadd.f32 %v2410, %v2482
        %v2484 = vpop.f32.mrb[0].mxu0
        %v2485 = vadd.f32 %v2412, %v2484
        %v2486 = vpop.f32.mrb[0].mxu0
        %v2487 = vadd.f32 %v2414, %v2486
        %2488 = vmatprep.mubr.bf16.mxu0 %v952
        %2489 = vmatmul.mubr.bf16.gmra.mrb[0].mxu0 %v951
        %v2490 = vpop.f32.mrb[0].mxu0
        %v2491 = vadd.f32 %v2418, %v2490
        %v2492 = vpop.f32.mrb[0].mxu0
        %v2493 = vadd.f32 %v2420, %v2492
        %v2494 = vpop.f32.mrb[0].mxu0
        %v2495 = vadd.f32 %v2422, %v2494
        %v2496 = vpop.f32.mrb[0].mxu0
        %v2497 = vadd.f32 %v2424, %v2496
        %2498 = vmatprep.mubr.bf16.mxu0 %v959
        %2499 = vmatmul.mubr.bf16.gmra.mrb[0].mxu0 %v958
        %v2500 = vpop.f32.mrb[0].mxu0
        %v2501 = vadd.f32 %v2428, %v2500
        %v2502 = vpop.f32.mrb[0].mxu0
        %v2503 = vadd.f32 %v2430, %v2502
        %v2504 = vpop.f32.mrb[0].mxu0
        %v2505 = vadd.f32 %v2432, %v2504
        %v2506 = vpop.f32.mrb[0].mxu0
        %v2507 = vadd.f32 %v2434, %v2506
        %2508 = vdwg.mxu0
        %2509 = vmatprep.subr.bf16.mxu0 %v1780
        %2510 = vmatpush1.bf16.msra.mxu0 %v1779
        %2511 = vmatprep.subr.bf16.mxu0 %v1784
        %2512 = vmatpush1.bf16.msra.mxu0 %v1783
        %2513 = vmatprep.subr.bf16.mxu0 0
        %2514 = vmatpush1.bf16.msra.mxu0 0
        %2515 = vmatprep.subr.bf16.mxu0 0
        %2516 = vmatpush1.bf16.msra.mxu0 0
        %2517 = vmatprep.subr.bf16.mxu0 0
        %2518 = vmatpush1.bf16.msra.mxu0 0
        %2519 = vmatprep.subr.bf16.mxu0 0
        %2520 = vmatpush1.bf16.msra.mxu0 0
        %2521 = vmatprep.subr.bf16.mxu0 0
        %2522 = vmatpush1.bf16.msra.mxu0 0
        %2523 = vmatprep.subr.bf16.mxu0 0
        %2524 = vmatpush1.bf16.msra.mxu0 0
        %2525 = vmatprep.subr.bf16.mxu0 0
        %2526 = vmatpush1.bf16.msra.mxu0 0
        %2527 = vmatprep.subr.bf16.mxu0 0
        %2528 = vmatpush1.bf16.msra.mxu0 0
        %2529 = vmatprep.subr.bf16.mxu0 0
        %2530 = vmatpush1.bf16.msra.mxu0 0
        %2531 = vmatprep.subr.bf16.mxu0 0
        %2532 = vmatpush1.bf16.msra.mxu0 0
        %2533 = vmatprep.subr.bf16.mxu0 0
        %2534 = vmatpush1.bf16.msra.mxu0 0
        %2535 = vmatprep.subr.bf16.mxu0 0
        %2536 = vmatpush1.bf16.msra.mxu0 0
        %2537 = vmatprep.subr.bf16.mxu0 0
        %2538 = vmatpush1.bf16.msra.mxu0 0
        %2539 = vmatprep.subr.bf16.mxu0 0
        %2540 = vmatpush1.bf16.msra.mxu0 0
        %2541 = vmatprep.mubr.bf16.mxu0 0
        %2542 = vmatmul.mubr.bf16.gmra.mrb[0].mxu0 %v1987
        %v2543 = vpop.f32.mrb[0].mxu0
        %v2544 = vadd.f32 %v2471, %v2543
        %v2545 = vpop.f32.mrb[0].mxu0
        %v2546 = vadd.f32 %v2473, %v2545
        %v2547 = vpop.f32.mrb[0].mxu0
        %v2548 = vadd.f32 %v2475, %v2547
        %v2549 = vpop.f32.mrb[0].mxu0
        %v2550 = vadd.f32 %v2477, %v2549
        %2551 = vmatprep.mubr.bf16.mxu0 0
        %2552 = vmatmul.mubr.bf16.gmra.mrb[0].mxu0 %v1990
        %v2553 = vpop.f32.mrb[0].mxu0
        %v2554 = vadd.f32 %v2481, %v2553
        %v2555 = vpop.f32.mrb[0].mxu0
        %v2556 = vadd.f32 %v2483, %v2555
        %v2557 = vpop.f32.mrb[0].mxu0
        %v2558 = vadd.f32 %v2485, %v2557
        %v2559 = vpop.f32.mrb[0].mxu0
        %v2560 = vadd.f32 %v2487, %v2559
        %2561 = vmatprep.mubr.bf16.mxu0 0
        %2562 = vmatmul.mubr.bf16.gmra.mrb[0].mxu0 %v1993
        %v2563 = vpop.f32.mrb[0].mxu0
        %v2564 = vadd.f32 %v2491, %v2563
        %v2565 = vpop.f32.mrb[0].mxu0
        %v2566 = vadd.f32 %v2493, %v2565
        %v2567 = vpop.f32.mrb[0].mxu0
        %v2568 = vadd.f32 %v2495, %v2567
        %v2569 = vpop.f32.mrb[0].mxu0
        %v2570 = vadd.f32 %v2497, %v2569
        %2571 = vmatprep.mubr.bf16.mxu0 0
        %2572 = vmatmul.mubr.bf16.gmra.mrb[0].mxu0 %v1996
        %v2573 = vpop.f32.mrb[0].mxu0
        %v2574 = vadd.f32 %v2501, %v2573
        %v2575 = vpop.f32.mrb[0].mxu0
        %v2576 = vadd.f32 %v2503, %v2575
        %v2577 = vpop.f32.mrb[0].mxu0
        %v2578 = vadd.f32 %v2505, %v2577
        %v2579 = vpop.f32.mrb[0].mxu0
        %v2580 = vadd.f32 %v2507, %v2579
        %2581 = vdwg.mxu0
        %v2582 = vld [vmem:[%s2] sm:$0xff]
        %v2583 = vld [vmem:[%s2 + $0x8] sm:$0xff]
        %v2584 = vld [vmem:[%s2 + $0x10] sm:$0xff]
        %v2585 = vld [vmem:[%s2 + $0x18] sm:$0xff]
        %v2586 = vld [vmem:[%s2 + $0x20] sm:$0xff]
        %v2587 = vld [vmem:[%s2 + $0x28] sm:$0xff]
        %v2588 = vld [vmem:[%s2 + $0x30] sm:$0xff]
        %v2589 = vld [vmem:[%s2 + $0x38] sm:$0xff]
        %2591 = vset.pattern.permute.xlu0 0
        %2592 = vperm.xlu0 %2591, %v2582
        %v2593 = vpop.permute.xlu0 %2592
        %2596 = vset.pattern.permute.xlu0 0
        %2597 = vperm.xlu0 %2596, %v2583
        %v2598 = vpop.permute.xlu0 %2597
        %2601 = vset.pattern.permute.xlu0 0
        %2602 = vperm.xlu0 %2601, %v2584
        %v2603 = vpop.permute.xlu0 %2602
        %2606 = vset.pattern.permute.xlu0 0
        %2607 = vperm.xlu0 %2606, %v2585
        %v2608 = vpop.permute.xlu0 %2607
        %2611 = vset.pattern.permute.xlu0 0
        %2612 = vperm.xlu0 %2611, %v2586
        %v2613 = vpop.permute.xlu0 %2612
        %2616 = vset.pattern.permute.xlu0 0
        %2617 = vperm.xlu0 %2616, %v2587
        %v2618 = vpop.permute.xlu0 %2617
        %2621 = vset.pattern.permute.xlu0 0
        %2622 = vperm.xlu0 %2621, %v2588
        %v2623 = vpop.permute.xlu0 %2622
        %2626 = vset.pattern.permute.xlu0 0
        %2627 = vperm.xlu0 %2626, %v2589
        %v2628 = vpop.permute.xlu0 %2627
        %v2630 = vmul.f32 %v2252, %v2593
        %v2631 = vmul.f32 %v2254, %v2593
        %v2632 = vmul.f32 %v2544, %v2593
        %v2633 = vmul.f32 %v2546, %v2593
        %v2634 = vmul.f32 %v2256, %v2598
        %v2635 = vmul.f32 %v2258, %v2598
        %v2636 = vmul.f32 %v2548, %v2598
        %v2637 = vmul.f32 %v2550, %v2598
        %v2638 = vmul.f32 %v2262, %v2603
        %v2639 = vmul.f32 %v2264, %v2603
        %v2640 = vmul.f32 %v2554, %v2603
        %v2641 = vmul.f32 %v2556, %v2603
        %v2642 = vmul.f32 %v2266, %v2608
        %v2643 = vmul.f32 %v2268, %v2608
        %v2644 = vmul.f32 %v2558, %v2608
        %v2645 = vmul.f32 %v2560, %v2608
        %v2646 = vmul.f32 %v2272, %v2613
        %v2647 = vmul.f32 %v2274, %v2613
        %v2648 = vmul.f32 %v2564, %v2613
        %v2649 = vmul.f32 %v2566, %v2613
        %v2650 = vmul.f32 %v2276, %v2618
        %v2651 = vmul.f32 %v2278, %v2618
        %v2652 = vmul.f32 %v2568, %v2618
        %v2653 = vmul.f32 %v2570, %v2618
        %v2654 = vmul.f32 %v2282, %v2623
        %v2655 = vmul.f32 %v2284, %v2623
        %v2656 = vmul.f32 %v2574, %v2623
        %v2657 = vmul.f32 %v2576, %v2623
        %v2658 = vmul.f32 %v2286, %v2628
        %v2659 = vmul.f32 %v2288, %v2628
        %v2660 = vmul.f32 %v2578, %v2628
        %v2661 = vmul.f32 %v2580, %v2628
        %v2662 = vld [vmem:[%s3] sm:$0xff]
        %v2663 = vld [vmem:[%s3 + $0x8] sm:$0xff]
        %v2664 = vld [vmem:[%s3 + $0x10] sm:$0xff]
        %v2665 = vld [vmem:[%s3 + $0x18] sm:$0xff]
        %v2666 = vld [vmem:[%s3 + $0x20] sm:$0xff]
        %v2667 = vld [vmem:[%s3 + $0x28] sm:$0xff]
        %v2668 = vld [vmem:[%s3 + $0x30] sm:$0xff]
        %v2669 = vld [vmem:[%s3 + $0x38] sm:$0xff]
        %2671 = vset.pattern.permute.xlu0 0
        %2672 = vperm.xlu0 %2671, %v2662
        %v2673 = vpop.permute.xlu0 %2672
        %2676 = vset.pattern.permute.xlu0 0
        %2677 = vperm.xlu0 %2676, %v2663
        %v2678 = vpop.permute.xlu0 %2677
        %2681 = vset.pattern.permute.xlu0 0
        %2682 = vperm.xlu0 %2681, %v2664
        %v2683 = vpop.permute.xlu0 %2682
        %2686 = vset.pattern.permute.xlu0 0
        %2687 = vperm.xlu0 %2686, %v2665
        %v2688 = vpop.permute.xlu0 %2687
        %2691 = vset.pattern.permute.xlu0 0
        %2692 = vperm.xlu0 %2691, %v2666
        %v2693 = vpop.permute.xlu0 %2692
        %2696 = vset.pattern.permute.xlu0 0
        %2697 = vperm.xlu0 %2696, %v2667
        %v2698 = vpop.permute.xlu0 %2697
        %2701 = vset.pattern.permute.xlu0 0
        %2702 = vperm.xlu0 %2701, %v2668
        %v2703 = vpop.permute.xlu0 %2702
        %2706 = vset.pattern.permute.xlu0 0
        %2707 = vperm.xlu0 %2706, %v2669
        %v2708 = vpop.permute.xlu0 %2707
        %v2710 = vadd.f32 %v2630, %v2673
        %v2711 = vadd.f32 %v2631, %v2673
        %v2712 = vadd.f32 %v2632, %v2673
        %v2713 = vadd.f32 %v2633, %v2673
        %v2714 = vadd.f32 %v2634, %v2678
        %v2715 = vadd.f32 %v2635, %v2678
        %v2716 = vadd.f32 %v2636, %v2678
        %v2717 = vadd.f32 %v2637, %v2678
        %v2718 = vadd.f32 %v2638, %v2683
        %v2719 = vadd.f32 %v2639, %v2683
        %v2720 = vadd.f32 %v2640, %v2683
        %v2721 = vadd.f32 %v2641, %v2683
        %v2722 = vadd.f32 %v2642, %v2688
        %v2723 = vadd.f32 %v2643, %v2688
        %v2724 = vadd.f32 %v2644, %v2688
        %v2725 = vadd.f32 %v2645, %v2688
        %v2726 = vadd.f32 %v2646, %v2693
        %v2727 = vadd.f32 %v2647, %v2693
        %v2728 = vadd.f32 %v2648, %v2693
        %v2729 = vadd.f32 %v2649, %v2693
        %v2730 = vadd.f32 %v2650, %v2698
        %v2731 = vadd.f32 %v2651, %v2698
        %v2732 = vadd.f32 %v2652, %v2698
        %v2733 = vadd.f32 %v2653, %v2698
        %v2734 = vadd.f32 %v2654, %v2703
        %v2735 = vadd.f32 %v2655, %v2703
        %v2736 = vadd.f32 %v2656, %v2703
        %v2737 = vadd.f32 %v2657, %v2703
        %v2738 = vadd.f32 %v2658, %v2708
        %v2739 = vadd.f32 %v2659, %v2708
        %v2740 = vadd.f32 %v2660, %v2708
        %v2741 = vadd.f32 %v2661, %v2708
        %v2742 = vmax.f32 %v2710, 0.0
        %v2743 = vmax.f32 %v2711, 0.0
        %v2744 = vmax.f32 %v2712, 0.0
        %v2745 = vmax.f32 %v2713, 0.0
        %v2746 = vmax.f32 %v2714, 0.0
        %v2747 = vmax.f32 %v2715, 0.0
        %v2748 = vmax.f32 %v2716, 0.0
        %v2749 = vmax.f32 %v2717, 0.0
        %v2750 = vmax.f32 %v2718, 0.0
        %v2751 = vmax.f32 %v2719, 0.0
        %v2752 = vmax.f32 %v2720, 0.0
        %v2753 = vmax.f32 %v2721, 0.0
        %v2754 = vmax.f32 %v2722, 0.0
        %v2755 = vmax.f32 %v2723, 0.0
        %v2756 = vmax.f32 %v2724, 0.0
        %v2757 = vmax.f32 %v2725, 0.0
        %v2758 = vmax.f32 %v2726, 0.0
        %v2759 = vmax.f32 %v2727, 0.0
        %v2760 = vmax.f32 %v2728, 0.0
        %v2761 = vmax.f32 %v2729, 0.0
        %v2762 = vmax.f32 %v2730, 0.0
        %v2763 = vmax.f32 %v2731, 0.0
        %v2764 = vmax.f32 %v2732, 0.0
        %v2765 = vmax.f32 %v2733, 0.0
        %v2766 = vmax.f32 %v2734, 0.0
        %v2767 = vmax.f32 %v2735, 0.0
        %v2768 = vmax.f32 %v2736, 0.0
        %v2769 = vmax.f32 %v2737, 0.0
        %v2770 = vmax.f32 %v2738, 0.0
        %v2771 = vmax.f32 %v2739, 0.0
        %v2772 = vmax.f32 %v2740, 0.0
        %v2773 = vmax.f32 %v2741, 0.0
        %v2774 = vpack.c.bf16 %v2746, %v2742
        %v2775 = vpack.c.bf16 %v2747, %v2743
        %v2776 = vpack.c.bf16 %v2748, %v2744
        %v2777 = vpack.c.bf16 %v2749, %v2745
        %v2778 = vpack.c.bf16 %v2754, %v2750
        %v2779 = vpack.c.bf16 %v2755, %v2751
        %v2780 = vpack.c.bf16 %v2756, %v2752
        %v2781 = vpack.c.bf16 %v2757, %v2753
        %v2782 = vpack.c.bf16 %v2762, %v2758
        %v2783 = vpack.c.bf16 %v2763, %v2759
        %v2784 = vpack.c.bf16 %v2764, %v2760
        %v2785 = vpack.c.bf16 %v2765, %v2761
        %v2786 = vpack.c.bf16 %v2770, %v2766
        %v2787 = vpack.c.bf16 %v2771, %v2767
        %v2788 = vpack.c.bf16 %v2772, %v2768
        %v2789 = vpack.c.bf16 %v2773, %v2769
        %v2806 = vunpack.c.l.b16 %v2774
        %v2807 = vunpack.c.l.b16 %v2775
        %v2808 = vunpack.c.l.b16 %v2776
        %v2809 = vunpack.c.l.b16 %v2777
        %v2810 = vunpack.c.h.b16 %v2774
        %v2811 = vunpack.c.h.b16 %v2775
        %v2812 = vunpack.c.h.b16 %v2776
        %v2813 = vunpack.c.h.b16 %v2777
        %v2814 = vunpack.c.l.b16 %v2778
        %v2815 = vunpack.c.l.b16 %v2779
        %v2816 = vunpack.c.l.b16 %v2780
        %v2817 = vunpack.c.l.b16 %v2781
        %v2818 = vunpack.c.h.b16 %v2778
        %v2819 = vunpack.c.h.b16 %v2779
        %v2820 = vunpack.c.h.b16 %v2780
        %v2821 = vunpack.c.h.b16 %v2781
        %v2822 = vunpack.c.l.b16 %v2782
        %v2823 = vunpack.c.l.b16 %v2783
        %v2824 = vunpack.c.l.b16 %v2784
        %v2825 = vunpack.c.l.b16 %v2785
        %v2826 = vunpack.c.h.b16 %v2782
        %v2827 = vunpack.c.h.b16 %v2783
        %v2828 = vunpack.c.h.b16 %v2784
        %v2829 = vunpack.c.h.b16 %v2785
        %v2830 = vunpack.c.l.b16 %v2786
        %v2831 = vunpack.c.l.b16 %v2787
        %v2832 = vunpack.c.l.b16 %v2788
        %v2833 = vunpack.c.l.b16 %v2789
        %v2834 = vunpack.c.h.b16 %v2786
        %v2835 = vunpack.c.h.b16 %v2787
        %v2836 = vunpack.c.h.b16 %v2788
        %v2837 = vunpack.c.h.b16 %v2789
        %v2838 = vpack.c.b16 %v2807, %v2806
        %v2839 = vpack.c.b16 %v2809, %v2808
        %v2840 = vpack.c.b16 %v2811, %v2810
        %v2841 = vpack.c.b16 %v2813, %v2812
        %v2842 = vpack.c.b16 %v2815, %v2814
        %v2843 = vpack.c.b16 %v2817, %v2816
        %v2844 = vpack.c.b16 %v2819, %v2818
        %v2845 = vpack.c.b16 %v2821, %v2820
        %v2846 = vpack.c.b16 %v2823, %v2822
        %v2847 = vpack.c.b16 %v2825, %v2824
        %v2848 = vpack.c.b16 %v2827, %v2826
        %v2849 = vpack.c.b16 %v2829, %v2828
        %v2850 = vpack.c.b16 %v2831, %v2830
        %v2851 = vpack.c.b16 %v2833, %v2832
        %v2852 = vpack.c.b16 %v2835, %v2834
        %v2853 = vpack.c.b16 %v2837, %v2836
        %2870 = vst [vmem:[%s609] sm:$0xff] %v2838
        %2871 = vst [vmem:[%s609 + $0x8] sm:$0xff] %v2839
        %2872 = vst [vmem:[%s609 + $0x10] sm:$0xff] %v2840
        %2873 = vst [vmem:[%s609 + $0x18] sm:$0xff] %v2841
        %2874 = vst [vmem:[%s609 + $0x20] sm:$0xff] %v2842
        %2875 = vst [vmem:[%s609 + $0x28] sm:$0xff] %v2843
        %2876 = vst [vmem:[%s609 + $0x30] sm:$0xff] %v2844
        %2877 = vst [vmem:[%s609 + $0x38] sm:$0xff] %v2845
        %2878 = vst [vmem:[%s609 + $0x40] sm:$0xff] %v2846
        %2879 = vst [vmem:[%s609 + $0x48] sm:$0xff] %v2847
        %2880 = vst [vmem:[%s609 + $0x50] sm:$0xff] %v2848
        %2881 = vst [vmem:[%s609 + $0x58] sm:$0xff] %v2849
        %2882 = vst [vmem:[%s609 + $0x60] sm:$0xff] %v2850
        %2883 = vst [vmem:[%s609 + $0x68] sm:$0xff] %v2851
        %2884 = vst [vmem:[%s609 + $0x70] sm:$0xff] %v2852
        %2885 = vst [vmem:[%s609 + $0x78] sm:$0xff] %v2853
        %s2886 = sand.u32 %s112, 1
        %s2887 = sand.u32 %s112, 1
        %s2888 = smul.addr %s2887, 128
        %s2889 = scalar_lea.vmem [#allocation3], %s2888
        // Predicated region
        $region60: #{cnn_student_forward.7} parent=54 // pred_check
          %p2890 = pneg %p122
        $region61: #{cnn_student_forward.7} parent=54 // pred_check_branch
          %2892 = sbr.rel (%p2890) target = $region63
        $region62: #{cnn_student_forward.7} parent=54 // pred_region
          %s2893 = smul.u32 4, %s15
          %s2894 = smul.addr %s2893, 4
          %s2895 = scalar_lea.vmem %s4, %s2894
          // Predicated region
          $region64: #{cnn_student_forward.7} parent=62 // pred_check
            _
          $region65: #{cnn_student_forward.7} parent=62 // pred_check_branch
            %2897 = sbr.rel (0) target = $region67
          $region66: #{cnn_student_forward.7} parent=62 // pred_region
            // Predicated region
            $region68: #{cnn_student_forward.7} parent=66 // pred_check
              _
            $region69: #{cnn_student_forward.7} parent=66 // pred_check_branch
              %2899 = sbr.rel (0) target = $region71
            $region70: #{cnn_student_forward.7} parent=66 // pred_region
              loop: start=0, step=1, limit=1
              $region72: #{cnn_student_forward.7} parent=70 // loop_pre_header
                _
              $region73: #{cnn_student_forward.7} parent=70 // loop_header
                %s2901 = sphi 0, %s2905
                %p2902 = scmp.ge.s32.totalorder %s2901, 1
                %s2906 = sphi %s2889, %s2889
                %s2907 = sphi %s2895, %s2895
              $region74: #{cnn_student_forward.7} parent=70 // loop_header_branch
                %2904 = sbr.rel (%p2902) target = $region78
              $region75: #{cnn_student_forward.7} parent=70 // loop_body
                %v2908 = vld [vmem:[%s2906] sm:$0xff]
                %2909 = vst [vmem:[%s2907] sm:$0xff] %v2908
                %v2910 = vld [vmem:[%s2906 + $0x8] sm:$0xff]
                %2911 = vst [vmem:[%s2907 + $0x8] sm:$0xff] %v2910
                %v2912 = vld [vmem:[%s2906 + $0x10] sm:$0xff]
                %2913 = vst [vmem:[%s2907 + $0x30] sm:$0xff] %v2912
                %v2914 = vld [vmem:[%s2906 + $0x18] sm:$0xff]
                %2915 = vst [vmem:[%s2907 + $0x38] sm:$0xff] %v2914
                %v2916 = vld [vmem:[%s2906 + $0x20] sm:$0xff]
                %2917 = vst [vmem:[%s2907 + $0x60] sm:$0xff] %v2916
                %v2918 = vld [vmem:[%s2906 + $0x28] sm:$0xff]
                %2919 = vst [vmem:[%s2907 + $0x68] sm:$0xff] %v2918
                %v2920 = vld [vmem:[%s2906 + $0x30] sm:$0xff]
                %2921 = vst [vmem:[%s2907 + $0x90] sm:$0xff] %v2920
                %v2922 = vld [vmem:[%s2906 + $0x38] sm:$0xff]
                %2923 = vst [vmem:[%s2907 + $0x98] sm:$0xff] %v2922
                %v2924 = vld [vmem:[%s2906 + $0x40] sm:$0xff]
                %2925 = vst [vmem:[%s2907 + $0xc0] sm:$0xff] %v2924
                %v2926 = vld [vmem:[%s2906 + $0x48] sm:$0xff]
                %2927 = vst [vmem:[%s2907 + $0xc8] sm:$0xff] %v2926
                %v2928 = vld [vmem:[%s2906 + $0x50] sm:$0xff]
                %2929 = vst [vmem:[%s2907 + $0xf0] sm:$0xff] %v2928
                %v2930 = vld [vmem:[%s2906 + $0x58] sm:$0xff]
                %2931 = vst [vmem:[%s2907 + $0xf8] sm:$0xff] %v2930
                %v2932 = vld [vmem:[%s2906 + $0x60] sm:$0xff]
                %2933 = vst [vmem:[%s2907 + $0x120] sm:$0xff] %v2932
                %v2934 = vld [vmem:[%s2906 + $0x68] sm:$0xff]
                %2935 = vst [vmem:[%s2907 + $0x128] sm:$0xff] %v2934
                %v2936 = vld [vmem:[%s2906 + $0x70] sm:$0xff]
                %2937 = vst [vmem:[%s2907 + $0x150] sm:$0xff] %v2936
                %v2938 = vld [vmem:[%s2906 + $0x78] sm:$0xff]
                %2939 = vst [vmem:[%s2907 + $0x158] sm:$0xff] %v2938
              $region76: #{cnn_student_forward.7} parent=70 // loop_footer
                %s2905 = sadd.s32 1, %s2901
              $region77: #{cnn_student_forward.7} parent=70 // loop_footer_branch
                %2900 = sbr.rel target = $region73
              $region78: #{cnn_student_forward.7} parent=70 // loop_exit
                _
            $region71: #{cnn_student_forward.7} parent=66 // pred_fallthru
              _
            // Predicated region
            $region79: #{cnn_student_forward.7} parent=66 // pred_check
              _
            $region80: #{cnn_student_forward.7} parent=66 // pred_check_branch
              %2941 = sbr.rel target = $region82
            $region81: #{cnn_student_forward.7} parent=66 // pred_region
              _
            $region82: #{cnn_student_forward.7} parent=66 // pred_fallthru
              _
          $region67: #{cnn_student_forward.7} parent=62 // pred_fallthru
            _
          %2942 = vnop
        $region63: #{cnn_student_forward.7} parent=54 // pred_fallthru
          _
      $region55: #{cnn_student_forward.7} parent=5 // pred_fallthru
        _
      %p2943 = scmp.le.s32.totalorder 2, %s10
      // Predicated region
      $region83: #{cnn_student_forward.7} parent=5 // pred_check
        %p2944 = pneg %p2943
      $region84: #{cnn_student_forward.7} parent=5 // pred_check_branch
        %2946 = sbr.rel (%p2944) target = $region86
      $region85: #{cnn_student_forward.7} parent=5 // pred_region
        %s2947 = ssub.s32 %s10, 2
        // Predicated region
        $region87: #{cnn_student_forward.7} parent=85 // pred_check
          %p2948 = pneg %p128
        $region88: #{cnn_student_forward.7} parent=85 // pred_check_branch
          %2950 = sbr.rel (%p2948) target = $region90
        $region89: #{cnn_student_forward.7} parent=85 // pred_region
          %s2951 = sand.u32 %s113, 1
          %s2952 = sand.u32 %s113, 1
          %s2953 = smul.addr %s2952, 128
          %s2954 = scalar_lea.vmem [#allocation3], %s2953
        $region90: #{cnn_student_forward.7} parent=85 // pred_fallthru
          _
      $region86: #{cnn_student_forward.7} parent=5 // pred_fallthru
        _
    $region6: #{cnn_student_forward.7} parent=1 // loop_footer
      %s14 = sadd.s32 1, %s10
    $region7: #{cnn_student_forward.7} parent=1 // loop_footer_branch
      %9 = sbr.rel target = $region3
    $region8: #{cnn_student_forward.7} parent=1 // loop_exit
      _

// kernel: cnn_student_forward.8
$region0: #{cnn_student_forward.8}
  #allocation0 [shape = 'u32[]', space=smem, size = 0x4, offset = 0x4, fixed_abs, tag = 'smem constant byte address 0x4 - core index']
  #allocation1 [shape = 'u32[144,128]{1,0:T(1,128)}', space=vmem, size = 0x12000, scoped, tag = 'internal scratch']
  %s0 = inlined_call_operand.vmem [shape: bf16[9,64,128], index: 0, kind: input, shape index: {}]
  %s1 = inlined_call_operand.vmem [shape: bf16[64,128], index: 1, kind: output, shape index: {}]
  %s2 = sld [smem:[#allocation0]]
  $region14: #{cnn_student_forward.8} parent=0
    _
  %s4 = ssub.s32 1, %s2
  %s5 = scalar_select 0, %s4, %s2
  // Predicated region
  $region2: #{cnn_student_forward.8} parent=0 // pred_check
    _
  $region3: #{cnn_student_forward.8} parent=0 // pred_check_branch
    %7 = sbr.rel (0) target = $region5
  $region4: #{cnn_student_forward.8} parent=0 // pred_region
    _
  $region5: #{cnn_student_forward.8} parent=0 // pred_fallthru
    _
  %v9 = vld [vmem:[%s0] sm:$0xf]
  %v10 = vld [vmem:[%s0 + $0x4] sm:$0xf]
  %v11 = vld [vmem:[%s0 + $0x8] sm:$0xf]
  %v12 = vld [vmem:[%s0 + $0xc] sm:$0xf]
  %v13 = vld [vmem:[%s0 + $0x10] sm:$0xf]
  %v14 = vld [vmem:[%s0 + $0x14] sm:$0xf]
  %v15 = vld [vmem:[%s0 + $0x18] sm:$0xf]
  %v16 = vld [vmem:[%s0 + $0x1c] sm:$0xf]
  %v17 = vld [vmem:[%s0 + $0x20] sm:$0xf]
  %v18 = vld [vmem:[%s0 + $0x24] sm:$0xf]
  %v19 = vld [vmem:[%s0 + $0x28] sm:$0xf]
  %v20 = vld [vmem:[%s0 + $0x2c] sm:$0xf]
  %v21 = vld [vmem:[%s0 + $0x30] sm:$0xf]
  %v22 = vld [vmem:[%s0 + $0x34] sm:$0xf]
  %v23 = vld [vmem:[%s0 + $0x38] sm:$0xf]
  %v24 = vld [vmem:[%s0 + $0x3c] sm:$0xf]
  %v25 = vld [vmem:[%s0 + $0x40] sm:$0xf]
  %v26 = vld [vmem:[%s0 + $0x44] sm:$0xf]
  %v27 = vld [vmem:[%s0 + $0x48] sm:$0xf]
  %v28 = vld [vmem:[%s0 + $0x4c] sm:$0xf]
  %v29 = vld [vmem:[%s0 + $0x50] sm:$0xf]
  %v30 = vld [vmem:[%s0 + $0x54] sm:$0xf]
  %v31 = vld [vmem:[%s0 + $0x58] sm:$0xf]
  %v32 = vld [vmem:[%s0 + $0x5c] sm:$0xf]
  %v33 = vld [vmem:[%s0 + $0x60] sm:$0xf]
  %v34 = vld [vmem:[%s0 + $0x64] sm:$0xf]
  %v35 = vld [vmem:[%s0 + $0x68] sm:$0xf]
  %v36 = vld [vmem:[%s0 + $0x6c] sm:$0xf]
  %v37 = vld [vmem:[%s0 + $0x70] sm:$0xf]
  %v38 = vld [vmem:[%s0 + $0x74] sm:$0xf]
  %v39 = vld [vmem:[%s0 + $0x78] sm:$0xf]
  %v40 = vld [vmem:[%s0 + $0x7c] sm:$0xf]
  %v41 = vld [vmem:[%s0 + $0x80] sm:$0xf]
  %v42 = vld [vmem:[%s0 + $0x84] sm:$0xf]
  %v43 = vld [vmem:[%s0 + $0x88] sm:$0xf]
  %v44 = vld [vmem:[%s0 + $0x8c] sm:$0xf]
  %v45 = vld [vmem:[%s0 + $0x90] sm:$0xf]
  %v46 = vld [vmem:[%s0 + $0x94] sm:$0xf]
  %v47 = vld [vmem:[%s0 + $0x98] sm:$0xf]
  %v48 = vld [vmem:[%s0 + $0x9c] sm:$0xf]
  %v49 = vld [vmem:[%s0 + $0xa0] sm:$0xf]
  %v50 = vld [vmem:[%s0 + $0xa4] sm:$0xf]
  %v51 = vld [vmem:[%s0 + $0xa8] sm:$0xf]
  %v52 = vld [vmem:[%s0 + $0xac] sm:$0xf]
  %v53 = vld [vmem:[%s0 + $0xb0] sm:$0xf]
  %v54 = vld [vmem:[%s0 + $0xb4] sm:$0xf]
  %v55 = vld [vmem:[%s0 + $0xb8] sm:$0xf]
  %v56 = vld [vmem:[%s0 + $0xbc] sm:$0xf]
  %v57 = vld [vmem:[%s0 + $0xc0] sm:$0xf]
  %v58 = vld [vmem:[%s0 + $0xc4] sm:$0xf]
  %v59 = vld [vmem:[%s0 + $0xc8] sm:$0xf]
  %v60 = vld [vmem:[%s0 + $0xcc] sm:$0xf]
  %v61 = vld [vmem:[%s0 + $0xd0] sm:$0xf]
  %v62 = vld [vmem:[%s0 + $0xd4] sm:$0xf]
  %v63 = vld [vmem:[%s0 + $0xd8] sm:$0xf]
  %v64 = vld [vmem:[%s0 + $0xdc] sm:$0xf]
  %v65 = vld [vmem:[%s0 + $0xe0] sm:$0xf]
  %v66 = vld [vmem:[%s0 + $0xe4] sm:$0xf]
  %v67 = vld [vmem:[%s0 + $0xe8] sm:$0xf]
  %v68 = vld [vmem:[%s0 + $0xec] sm:$0xf]
  %v69 = vld [vmem:[%s0 + $0xf0] sm:$0xf]
  %v70 = vld [vmem:[%s0 + $0xf4] sm:$0xf]
  %v71 = vld [vmem:[%s0 + $0xf8] sm:$0xf]
  %v72 = vld [vmem:[%s0 + $0xfc] sm:$0xf]
  %v73 = vld [vmem:[%s0 + $0x100] sm:$0xf]
  %v74 = vld [vmem:[%s0 + $0x104] sm:$0xf]
  %v75 = vld [vmem:[%s0 + $0x108] sm:$0xf]
  %v76 = vld [vmem:[%s0 + $0x10c] sm:$0xf]
  %v77 = vld [vmem:[%s0 + $0x110] sm:$0xf]
  %v78 = vld [vmem:[%s0 + $0x114] sm:$0xf]
  %v79 = vld [vmem:[%s0 + $0x118] sm:$0xf]
  %v80 = vld [vmem:[%s0 + $0x11c] sm:$0xf]
  %vm81 = vcmask 1043456
  %v84 = vsel %vm81, %v9, 4286644096
  %v87 = vsel %vm81, %v17, 4286644096
  %v89 = vmax.bf16 %v84, %v87
  %v91 = vsel %vm81, %v25, 4286644096
  %v93 = vmax.bf16 %v89, %v91
  %v95 = vsel %vm81, %v33, 4286644096
  %v97 = vmax.bf16 %v93, %v95
  %v99 = vsel %vm81, %v41, 4286644096
  %v101 = vmax.bf16 %v97, %v99
  %v103 = vsel %vm81, %v49, 4286644096
  %v105 = vmax.bf16 %v101, %v103
  %v107 = vsel %vm81, %v57, 4286644096
  %v109 = vmax.bf16 %v105, %v107
  %v111 = vsel %vm81, %v65, 4286644096
  %v113 = vmax.bf16 %v109, %v111
  %v115 = vsel %vm81, %v73, 4286644096
  %v117 = vmax.bf16 %v113, %v115
  %v119 = vsel %vm81, %v10, 4286644096
  %v122 = vsel %vm81, %v18, 4286644096
  %v124 = vmax.bf16 %v119, %v122
  %v126 = vsel %vm81, %v26, 4286644096
  %v128 = vmax.bf16 %v124, %v126
  %v130 = vsel %vm81, %v34, 4286644096
  %v132 = vmax.bf16 %v128, %v130
  %v134 = vsel %vm81, %v42, 4286644096
  %v136 = vmax.bf16 %v132, %v134
  %v138 = vsel %vm81, %v50, 4286644096
  %v140 = vmax.bf16 %v136, %v138
  %v142 = vsel %vm81, %v58, 4286644096
  %v144 = vmax.bf16 %v140, %v142
  %v146 = vsel %vm81, %v66, 4286644096
  %v148 = vmax.bf16 %v144, %v146
  %v150 = vsel %vm81, %v74, 4286644096
  %v152 = vmax.bf16 %v148, %v150
  %v154 = vsel %vm81, %v11, 4286644096
  %v157 = vsel %vm81, %v19, 4286644096
  %v159 = vmax.bf16 %v154, %v157
  %v161 = vsel %vm81, %v27, 4286644096
  %v163 = vmax.bf16 %v159, %v161
  %v165 = vsel %vm81, %v35, 4286644096
  %v167 = vmax.bf16 %v163, %v165
  %v169 = vsel %vm81, %v43, 4286644096
  %v171 = vmax.bf16 %v167, %v169
  %v173 = vsel %vm81, %v51, 4286644096
  %v175 = vmax.bf16 %v171, %v173
  %v177 = vsel %vm81, %v59, 4286644096
  %v179 = vmax.bf16 %v175, %v177
  %v181 = vsel %vm81, %v67, 4286644096
  %v183 = vmax.bf16 %v179, %v181
  %v185 = vsel %vm81, %v75, 4286644096
  %v187 = vmax.bf16 %v183, %v185
  %v189 = vsel %vm81, %v12, 4286644096
  %v192 = vsel %vm81, %v20, 4286644096
  %v194 = vmax.bf16 %v189, %v192
  %v196 = vsel %vm81, %v28, 4286644096
  %v198 = vmax.bf16 %v194, %v196
  %v200 = vsel %vm81, %v36, 4286644096
  %v202 = vmax.bf16 %v198, %v200
  %v204 = vsel %vm81, %v44, 4286644096
  %v206 = vmax.bf16 %v202, %v204
  %v208 = vsel %vm81, %v52, 4286644096
  %v210 = vmax.bf16 %v206, %v208
  %v212 = vsel %vm81, %v60, 4286644096
  %v214 = vmax.bf16 %v210, %v212
  %v216 = vsel %vm81, %v68, 4286644096
  %v218 = vmax.bf16 %v214, %v216
  %v220 = vsel %vm81, %v76, 4286644096
  %v222 = vmax.bf16 %v218, %v220
  %v224 = vsel %vm81, %v13, 4286644096
  %v227 = vsel %vm81, %v21, 4286644096
  %v229 = vmax.bf16 %v224, %v227
  %v231 = vsel %vm81, %v29, 4286644096
  %v233 = vmax.bf16 %v229, %v231
  %v235 = vsel %vm81, %v37, 4286644096
  %v237 = vmax.bf16 %v233, %v235
  %v239 = vsel %vm81, %v45, 4286644096
  %v241 = vmax.bf16 %v237, %v239
  %v243 = vsel %vm81, %v53, 4286644096
  %v245 = vmax.bf16 %v241, %v243
  %v247 = vsel %vm81, %v61, 4286644096
  %v249 = vmax.bf16 %v245, %v247
  %v251 = vsel %vm81, %v69, 4286644096
  %v253 = vmax.bf16 %v249, %v251
  %v255 = vsel %vm81, %v77, 4286644096
  %v257 = vmax.bf16 %v253, %v255
  %v259 = vsel %vm81, %v14, 4286644096
  %v262 = vsel %vm81, %v22, 4286644096
  %v264 = vmax.bf16 %v259, %v262
  %v266 = vsel %vm81, %v30, 4286644096
  %v268 = vmax.bf16 %v264, %v266
  %v270 = vsel %vm81, %v38, 4286644096
  %v272 = vmax.bf16 %v268, %v270
  %v274 = vsel %vm81, %v46, 4286644096
  %v276 = vmax.bf16 %v272, %v274
  %v278 = vsel %vm81, %v54, 4286644096
  %v280 = vmax.bf16 %v276, %v278
  %v282 = vsel %vm81, %v62, 4286644096
  %v284 = vmax.bf16 %v280, %v282
  %v286 = vsel %vm81, %v70, 4286644096
  %v288 = vmax.bf16 %v284, %v286
  %v290 = vsel %vm81, %v78, 4286644096
  %v292 = vmax.bf16 %v288, %v290
  %v294 = vsel %vm81, %v15, 4286644096
  %v297 = vsel %vm81, %v23, 4286644096
  %v299 = vmax.bf16 %v294, %v297
  %v301 = vsel %vm81, %v31, 4286644096
  %v303 = vmax.bf16 %v299, %v301
  %v305 = vsel %vm81, %v39, 4286644096
  %v307 = vmax.bf16 %v303, %v305
  %v309 = vsel %vm81, %v47, 4286644096
  %v311 = vmax.bf16 %v307, %v309
  %v313 = vsel %vm81, %v55, 4286644096
  %v315 = vmax.bf16 %v311, %v313
  %v317 = vsel %vm81, %v63, 4286644096
  %v319 = vmax.bf16 %v315, %v317
  %v321 = vsel %vm81, %v71, 4286644096
  %v323 = vmax.bf16 %v319, %v321
  %v325 = vsel %vm81, %v79, 4286644096
  %v327 = vmax.bf16 %v323, %v325
  %v329 = vsel %vm81, %v16, 4286644096
  %v332 = vsel %vm81, %v24, 4286644096
  %v334 = vmax.bf16 %v329, %v332
  %v336 = vsel %vm81, %v32, 4286644096
  %v338 = vmax.bf16 %v334, %v336
  %v340 = vsel %vm81, %v40, 4286644096
  %v342 = vmax.bf16 %v338, %v340
  %v344 = vsel %vm81, %v48, 4286644096
  %v346 = vmax.bf16 %v342, %v344
  %v348 = vsel %vm81, %v56, 4286644096
  %v350 = vmax.bf16 %v346, %v348
  %v352 = vsel %vm81, %v64, 4286644096
  %v354 = vmax.bf16 %v350, %v352
  %v356 = vsel %vm81, %v72, 4286644096
  %v358 = vmax.bf16 %v354, %v356
  %v360 = vsel %vm81, %v80, 4286644096
  %v362 = vmax.bf16 %v358, %v360
  %363 = vst [vmem:[%s1] sm:$0xf] %v117
  %364 = vst [vmem:[%s1 + $0x4] sm:$0xf] %v152
  %365 = vst [vmem:[%s1 + $0x8] sm:$0xf] %v187
  %366 = vst [vmem:[%s1 + $0xc] sm:$0xf] %v222
  %367 = vst [vmem:[%s1 + $0x10] sm:$0xf] %v257
  %368 = vst [vmem:[%s1 + $0x14] sm:$0xf] %v292
  %369 = vst [vmem:[%s1 + $0x18] sm:$0xf] %v327
  %370 = vst [vmem:[%s1 + $0x1c] sm:$0xf] %v362
  // Predicated region
  $region6: #{cnn_student_forward.8} parent=0 // pred_check
    _
  $region7: #{cnn_student_forward.8} parent=0 // pred_check_branch
    %372 = sbr.rel (0) target = $region9
  $region8: #{cnn_student_forward.8} parent=0 // pred_region
    _
  $region9: #{cnn_student_forward.8} parent=0 // pred_fallthru
    _
  // Predicated region
  $region10: #{cnn_student_forward.8} parent=0 // pred_check
    _
  $region11: #{cnn_student_forward.8} parent=0 // pred_check_branch
    %374 = sbr.rel (0) target = $region13
  $region12: #{cnn_student_forward.8} parent=0 // pred_region
    _
  $region13: #{cnn_student_forward.8} parent=0 // pred_fallthru
    _

// kernel: cnn_student_forward.9
$region0: #{cnn_student_forward.9}
  #allocation0 [shape = 'u32[]', space=smem, size = 0x4, offset = 0x4, fixed_abs, tag = 'smem constant byte address 0x4 - core index']
  #allocation1 [shape = 'u32[144,128]{1,0:T(1,128)}', space=vmem, size = 0x12000, scoped, tag = 'internal scratch']
  %s0 = inlined_call_operand.vmem [shape: bf16[128,576], index: 0, kind: input, shape index: {}]
  %s1 = inlined_call_operand.vmem [shape: bf16[576,128], index: 1, kind: input, shape index: {}]
  %s2 = inlined_call_operand.vmem [shape: f32[128,1], index: 2, kind: input, shape index: {}]
  %s3 = inlined_call_operand.vmem [shape: f32[128,1], index: 3, kind: input, shape index: {}]
  %s4 = inlined_call_operand.vmem [shape: bf16[128,128], index: 4, kind: output, shape index: {}]
  %s5 = sld [smem:[#allocation0]]
  $region26: #{cnn_student_forward.9} parent=0
    _
  %s7 = ssub.s32 1, %s5
  %s8 = scalar_select 0, %s7, %s5
  // Predicated region
  $region2: #{cnn_student_forward.9} parent=0 // pred_check
    _
  $region3: #{cnn_student_forward.9} parent=0 // pred_check_branch
    %10 = sbr.rel (0) target = $region5
  $region4: #{cnn_student_forward.9} parent=0 // pred_region
    _
  $region5: #{cnn_student_forward.9} parent=0 // pred_fallthru
    _
  // Predicated region
  $region6: #{cnn_student_forward.9} parent=0 // pred_check
    _
  $region7: #{cnn_student_forward.9} parent=0 // pred_check_branch
    %12 = sbr.rel (0) target = $region9
  $region8: #{cnn_student_forward.9} parent=0 // pred_region
    _
  $region9: #{cnn_student_forward.9} parent=0 // pred_fallthru
    _
  // Predicated region
  $region10: #{cnn_student_forward.9} parent=0 // pred_check
    _
  $region11: #{cnn_student_forward.9} parent=0 // pred_check_branch
    %14 = sbr.rel (0) target = $region13
  $region12: #{cnn_student_forward.9} parent=0 // pred_region
    _
  $region13: #{cnn_student_forward.9} parent=0 // pred_fallthru
    _
  // Predicated region
  $region14: #{cnn_student_forward.9} parent=0 // pred_check
    _
  $region15: #{cnn_student_forward.9} parent=0 // pred_check_branch
    %16 = sbr.rel (0) target = $region17
  $region16: #{cnn_student_forward.9} parent=0 // pred_region
    _
  $region17: #{cnn_student_forward.9} parent=0 // pred_fallthru
    _
  %v18 = vld [vmem:[%s0] sm:$0xff]
  %v19 = vld [vmem:[%s0 + $0x8] sm:$0xff]
  %v20 = vld [vmem:[%s0 + $0x10] sm:$0xf]
  %v21 = vld [vmem:[%s0 + $0x14] sm:$0xff]
  %v22 = vld [vmem:[%s0 + $0x1c] sm:$0xff]
  %v23 = vld [vmem:[%s0 + $0x24] sm:$0xf]
  %v24 = vld [vmem:[%s0 + $0x28] sm:$0xff]
  %v25 = vld [vmem:[%s0 + $0x30] sm:$0xff]
  %v26 = vld [vmem:[%s0 + $0x38] sm:$0xf]
  %v27 = vld [vmem:[%s0 + $0x3c] sm:$0xff]
  %v28 = vld [vmem:[%s0 + $0x44] sm:$0xff]
  %v29 = vld [vmem:[%s0 + $0x4c] sm:$0xf]
  %v30 = vld [vmem:[%s0 + $0x50] sm:$0xff]
  %v31 = vld [vmem:[%s0 + $0x58] sm:$0xff]
  %v32 = vld [vmem:[%s0 + $0x60] sm:$0xf]
  %v33 = vld [vmem:[%s0 + $0x64] sm:$0xff]
  %v34 = vld [vmem:[%s0 + $0x6c] sm:$0xff]
  %v35 = vld [vmem:[%s0 + $0x74] sm:$0xf]
  %v36 = vld [vmem:[%s0 + $0x78] sm:$0xff]
  %v37 = vld [vmem:[%s0 + $0x80] sm:$0xff]
  %v38 = vld [vmem:[%s0 + $0x88] sm:$0xf]
  %v39 = vld [vmem:[%s0 + $0x8c] sm:$0xff]
  %v40 = vld [vmem:[%s0 + $0x94] sm:$0xff]
  %v41 = vld [vmem:[%s0 + $0x9c] sm:$0xf]
  %v42 = vld [vmem:[%s0 + $0xa0] sm:$0xff]
  %v43 = vld [vmem:[%s0 + $0xa8] sm:$0xff]
  %v44 = vld [vmem:[%s0 + $0xb0] sm:$0xf]
  %v45 = vld [vmem:[%s0 + $0xb4] sm:$0xff]
  %v46 = vld [vmem:[%s0 + $0xbc] sm:$0xff]
  %v47 = vld [vmem:[%s0 + $0xc4] sm:$0xf]
  %v48 = vld [vmem:[%s0 + $0xc8] sm:$0xff]
  %v49 = vld [vmem:[%s0 + $0xd0] sm:$0xff]
  %v50 = vld [vmem:[%s0 + $0xd8] sm:$0xf]
  %v51 = vld [vmem:[%s0 + $0xdc] sm:$0xff]
  %v52 = vld [vmem:[%s0 + $0xe4] sm:$0xff]
  %v53 = vld [vmem:[%s0 + $0xec] sm:$0xf]
  %v54 = vld [vmem:[%s0 + $0xf0] sm:$0xff]
  %v55 = vld [vmem:[%s0 + $0xf8] sm:$0xff]
  %v56 = vld [vmem:[%s0 + $0x100] sm:$0xf]
  %v57 = vld [vmem:[%s0 + $0x104] sm:$0xff]
  %v58 = vld [vmem:[%s0 + $0x10c] sm:$0xff]
  %v59 = vld [vmem:[%s0 + $0x114] sm:$0xf]
  %v60 = vld [vmem:[%s0 + $0x118] sm:$0xff]
  %v61 = vld [vmem:[%s0 + $0x120] sm:$0xff]
  %v62 = vld [vmem:[%s0 + $0x128] sm:$0xf]
  %v63 = vld [vmem:[%s0 + $0x12c] sm:$0xff]
  %v64 = vld [vmem:[%s0 + $0x134] sm:$0xff]
  %v65 = vld [vmem:[%s0 + $0x13c] sm:$0xf]
  %v66 = vld [vmem:[%s1] sm:$0xf]
  %v67 = vld [vmem:[%s1 + $0x4] sm:$0xf]
  %v68 = vld [vmem:[%s1 + $0x8] sm:$0xf]
  %v69 = vld [vmem:[%s1 + $0xc] sm:$0xf]
  %v70 = vld [vmem:[%s1 + $0x10] sm:$0xf]
  %v71 = vld [vmem:[%s1 + $0x14] sm:$0xf]
  %v72 = vld [vmem:[%s1 + $0x18] sm:$0xf]
  %v73 = vld [vmem:[%s1 + $0x1c] sm:$0xf]
  %v74 = vld [vmem:[%s1 + $0x20] sm:$0xf]
  %v75 = vld [vmem:[%s1 + $0x24] sm:$0xf]
  %v76 = vld [vmem:[%s1 + $0x28] sm:$0xf]
  %v77 = vld [vmem:[%s1 + $0x2c] sm:$0xf]
  %v78 = vld [vmem:[%s1 + $0x30] sm:$0xf]
  %v79 = vld [vmem:[%s1 + $0x34] sm:$0xf]
  %v80 = vld [vmem:[%s1 + $0x38] sm:$0xf]
  %v81 = vld [vmem:[%s1 + $0x3c] sm:$0xf]
  %v82 = vld [vmem:[%s1 + $0x40] sm:$0xf]
  %v83 = vld [vmem:[%s1 + $0x44] sm:$0xf]
  %v84 = vld [vmem:[%s1 + $0x48] sm:$0xf]
  %v85 = vld [vmem:[%s1 + $0x4c] sm:$0xf]
  %v86 = vld [vmem:[%s1 + $0x50] sm:$0xf]
  %v87 = vld [vmem:[%s1 + $0x54] sm:$0xf]
  %v88 = vld [vmem:[%s1 + $0x58] sm:$0xf]
  %v89 = vld [vmem:[%s1 + $0x5c] sm:$0xf]
  %v90 = vld [vmem:[%s1 + $0x60] sm:$0xf]
  %v91 = vld [vmem:[%s1 + $0x64] sm:$0xf]
  %v92 = vld [vmem:[%s1 + $0x68] sm:$0xf]
  %v93 = vld [vmem:[%s1 + $0x6c] sm:$0xf]
  %v94 = vld [vmem:[%s1 + $0x70] sm:$0xf]
  %v95 = vld [vmem:[%s1 + $0x74] sm:$0xf]
  %v96 = vld [vmem:[%s1 + $0x78] sm:$0xf]
  %v97 = vld [vmem:[%s1 + $0x7c] sm:$0xf]
  %v98 = vld [vmem:[%s1 + $0x80] sm:$0xf]
  %v99 = vld [vmem:[%s1 + $0x84] sm:$0xf]
  %v100 = vld [vmem:[%s1 + $0x88] sm:$0xf]
  %v101 = vld [vmem:[%s1 + $0x8c] sm:$0xf]
  %v102 = vld [vmem:[%s1 + $0x90] sm:$0xf]
  %v103 = vld [vmem:[%s1 + $0x94] sm:$0xf]
  %v104 = vld [vmem:[%s1 + $0x98] sm:$0xf]
  %v105 = vld [vmem:[%s1 + $0x9c] sm:$0xf]
  %v106 = vld [vmem:[%s1 + $0xa0] sm:$0xf]
  %v107 = vld [vmem:[%s1 + $0xa4] sm:$0xf]
  %v108 = vld [vmem:[%s1 + $0xa8] sm:$0xf]
  %v109 = vld [vmem:[%s1 + $0xac] sm:$0xf]
  %v110 = vld [vmem:[%s1 + $0xb0] sm:$0xf]
  %v111 = vld [vmem:[%s1 + $0xb4] sm:$0xf]
  %v112 = vld [vmem:[%s1 + $0xb8] sm:$0xf]
  %v113 = vld [vmem:[%s1 + $0xbc] sm:$0xf]
  %v114 = vld [vmem:[%s1 + $0xc0] sm:$0xf]
  %v115 = vld [vmem:[%s1 + $0xc4] sm:$0xf]
  %v116 = vld [vmem:[%s1 + $0xc8] sm:$0xf]
  %v117 = vld [vmem:[%s1 + $0xcc] sm:$0xf]
  %v118 = vld [vmem:[%s1 + $0xd0] sm:$0xf]
  %v119 = vld [vmem:[%s1 + $0xd4] sm:$0xf]
  %v120 = vld [vmem:[%s1 + $0xd8] sm:$0xf]
  %v121 = vld [vmem:[%s1 + $0xdc] sm:$0xf]
  %v122 = vld [vmem:[%s1 + $0xe0] sm:$0xf]
  %v123 = vld [vmem:[%s1 + $0xe4] sm:$0xf]
  %v124 = vld [vmem:[%s1 + $0xe8] sm:$0xf]
  %v125 = vld [vmem:[%s1 + $0xec] sm:$0xf]
  %v126 = vld [vmem:[%s1 + $0xf0] sm:$0xf]
  %v127 = vld [vmem:[%s1 + $0xf4] sm:$0xf]
  %v128 = vld [vmem:[%s1 + $0xf8] sm:$0xf]
  %v129 = vld [vmem:[%s1 + $0xfc] sm:$0xf]
  %v130 = vld [vmem:[%s1 + $0x100] sm:$0xf]
  %v131 = vld [vmem:[%s1 + $0x104] sm:$0xf]
  %v132 = vld [vmem:[%s1 + $0x108] sm:$0xf]
  %v133 = vld [vmem:[%s1 + $0x10c] sm:$0xf]
  %v134 = vld [vmem:[%s1 + $0x110] sm:$0xf]
  %v135 = vld [vmem:[%s1 + $0x114] sm:$0xf]
  %v136 = vld [vmem:[%s1 + $0x118] sm:$0xf]
  %v137 = vld [vmem:[%s1 + $0x11c] sm:$0xf]
  %v186 = vunpack.c.l.b16 %v18
  %v187 = vunpack.c.h.b16 %v18
  %v188 = vunpack.c.l.b16 %v19
  %v189 = vunpack.c.h.b16 %v19
  %v190 = vunpack.c.l.b16 %v20
  %v191 = vunpack.c.l.b16 %v21
  %v192 = vunpack.c.h.b16 %v21
  %v193 = vunpack.c.l.b16 %v22
  %v194 = vunpack.c.h.b16 %v22
  %v195 = vunpack.c.l.b16 %v23
  %v196 = vunpack.c.l.b16 %v24
  %v197 = vunpack.c.h.b16 %v24
  %v198 = vunpack.c.l.b16 %v25
  %v199 = vunpack.c.h.b16 %v25
  %v200 = vunpack.c.l.b16 %v26
  %v201 = vunpack.c.l.b16 %v27
  %v202 = vunpack.c.h.b16 %v27
  %v203 = vunpack.c.l.b16 %v28
  %v204 = vunpack.c.h.b16 %v28
  %v205 = vunpack.c.l.b16 %v29
  %v206 = vunpack.c.l.b16 %v30
  %v207 = vunpack.c.h.b16 %v30
  %v208 = vunpack.c.l.b16 %v31
  %v209 = vunpack.c.h.b16 %v31
  %v210 = vunpack.c.l.b16 %v32
  %v211 = vunpack.c.l.b16 %v33
  %v212 = vunpack.c.h.b16 %v33
  %v213 = vunpack.c.l.b16 %v34
  %v214 = vunpack.c.h.b16 %v34
  %v215 = vunpack.c.l.b16 %v35
  %v216 = vunpack.c.l.b16 %v36
  %v217 = vunpack.c.h.b16 %v36
  %v218 = vunpack.c.l.b16 %v37
  %v219 = vunpack.c.h.b16 %v37
  %v220 = vunpack.c.l.b16 %v38
  %v221 = vunpack.c.l.b16 %v39
  %v222 = vunpack.c.h.b16 %v39
  %v223 = vunpack.c.l.b16 %v40
  %v224 = vunpack.c.h.b16 %v40
  %v225 = vunpack.c.l.b16 %v41
  %v226 = vunpack.c.l.b16 %v42
  %v227 = vunpack.c.h.b16 %v42
  %v228 = vunpack.c.l.b16 %v43
  %v229 = vunpack.c.h.b16 %v43
  %v230 = vunpack.c.l.b16 %v44
  %v231 = vunpack.c.l.b16 %v45
  %v232 = vunpack.c.h.b16 %v45
  %v233 = vunpack.c.l.b16 %v46
  %v234 = vunpack.c.h.b16 %v46
  %v235 = vunpack.c.l.b16 %v47
  %v236 = vunpack.c.l.b16 %v48
  %v237 = vunpack.c.h.b16 %v48
  %v238 = vunpack.c.l.b16 %v49
  %v239 = vunpack.c.h.b16 %v49
  %v240 = vunpack.c.l.b16 %v50
  %v241 = vunpack.c.l.b16 %v51
  %v242 = vunpack.c.h.b16 %v51
  %v243 = vunpack.c.l.b16 %v52
  %v244 = vunpack.c.h.b16 %v52
  %v245 = vunpack.c.l.b16 %v53
  %v246 = vunpack.c.l.b16 %v54
  %v247 = vunpack.c.h.b16 %v54
  %v248 = vunpack.c.l.b16 %v55
  %v249 = vunpack.c.h.b16 %v55
  %v250 = vunpack.c.l.b16 %v56
  %v251 = vunpack.c.l.b16 %v57
  %v252 = vunpack.c.h.b16 %v57
  %v253 = vunpack.c.l.b16 %v58
  %v254 = vunpack.c.h.b16 %v58
  %v255 = vunpack.c.l.b16 %v59
  %v256 = vunpack.c.l.b16 %v60
  %v257 = vunpack.c.h.b16 %v60
  %v258 = vunpack.c.l.b16 %v61
  %v259 = vunpack.c.h.b16 %v61
  %v260 = vunpack.c.l.b16 %v62
  %v261 = vunpack.c.l.b16 %v63
  %v262 = vunpack.c.h.b16 %v63
  %v263 = vunpack.c.l.b16 %v64
  %v264 = vunpack.c.h.b16 %v64
  %v265 = vunpack.c.l.b16 %v65
  %v266 = vpack.c.b16 %v191, %v186
  %v267 = vpack.c.b16 %v192, %v187
  %v268 = vpack.c.b16 %v193, %v188
  %v269 = vpack.c.b16 %v194, %v189
  %v270 = vpack.c.b16 %v195, %v190
  %v271 = vpack.c.b16 %v201, %v196
  %v272 = vpack.c.b16 %v202, %v197
  %v273 = vpack.c.b16 %v203, %v198
  %v274 = vpack.c.b16 %v204, %v199
  %v275 = vpack.c.b16 %v205, %v200
  %v276 = vpack.c.b16 %v211, %v206
  %v277 = vpack.c.b16 %v212, %v207
  %v278 = vpack.c.b16 %v213, %v208
  %v279 = vpack.c.b16 %v214, %v209
  %v280 = vpack.c.b16 %v215, %v210
  %v281 = vpack.c.b16 %v221, %v216
  %v282 = vpack.c.b16 %v222, %v217
  %v283 = vpack.c.b16 %v223, %v218
  %v284 = vpack.c.b16 %v224, %v219
  %v285 = vpack.c.b16 %v225, %v220
  %v286 = vpack.c.b16 %v231, %v226
  %v287 = vpack.c.b16 %v232, %v227
  %v288 = vpack.c.b16 %v233, %v228
  %v289 = vpack.c.b16 %v234, %v229
  %v290 = vpack.c.b16 %v235, %v230
  %v291 = vpack.c.b16 %v241, %v236
  %v292 = vpack.c.b16 %v242, %v237
  %v293 = vpack.c.b16 %v243, %v238
  %v294 = vpack.c.b16 %v244, %v239
  %v295 = vpack.c.b16 %v245, %v240
  %v296 = vpack.c.b16 %v251, %v246
  %v297 = vpack.c.b16 %v252, %v247
  %v298 = vpack.c.b16 %v253, %v248
  %v299 = vpack.c.b16 %v254, %v249
  %v300 = vpack.c.b16 %v255, %v250
  %v301 = vpack.c.b16 %v261, %v256
  %v302 = vpack.c.b16 %v262, %v257
  %v303 = vpack.c.b16 %v263, %v258
  %v304 = vpack.c.b16 %v264, %v259
  %v305 = vpack.c.b16 %v265, %v260
  %v410 = vunpack.c.l.b16 %v66
  %v411 = vunpack.c.l.b16 %v67
  %v412 = vunpack.c.l.b16 %v68
  %v413 = vunpack.c.l.b16 %v69
  %v414 = vunpack.c.l.b16 %v70
  %v415 = vunpack.c.l.b16 %v71
  %v416 = vunpack.c.l.b16 %v72
  %v417 = vunpack.c.l.b16 %v73
  %v418 = vunpack.c.l.b16 %v74
  %v419 = vunpack.c.l.b16 %v75
  %v420 = vunpack.c.l.b16 %v76
  %v421 = vunpack.c.l.b16 %v77
  %v422 = vunpack.c.l.b16 %v78
  %v423 = vunpack.c.l.b16 %v79
  %v424 = vunpack.c.l.b16 %v80
  %v425 = vunpack.c.l.b16 %v81
  %v426 = vunpack.c.l.b16 %v82
  %v427 = vunpack.c.l.b16 %v83
  %v428 = vunpack.c.l.b16 %v84
  %v429 = vunpack.c.l.b16 %v85
  %v430 = vunpack.c.l.b16 %v86
  %v431 = vunpack.c.l.b16 %v87
  %v432 = vunpack.c.l.b16 %v88
  %v433 = vunpack.c.l.b16 %v89
  %v434 = vunpack.c.l.b16 %v90
  %v435 = vunpack.c.l.b16 %v91
  %v436 = vunpack.c.l.b16 %v92
  %v437 = vunpack.c.l.b16 %v93
  %v438 = vunpack.c.l.b16 %v94
  %v439 = vunpack.c.l.b16 %v95
  %v440 = vunpack.c.l.b16 %v96
  %v441 = vunpack.c.l.b16 %v97
  %v442 = vunpack.c.l.b16 %v98
  %v443 = vunpack.c.l.b16 %v99
  %v444 = vunpack.c.l.b16 %v100
  %v445 = vunpack.c.l.b16 %v101
  %v446 = vunpack.c.l.b16 %v102
  %v447 = vunpack.c.l.b16 %v103
  %v448 = vunpack.c.l.b16 %v104
  %v449 = vunpack.c.l.b16 %v105
  %v450 = vunpack.c.l.b16 %v106
  %v451 = vunpack.c.l.b16 %v107
  %v452 = vunpack.c.l.b16 %v108
  %v453 = vunpack.c.l.b16 %v109
  %v454 = vunpack.c.l.b16 %v110
  %v455 = vunpack.c.l.b16 %v111
  %v456 = vunpack.c.l.b16 %v112
  %v457 = vunpack.c.l.b16 %v113
  %v458 = vunpack.c.l.b16 %v114
  %v459 = vunpack.c.l.b16 %v115
  %v460 = vunpack.c.l.b16 %v116
  %v461 = vunpack.c.l.b16 %v117
  %v462 = vunpack.c.l.b16 %v118
  %v463 = vunpack.c.l.b16 %v119
  %v464 = vunpack.c.l.b16 %v120
  %v465 = vunpack.c.l.b16 %v121
  %v466 = vunpack.c.l.b16 %v122
  %v467 = vunpack.c.l.b16 %v123
  %v468 = vunpack.c.l.b16 %v124
  %v469 = vunpack.c.l.b16 %v125
  %v470 = vunpack.c.l.b16 %v126
  %v471 = vunpack.c.l.b16 %v127
  %v472 = vunpack.c.l.b16 %v128
  %v473 = vunpack.c.l.b16 %v129
  %v474 = vunpack.c.l.b16 %v130
  %v475 = vunpack.c.l.b16 %v131
  %v476 = vunpack.c.l.b16 %v132
  %v477 = vunpack.c.l.b16 %v133
  %v478 = vunpack.c.l.b16 %v134
  %v479 = vunpack.c.l.b16 %v135
  %v480 = vunpack.c.l.b16 %v136
  %v481 = vunpack.c.l.b16 %v137
  %v482 = vpack.c.b16 %v411, %v410
  %v483 = vpack.c.b16 %v413, %v412
  %v484 = vpack.c.b16 %v415, %v414
  %v485 = vpack.c.b16 %v417, %v416
  %v486 = vpack.c.b16 %v419, %v418
  %v487 = vpack.c.b16 %v421, %v420
  %v488 = vpack.c.b16 %v423, %v422
  %v489 = vpack.c.b16 %v425, %v424
  %v490 = vpack.c.b16 %v427, %v426
  %v491 = vpack.c.b16 %v429, %v428
  %v492 = vpack.c.b16 %v431, %v430
  %v493 = vpack.c.b16 %v433, %v432
  %v494 = vpack.c.b16 %v435, %v434
  %v495 = vpack.c.b16 %v437, %v436
  %v496 = vpack.c.b16 %v439, %v438
  %v497 = vpack.c.b16 %v441, %v440
  %v498 = vpack.c.b16 %v443, %v442
  %v499 = vpack.c.b16 %v445, %v444
  %v500 = vpack.c.b16 %v447, %v446
  %v501 = vpack.c.b16 %v449, %v448
  %v502 = vpack.c.b16 %v451, %v450
  %v503 = vpack.c.b16 %v453, %v452
  %v504 = vpack.c.b16 %v455, %v454
  %v505 = vpack.c.b16 %v457, %v456
  %v506 = vpack.c.b16 %v459, %v458
  %v507 = vpack.c.b16 %v461, %v460
  %v508 = vpack.c.b16 %v463, %v462
  %v509 = vpack.c.b16 %v465, %v464
  %v510 = vpack.c.b16 %v467, %v466
  %v511 = vpack.c.b16 %v469, %v468
  %v512 = vpack.c.b16 %v471, %v470
  %v513 = vpack.c.b16 %v473, %v472
  %v514 = vpack.c.b16 %v475, %v474
  %v515 = vpack.c.b16 %v477, %v476
  %v516 = vpack.c.b16 %v479, %v478
  %v517 = vpack.c.b16 %v481, %v480
  %vm554 = vcmask 523264
  %v556 = vsel %vm554, %v270, 0
  %v559 = vsel %vm554, %v275, 0
  %v562 = vsel %vm554, %v280, 0
  %v565 = vsel %vm554, %v285, 0
  %v568 = vsel %vm554, %v290, 0
  %v571 = vsel %vm554, %v295, 0
  %v574 = vsel %vm554, %v300, 0
  %v577 = vsel %vm554, %v305, 0
  %579 = vmatprep.subr.bf16.mxu0 0
  %580 = vmatpush1.bf16.msra.mxu0 %v482
  %581 = vmatprep.subr.bf16.mxu0 0
  %582 = vmatpush1.bf16.msra.mxu0 %v483
  %583 = vmatprep.subr.bf16.mxu0 0
  %584 = vmatpush1.bf16.msra.mxu0 %v484
  %585 = vmatprep.subr.bf16.mxu0 0
  %586 = vmatpush1.bf16.msra.mxu0 %v485
  %587 = vmatprep.subr.bf16.mxu0 0
  %588 = vmatpush1.bf16.msra.mxu0 %v486
  %589 = vmatprep.subr.bf16.mxu0 0
  %590 = vmatpush1.bf16.msra.mxu0 %v487
  %591 = vmatprep.subr.bf16.mxu0 0
  %592 = vmatpush1.bf16.msra.mxu0 %v488
  %593 = vmatprep.subr.bf16.mxu0 0
  %594 = vmatpush1.bf16.msra.mxu0 %v489
  %595 = vmatprep.subr.bf16.mxu0 0
  %596 = vmatpush1.bf16.msra.mxu0 %v490
  %597 = vmatprep.subr.bf16.mxu0 0
  %598 = vmatpush1.bf16.msra.mxu0 %v491
  %599 = vmatprep.subr.bf16.mxu0 0
  %600 = vmatpush1.bf16.msra.mxu0 %v492
  %601 = vmatprep.subr.bf16.mxu0 0
  %602 = vmatpush1.bf16.msra.mxu0 %v493
  %603 = vmatprep.subr.bf16.mxu0 0
  %604 = vmatpush1.bf16.msra.mxu0 %v494
  %605 = vmatprep.subr.bf16.mxu0 0
  %606 = vmatpush1.bf16.msra.mxu0 %v495
  %607 = vmatprep.subr.bf16.mxu0 0
  %608 = vmatpush1.bf16.msra.mxu0 %v496
  %609 = vmatprep.subr.bf16.mxu0 0
  %610 = vmatpush1.bf16.msra.mxu0 %v497
  %611 = vmatprep.mubr.bf16.mxu0 %v267
  %612 = vmatmul.mubr.bf16.gmra.mrb[0].mxu0 %v266
  %v613 = vpop.f32.mrb[0].mxu0
  %v614 = vadd.f32 0.0, %v613
  %v615 = vpop.f32.mrb[0].mxu0
  %v616 = vpop.f32.mrb[0].mxu0
  %v617 = vadd.f32 0.0, %v616
  %v618 = vpop.f32.mrb[0].mxu0
  %619 = vmatprep.mubr.bf16.mxu0 %v272
  %620 = vmatmul.mubr.bf16.gmra.mrb[0].mxu0 %v271
  %v621 = vpop.f32.mrb[0].mxu0
  %v622 = vadd.f32 0.0, %v621
  %v623 = vpop.f32.mrb[0].mxu0
  %v624 = vpop.f32.mrb[0].mxu0
  %v625 = vadd.f32 0.0, %v624
  %v626 = vpop.f32.mrb[0].mxu0
  %627 = vmatprep.mubr.bf16.mxu0 %v277
  %628 = vmatmul.mubr.bf16.gmra.mrb[0].mxu0 %v276
  %v629 = vpop.f32.mrb[0].mxu0
  %v630 = vadd.f32 0.0, %v629
  %v631 = vpop.f32.mrb[0].mxu0
  %v632 = vpop.f32.mrb[0].mxu0
  %v633 = vadd.f32 0.0, %v632
  %v634 = vpop.f32.mrb[0].mxu0
  %635 = vmatprep.mubr.bf16.mxu0 %v282
  %636 = vmatmul.mubr.bf16.gmra.mrb[0].mxu0 %v281
  %v637 = vpop.f32.mrb[0].mxu0
  %v638 = vadd.f32 0.0, %v637
  %v639 = vpop.f32.mrb[0].mxu0
  %v640 = vpop.f32.mrb[0].mxu0
  %v641 = vadd.f32 0.0, %v640
  %v642 = vpop.f32.mrb[0].mxu0
  %643 = vmatprep.mubr.bf16.mxu0 %v287
  %644 = vmatmul.mubr.bf16.gmra.mrb[0].mxu0 %v286
  %v645 = vpop.f32.mrb[0].mxu0
  %v646 = vadd.f32 0.0, %v645
  %v647 = vpop.f32.mrb[0].mxu0
  %v648 = vpop.f32.mrb[0].mxu0
  %v649 = vadd.f32 0.0, %v648
  %v650 = vpop.f32.mrb[0].mxu0
  %651 = vmatprep.mubr.bf16.mxu0 %v292
  %652 = vmatmul.mubr.bf16.gmra.mrb[0].mxu0 %v291
  %v653 = vpop.f32.mrb[0].mxu0
  %v654 = vadd.f32 0.0, %v653
  %v655 = vpop.f32.mrb[0].mxu0
  %v656 = vpop.f32.mrb[0].mxu0
  %v657 = vadd.f32 0.0, %v656
  %v658 = vpop.f32.mrb[0].mxu0
  %659 = vmatprep.mubr.bf16.mxu0 %v297
  %660 = vmatmul.mubr.bf16.gmra.mrb[0].mxu0 %v296
  %v661 = vpop.f32.mrb[0].mxu0
  %v662 = vadd.f32 0.0, %v661
  %v663 = vpop.f32.mrb[0].mxu0
  %v664 = vpop.f32.mrb[0].mxu0
  %v665 = vadd.f32 0.0, %v664
  %v666 = vpop.f32.mrb[0].mxu0
  %667 = vmatprep.mubr.bf16.mxu0 %v302
  %668 = vmatmul.mubr.bf16.gmra.mrb[0].mxu0 %v301
  %v669 = vpop.f32.mrb[0].mxu0
  %v670 = vadd.f32 0.0, %v669
  %v671 = vpop.f32.mrb[0].mxu0
  %v672 = vpop.f32.mrb[0].mxu0
  %v673 = vadd.f32 0.0, %v672
  %v674 = vpop.f32.mrb[0].mxu0
  %675 = vdwg.mxu0
  %676 = vmatprep.subr.bf16.mxu0 0
  %677 = vmatpush1.bf16.msra.mxu0 %v498
  %678 = vmatprep.subr.bf16.mxu0 0
  %679 = vmatpush1.bf16.msra.mxu0 %v499
  %680 = vmatprep.subr.bf16.mxu0 0
  %681 = vmatpush1.bf16.msra.mxu0 %v500
  %682 = vmatprep.subr.bf16.mxu0 0
  %683 = vmatpush1.bf16.msra.mxu0 %v501
  %684 = vmatprep.subr.bf16.mxu0 0
  %685 = vmatpush1.bf16.msra.mxu0 %v502
  %686 = vmatprep.subr.bf16.mxu0 0
  %687 = vmatpush1.bf16.msra.mxu0 %v503
  %688 = vmatprep.subr.bf16.mxu0 0
  %689 = vmatpush1.bf16.msra.mxu0 %v504
  %690 = vmatprep.subr.bf16.mxu0 0
  %691 = vmatpush1.bf16.msra.mxu0 %v505
  %692 = vmatprep.subr.bf16.mxu0 0
  %693 = vmatpush1.bf16.msra.mxu0 %v506
  %694 = vmatprep.subr.bf16.mxu0 0
  %695 = vmatpush1.bf16.msra.mxu0 %v507
  %696 = vmatprep.subr.bf16.mxu0 0
  %697 = vmatpush1.bf16.msra.mxu0 %v508
  %698 = vmatprep.subr.bf16.mxu0 0
  %699 = vmatpush1.bf16.msra.mxu0 %v509
  %700 = vmatprep.subr.bf16.mxu0 0
  %701 = vmatpush1.bf16.msra.mxu0 %v510
  %702 = vmatprep.subr.bf16.mxu0 0
  %703 = vmatpush1.bf16.msra.mxu0 %v511
  %704 = vmatprep.subr.bf16.mxu0 0
  %705 = vmatpush1.bf16.msra.mxu0 %v512
  %706 = vmatprep.subr.bf16.mxu0 0
  %707 = vmatpush1.bf16.msra.mxu0 %v513
  %708 = vmatprep.mubr.bf16.mxu0 %v269
  %709 = vmatmul.mubr.bf16.gmra.mrb[0].mxu0 %v268
  %v710 = vpop.f32.mrb[0].mxu0
  %v711 = vadd.f32 %v614, %v710
  %v712 = vpop.f32.mrb[0].mxu0
  %v713 = vpop.f32.mrb[0].mxu0
  %v714 = vadd.f32 %v617, %v713
  %v715 = vpop.f32.mrb[0].mxu0
  %716 = vmatprep.mubr.bf16.mxu0 %v274
  %717 = vmatmul.mubr.bf16.gmra.mrb[0].mxu0 %v273
  %v718 = vpop.f32.mrb[0].mxu0
  %v719 = vadd.f32 %v622, %v718
  %v720 = vpop.f32.mrb[0].mxu0
  %v721 = vpop.f32.mrb[0].mxu0
  %v722 = vadd.f32 %v625, %v721
  %v723 = vpop.f32.mrb[0].mxu0
  %724 = vmatprep.mubr.bf16.mxu0 %v279
  %725 = vmatmul.mubr.bf16.gmra.mrb[0].mxu0 %v278
  %v726 = vpop.f32.mrb[0].mxu0
  %v727 = vadd.f32 %v630, %v726
  %v728 = vpop.f32.mrb[0].mxu0
  %v729 = vpop.f32.mrb[0].mxu0
  %v730 = vadd.f32 %v633, %v729
  %v731 = vpop.f32.mrb[0].mxu0
  %732 = vmatprep.mubr.bf16.mxu0 %v284
  %733 = vmatmul.mubr.bf16.gmra.mrb[0].mxu0 %v283
  %v734 = vpop.f32.mrb[0].mxu0
  %v735 = vadd.f32 %v638, %v734
  %v736 = vpop.f32.mrb[0].mxu0
  %v737 = vpop.f32.mrb[0].mxu0
  %v738 = vadd.f32 %v641, %v737
  %v739 = vpop.f32.mrb[0].mxu0
  %740 = vmatprep.mubr.bf16.mxu0 %v289
  %741 = vmatmul.mubr.bf16.gmra.mrb[0].mxu0 %v288
  %v742 = vpop.f32.mrb[0].mxu0
  %v743 = vadd.f32 %v646, %v742
  %v744 = vpop.f32.mrb[0].mxu0
  %v745 = vpop.f32.mrb[0].mxu0
  %v746 = vadd.f32 %v649, %v745
  %v747 = vpop.f32.mrb[0].mxu0
  %748 = vmatprep.mubr.bf16.mxu0 %v294
  %749 = vmatmul.mubr.bf16.gmra.mrb[0].mxu0 %v293
  %v750 = vpop.f32.mrb[0].mxu0
  %v751 = vadd.f32 %v654, %v750
  %v752 = vpop.f32.mrb[0].mxu0
  %v753 = vpop.f32.mrb[0].mxu0
  %v754 = vadd.f32 %v657, %v753
  %v755 = vpop.f32.mrb[0].mxu0
  %756 = vmatprep.mubr.bf16.mxu0 %v299
  %757 = vmatmul.mubr.bf16.gmra.mrb[0].mxu0 %v298
  %v758 = vpop.f32.mrb[0].mxu0
  %v759 = vadd.f32 %v662, %v758
  %v760 = vpop.f32.mrb[0].mxu0
  %v761 = vpop.f32.mrb[0].mxu0
  %v762 = vadd.f32 %v665, %v761
  %v763 = vpop.f32.mrb[0].mxu0
  %764 = vmatprep.mubr.bf16.mxu0 %v304
  %765 = vmatmul.mubr.bf16.gmra.mrb[0].mxu0 %v303
  %v766 = vpop.f32.mrb[0].mxu0
  %v767 = vadd.f32 %v670, %v766
  %v768 = vpop.f32.mrb[0].mxu0
  %v769 = vpop.f32.mrb[0].mxu0
  %v770 = vadd.f32 %v673, %v769
  %v771 = vpop.f32.mrb[0].mxu0
  %772 = vdwg.mxu0
  %773 = vmatprep.subr.bf16.mxu0 0
  %774 = vmatpush1.bf16.msra.mxu0 %v514
  %775 = vmatprep.subr.bf16.mxu0 0
  %776 = vmatpush1.bf16.msra.mxu0 %v515
  %777 = vmatprep.subr.bf16.mxu0 0
  %778 = vmatpush1.bf16.msra.mxu0 %v516
  %779 = vmatprep.subr.bf16.mxu0 0
  %780 = vmatpush1.bf16.msra.mxu0 %v517
  %781 = vmatprep.subr.bf16.mxu0 0
  %782 = vmatpush1.bf16.msra.mxu0 0
  %783 = vmatprep.subr.bf16.mxu0 0
  %784 = vmatpush1.bf16.msra.mxu0 0
  %785 = vmatprep.subr.bf16.mxu0 0
  %786 = vmatpush1.bf16.msra.mxu0 0
  %787 = vmatprep.subr.bf16.mxu0 0
  %788 = vmatpush1.bf16.msra.mxu0 0
  %789 = vmatprep.subr.bf16.mxu0 0
  %790 = vmatpush1.bf16.msra.mxu0 0
  %791 = vmatprep.subr.bf16.mxu0 0
  %792 = vmatpush1.bf16.msra.mxu0 0
  %793 = vmatprep.subr.bf16.mxu0 0
  %794 = vmatpush1.bf16.msra.mxu0 0
  %795 = vmatprep.subr.bf16.mxu0 0
  %796 = vmatpush1.bf16.msra.mxu0 0
  %797 = vmatprep.subr.bf16.mxu0 0
  %798 = vmatpush1.bf16.msra.mxu0 0
  %799 = vmatprep.subr.bf16.mxu0 0
  %800 = vmatpush1.bf16.msra.mxu0 0
  %801 = vmatprep.subr.bf16.mxu0 0
  %802 = vmatpush1.bf16.msra.mxu0 0
  %803 = vmatprep.subr.bf16.mxu0 0
  %804 = vmatpush1.bf16.msra.mxu0 0
  %805 = vmatprep.mubr.bf16.mxu0 0
  %806 = vmatmul.mubr.bf16.gmra.mrb[0].mxu0 %v556
  %v807 = vpop.f32.mrb[0].mxu0
  %v808 = vadd.f32 %v711, %v807
  %v809 = vpop.f32.mrb[0].mxu0
  %v810 = vpop.f32.mrb[0].mxu0
  %v811 = vadd.f32 %v714, %v810
  %v812 = vpop.f32.mrb[0].mxu0
  %813 = vmatprep.mubr.bf16.mxu0 0
  %814 = vmatmul.mubr.bf16.gmra.mrb[0].mxu0 %v559
  %v815 = vpop.f32.mrb[0].mxu0
  %v816 = vadd.f32 %v719, %v815
  %v817 = vpop.f32.mrb[0].mxu0
  %v818 = vpop.f32.mrb[0].mxu0
  %v819 = vadd.f32 %v722, %v818
  %v820 = vpop.f32.mrb[0].mxu0
  %821 = vmatprep.mubr.bf16.mxu0 0
  %822 = vmatmul.mubr.bf16.gmra.mrb[0].mxu0 %v562
  %v823 = vpop.f32.mrb[0].mxu0
  %v824 = vadd.f32 %v727, %v823
  %v825 = vpop.f32.mrb[0].mxu0
  %v826 = vpop.f32.mrb[0].mxu0
  %v827 = vadd.f32 %v730, %v826
  %v828 = vpop.f32.mrb[0].mxu0
  %829 = vmatprep.mubr.bf16.mxu0 0
  %830 = vmatmul.mubr.bf16.gmra.mrb[0].mxu0 %v565
  %v831 = vpop.f32.mrb[0].mxu0
  %v832 = vadd.f32 %v735, %v831
  %v833 = vpop.f32.mrb[0].mxu0
  %v834 = vpop.f32.mrb[0].mxu0
  %v835 = vadd.f32 %v738, %v834
  %v836 = vpop.f32.mrb[0].mxu0
  %837 = vmatprep.mubr.bf16.mxu0 0
  %838 = vmatmul.mubr.bf16.gmra.mrb[0].mxu0 %v568
  %v839 = vpop.f32.mrb[0].mxu0
  %v840 = vadd.f32 %v743, %v839
  %v841 = vpop.f32.mrb[0].mxu0
  %v842 = vpop.f32.mrb[0].mxu0
  %v843 = vadd.f32 %v746, %v842
  %v844 = vpop.f32.mrb[0].mxu0
  %845 = vmatprep.mubr.bf16.mxu0 0
  %846 = vmatmul.mubr.bf16.gmra.mrb[0].mxu0 %v571
  %v847 = vpop.f32.mrb[0].mxu0
  %v848 = vadd.f32 %v751, %v847
  %v849 = vpop.f32.mrb[0].mxu0
  %v850 = vpop.f32.mrb[0].mxu0
  %v851 = vadd.f32 %v754, %v850
  %v852 = vpop.f32.mrb[0].mxu0
  %853 = vmatprep.mubr.bf16.mxu0 0
  %854 = vmatmul.mubr.bf16.gmra.mrb[0].mxu0 %v574
  %v855 = vpop.f32.mrb[0].mxu0
  %v856 = vadd.f32 %v759, %v855
  %v857 = vpop.f32.mrb[0].mxu0
  %v858 = vpop.f32.mrb[0].mxu0
  %v859 = vadd.f32 %v762, %v858
  %v860 = vpop.f32.mrb[0].mxu0
  %861 = vmatprep.mubr.bf16.mxu0 0
  %862 = vmatmul.mubr.bf16.gmra.mrb[0].mxu0 %v577
  %v863 = vpop.f32.mrb[0].mxu0
  %v864 = vadd.f32 %v767, %v863
  %v865 = vpop.f32.mrb[0].mxu0
  %v866 = vpop.f32.mrb[0].mxu0
  %v867 = vadd.f32 %v770, %v866
  %v868 = vpop.f32.mrb[0].mxu0
  %869 = vdwg.mxu0
  %v870 = vld [vmem:[%s2] sm:$0xff]
  %v871 = vld [vmem:[%s2 + $0x8] sm:$0xff]
  %v872 = vld [vmem:[%s2 + $0x10] sm:$0xff]
  %v873 = vld [vmem:[%s2 + $0x18] sm:$0xff]
  %v874 = vld [vmem:[%s2 + $0x20] sm:$0xff]
  %v875 = vld [vmem:[%s2 + $0x28] sm:$0xff]
  %v876 = vld [vmem:[%s2 + $0x30] sm:$0xff]
  %v877 = vld [vmem:[%s2 + $0x38] sm:$0xff]
  %v878 = vld [vmem:[%s2 + $0x40] sm:$0xff]
  %v879 = vld [vmem:[%s2 + $0x48] sm:$0xff]
  %v880 = vld [vmem:[%s2 + $0x50] sm:$0xff]
  %v881 = vld [vmem:[%s2 + $0x58] sm:$0xff]
  %v882 = vld [vmem:[%s2 + $0x60] sm:$0xff]
  %v883 = vld [vmem:[%s2 + $0x68] sm:$0xff]
  %v884 = vld [vmem:[%s2 + $0x70] sm:$0xff]
  %v885 = vld [vmem:[%s2 + $0x78] sm:$0xff]
  %887 = vset.pattern.permute.xlu0 0
  %888 = vperm.xlu0 %887, %v870
  %v889 = vpop.permute.xlu0 %888
  %892 = vset.pattern.permute.xlu0 0
  %893 = vperm.xlu0 %892, %v871
  %v894 = vpop.permute.xlu0 %893
  %897 = vset.pattern.permute.xlu0 0
  %898 = vperm.xlu0 %897, %v872
  %v899 = vpop.permute.xlu0 %898
  %902 = vset.pattern.permute.xlu0 0
  %903 = vperm.xlu0 %902, %v873
  %v904 = vpop.permute.xlu0 %903
  %907 = vset.pattern.permute.xlu0 0
  %908 = vperm.xlu0 %907, %v874
  %v909 = vpop.permute.xlu0 %908
  %912 = vset.pattern.permute.xlu0 0
  %913 = vperm.xlu0 %912, %v875
  %v914 = vpop.permute.xlu0 %913
  %917 = vset.pattern.permute.xlu0 0
  %918 = vperm.xlu0 %917, %v876
  %v919 = vpop.permute.xlu0 %918
  %922 = vset.pattern.permute.xlu0 0
  %923 = vperm.xlu0 %922, %v877
  %v924 = vpop.permute.xlu0 %923
  %927 = vset.pattern.permute.xlu0 0
  %928 = vperm.xlu0 %927, %v878
  %v929 = vpop.permute.xlu0 %928
  %932 = vset.pattern.permute.xlu0 0
  %933 = vperm.xlu0 %932, %v879
  %v934 = vpop.permute.xlu0 %933
  %937 = vset.pattern.permute.xlu0 0
  %938 = vperm.xlu0 %937, %v880
  %v939 = vpop.permute.xlu0 %938
  %942 = vset.pattern.permute.xlu0 0
  %943 = vperm.xlu0 %942, %v881
  %v944 = vpop.permute.xlu0 %943
  %947 = vset.pattern.permute.xlu0 0
  %948 = vperm.xlu0 %947, %v882
  %v949 = vpop.permute.xlu0 %948
  %952 = vset.pattern.permute.xlu0 0
  %953 = vperm.xlu0 %952, %v883
  %v954 = vpop.permute.xlu0 %953
  %957 = vset.pattern.permute.xlu0 0
  %958 = vperm.xlu0 %957, %v884
  %v959 = vpop.permute.xlu0 %958
  %962 = vset.pattern.permute.xlu0 0
  %963 = vperm.xlu0 %962, %v885
  %v964 = vpop.permute.xlu0 %963
  %v966 = vmul.f32 %v808, %v889
  %v967 = vmul.f32 %v811, %v894
  %v968 = vmul.f32 %v816, %v899
  %v969 = vmul.f32 %v819, %v904
  %v970 = vmul.f32 %v824, %v909
  %v971 = vmul.f32 %v827, %v914
  %v972 = vmul.f32 %v832, %v919
  %v973 = vmul.f32 %v835, %v924
  %v974 = vmul.f32 %v840, %v929
  %v975 = vmul.f32 %v843, %v934
  %v976 = vmul.f32 %v848, %v939
  %v977 = vmul.f32 %v851, %v944
  %v978 = vmul.f32 %v856, %v949
  %v979 = vmul.f32 %v859, %v954
  %v980 = vmul.f32 %v864, %v959
  %v981 = vmul.f32 %v867, %v964
  %v982 = vld [vmem:[%s3] sm:$0xff]
  %v983 = vld [vmem:[%s3 + $0x8] sm:$0xff]
  %v984 = vld [vmem:[%s3 + $0x10] sm:$0xff]
  %v985 = vld [vmem:[%s3 + $0x18] sm:$0xff]
  %v986 = vld [vmem:[%s3 + $0x20] sm:$0xff]
  %v987 = vld [vmem:[%s3 + $0x28] sm:$0xff]
  %v988 = vld [vmem:[%s3 + $0x30] sm:$0xff]
  %v989 = vld [vmem:[%s3 + $0x38] sm:$0xff]
  %v990 = vld [vmem:[%s3 + $0x40] sm:$0xff]
  %v991 = vld [vmem:[%s3 + $0x48] sm:$0xff]
  %v992 = vld [vmem:[%s3 + $0x50] sm:$0xff]
  %v993 = vld [vmem:[%s3 + $0x58] sm:$0xff]
  %v994 = vld [vmem:[%s3 + $0x60] sm:$0xff]
  %v995 = vld [vmem:[%s3 + $0x68] sm:$0xff]
  %v996 = vld [vmem:[%s3 + $0x70] sm:$0xff]
  %v997 = vld [vmem:[%s3 + $0x78] sm:$0xff]
  %999 = vset.pattern.permute.xlu0 0
  %1000 = vperm.xlu0 %999, %v982
  %v1001 = vpop.permute.xlu0 %1000
  %1004 = vset.pattern.permute.xlu0 0
  %1005 = vperm.xlu0 %1004, %v983
  %v1006 = vpop.permute.xlu0 %1005
  %1009 = vset.pattern.permute.xlu0 0
  %1010 = vperm.xlu0 %1009, %v984
  %v1011 = vpop.permute.xlu0 %1010
  %1014 = vset.pattern.permute.xlu0 0
  %1015 = vperm.xlu0 %1014, %v985
  %v1016 = vpop.permute.xlu0 %1015
  %1019 = vset.pattern.permute.xlu0 0
  %1020 = vperm.xlu0 %1019, %v986
  %v1021 = vpop.permute.xlu0 %1020
  %1024 = vset.pattern.permute.xlu0 0
  %1025 = vperm.xlu0 %1024, %v987
  %v1026 = vpop.permute.xlu0 %1025
  %1029 = vset.pattern.permute.xlu0 0
  %1030 = vperm.xlu0 %1029, %v988
  %v1031 = vpop.permute.xlu0 %1030
  %1034 = vset.pattern.permute.xlu0 0
  %1035 = vperm.xlu0 %1034, %v989
  %v1036 = vpop.permute.xlu0 %1035
  %1039 = vset.pattern.permute.xlu0 0
  %1040 = vperm.xlu0 %1039, %v990
  %v1041 = vpop.permute.xlu0 %1040
  %1044 = vset.pattern.permute.xlu0 0
  %1045 = vperm.xlu0 %1044, %v991
  %v1046 = vpop.permute.xlu0 %1045
  %1049 = vset.pattern.permute.xlu0 0
  %1050 = vperm.xlu0 %1049, %v992
  %v1051 = vpop.permute.xlu0 %1050
  %1054 = vset.pattern.permute.xlu0 0
  %1055 = vperm.xlu0 %1054, %v993
  %v1056 = vpop.permute.xlu0 %1055
  %1059 = vset.pattern.permute.xlu0 0
  %1060 = vperm.xlu0 %1059, %v994
  %v1061 = vpop.permute.xlu0 %1060
  %1064 = vset.pattern.permute.xlu0 0
  %1065 = vperm.xlu0 %1064, %v995
  %v1066 = vpop.permute.xlu0 %1065
  %1069 = vset.pattern.permute.xlu0 0
  %1070 = vperm.xlu0 %1069, %v996
  %v1071 = vpop.permute.xlu0 %1070
  %1074 = vset.pattern.permute.xlu0 0
  %1075 = vperm.xlu0 %1074, %v997
  %v1076 = vpop.permute.xlu0 %1075
  %v1078 = vadd.f32 %v966, %v1001
  %v1079 = vadd.f32 %v967, %v1006
  %v1080 = vadd.f32 %v968, %v1011
  %v1081 = vadd.f32 %v969, %v1016
  %v1082 = vadd.f32 %v970, %v1021
  %v1083 = vadd.f32 %v971, %v1026
  %v1084 = vadd.f32 %v972, %v1031
  %v1085 = vadd.f32 %v973, %v1036
  %v1086 = vadd.f32 %v974, %v1041
  %v1087 = vadd.f32 %v975, %v1046
  %v1088 = vadd.f32 %v976, %v1051
  %v1089 = vadd.f32 %v977, %v1056
  %v1090 = vadd.f32 %v978, %v1061
  %v1091 = vadd.f32 %v979, %v1066
  %v1092 = vadd.f32 %v980, %v1071
  %v1093 = vadd.f32 %v981, %v1076
  %v1094 = vmax.f32 %v1078, 0.0
  %v1095 = vmax.f32 %v1079, 0.0
  %v1096 = vmax.f32 %v1080, 0.0
  %v1097 = vmax.f32 %v1081, 0.0
  %v1098 = vmax.f32 %v1082, 0.0
  %v1099 = vmax.f32 %v1083, 0.0
  %v1100 = vmax.f32 %v1084, 0.0
  %v1101 = vmax.f32 %v1085, 0.0
  %v1102 = vmax.f32 %v1086, 0.0
  %v1103 = vmax.f32 %v1087, 0.0
  %v1104 = vmax.f32 %v1088, 0.0
  %v1105 = vmax.f32 %v1089, 0.0
  %v1106 = vmax.f32 %v1090, 0.0
  %v1107 = vmax.f32 %v1091, 0.0
  %v1108 = vmax.f32 %v1092, 0.0
  %v1109 = vmax.f32 %v1093, 0.0
  %v1110 = vpack.c.bf16 %v1095, %v1094
  %v1111 = vpack.c.bf16 %v1097, %v1096
  %v1112 = vpack.c.bf16 %v1099, %v1098
  %v1113 = vpack.c.bf16 %v1101, %v1100
  %v1114 = vpack.c.bf16 %v1103, %v1102
  %v1115 = vpack.c.bf16 %v1105, %v1104
  %v1116 = vpack.c.bf16 %v1107, %v1106
  %v1117 = vpack.c.bf16 %v1109, %v1108
  %v1126 = vunpack.c.l.b16 %v1110
  %v1127 = vunpack.c.h.b16 %v1110
  %v1128 = vunpack.c.l.b16 %v1111
  %v1129 = vunpack.c.h.b16 %v1111
  %v1130 = vunpack.c.l.b16 %v1112
  %v1131 = vunpack.c.h.b16 %v1112
  %v1132 = vunpack.c.l.b16 %v1113
  %v1133 = vunpack.c.h.b16 %v1113
  %v1134 = vunpack.c.l.b16 %v1114
  %v1135 = vunpack.c.h.b16 %v1114
  %v1136 = vunpack.c.l.b16 %v1115
  %v1137 = vunpack.c.h.b16 %v1115
  %v1138 = vunpack.c.l.b16 %v1116
  %v1139 = vunpack.c.h.b16 %v1116
  %v1140 = vunpack.c.l.b16 %v1117
  %v1141 = vunpack.c.h.b16 %v1117
  %v1142 = vpack.c.b16 %v1126, %v1126
  %v1143 = vpack.c.b16 %v1127, %v1127
  %v1144 = vpack.c.b16 %v1128, %v1128
  %v1145 = vpack.c.b16 %v1129, %v1129
  %v1146 = vpack.c.b16 %v1130, %v1130
  %v1147 = vpack.c.b16 %v1131, %v1131
  %v1148 = vpack.c.b16 %v1132, %v1132
  %v1149 = vpack.c.b16 %v1133, %v1133
  %v1150 = vpack.c.b16 %v1134, %v1134
  %v1151 = vpack.c.b16 %v1135, %v1135
  %v1152 = vpack.c.b16 %v1136, %v1136
  %v1153 = vpack.c.b16 %v1137, %v1137
  %v1154 = vpack.c.b16 %v1138, %v1138
  %v1155 = vpack.c.b16 %v1139, %v1139
  %v1156 = vpack.c.b16 %v1140, %v1140
  %v1157 = vpack.c.b16 %v1141, %v1141
  %1174 = vst [vmem:[%s4] sm:$0xf] %v1142
  %1175 = vst [vmem:[%s4 + $0x4] sm:$0xf] %v1143
  %1176 = vst [vmem:[%s4 + $0x8] sm:$0xf] %v1144
  %1177 = vst [vmem:[%s4 + $0xc] sm:$0xf] %v1145
  %1178 = vst [vmem:[%s4 + $0x10] sm:$0xf] %v1146
  %1179 = vst [vmem:[%s4 + $0x14] sm:$0xf] %v1147
  %1180 = vst [vmem:[%s4 + $0x18] sm:$0xf] %v1148
  %1181 = vst [vmem:[%s4 + $0x1c] sm:$0xf] %v1149
  %1182 = vst [vmem:[%s4 + $0x20] sm:$0xf] %v1150
  %1183 = vst [vmem:[%s4 + $0x24] sm:$0xf] %v1151
  %1184 = vst [vmem:[%s4 + $0x28] sm:$0xf] %v1152
  %1185 = vst [vmem:[%s4 + $0x2c] sm:$0xf] %v1153
  %1186 = vst [vmem:[%s4 + $0x30] sm:$0xf] %v1154
  %1187 = vst [vmem:[%s4 + $0x34] sm:$0xf] %v1155
  %1188 = vst [vmem:[%s4 + $0x38] sm:$0xf] %v1156
  %1189 = vst [vmem:[%s4 + $0x3c] sm:$0xf] %v1157
  // Predicated region
  $region18: #{cnn_student_forward.9} parent=0 // pred_check
    _
  $region19: #{cnn_student_forward.9} parent=0 // pred_check_branch
    %1191 = sbr.rel (0) target = $region21
  $region20: #{cnn_student_forward.9} parent=0 // pred_region
    _
  $region21: #{cnn_student_forward.9} parent=0 // pred_fallthru
    _
  // Predicated region
  $region22: #{cnn_student_forward.9} parent=0 // pred_check
    _
  $region23: #{cnn_student_forward.9} parent=0 // pred_check_branch
    %1193 = sbr.rel (0) target = $region25
  $region24: #{cnn_student_forward.9} parent=0 // pred_region
    _
  $region25: #{cnn_student_forward.9} parent=0 // pred_fallthru
    _

// kernel: cnn_student_forward.10
$region0: #{cnn_student_forward.10}
  #allocation0 [shape = 'u32[]', space=smem, size = 0x4, offset = 0x4, fixed_abs, tag = 'smem constant byte address 0x4 - core index']
  #allocation1 [shape = 'u32[144,128]{1,0:T(1,128)}', space=vmem, size = 0x12000, scoped, tag = 'internal scratch']
  %s0 = inlined_call_operand.vmem [shape: bf16[4,128,128], index: 0, kind: input, shape index: {}]
  %s1 = inlined_call_operand.vmem [shape: bf16[128,128], index: 1, kind: output, shape index: {}]
  %s2 = sld [smem:[#allocation0]]
  $region14: #{cnn_student_forward.10} parent=0
    _
  %s4 = ssub.s32 1, %s2
  %s5 = scalar_select 0, %s4, %s2
  // Predicated region
  $region2: #{cnn_student_forward.10} parent=0 // pred_check
    _
  $region3: #{cnn_student_forward.10} parent=0 // pred_check_branch
    %7 = sbr.rel (0) target = $region5
  $region4: #{cnn_student_forward.10} parent=0 // pred_region
    _
  $region5: #{cnn_student_forward.10} parent=0 // pred_fallthru
    _
  %v9 = vld [vmem:[%s0] sm:$0xf]
  %v10 = vld [vmem:[%s0 + $0x4] sm:$0xf]
  %v11 = vld [vmem:[%s0 + $0x8] sm:$0xf]
  %v12 = vld [vmem:[%s0 + $0xc] sm:$0xf]
  %v13 = vld [vmem:[%s0 + $0x10] sm:$0xf]
  %v14 = vld [vmem:[%s0 + $0x14] sm:$0xf]
  %v15 = vld [vmem:[%s0 + $0x18] sm:$0xf]
  %v16 = vld [vmem:[%s0 + $0x1c] sm:$0xf]
  %v17 = vld [vmem:[%s0 + $0x20] sm:$0xf]
  %v18 = vld [vmem:[%s0 + $0x24] sm:$0xf]
  %v19 = vld [vmem:[%s0 + $0x28] sm:$0xf]
  %v20 = vld [vmem:[%s0 + $0x2c] sm:$0xf]
  %v21 = vld [vmem:[%s0 + $0x30] sm:$0xf]
  %v22 = vld [vmem:[%s0 + $0x34] sm:$0xf]
  %v23 = vld [vmem:[%s0 + $0x38] sm:$0xf]
  %v24 = vld [vmem:[%s0 + $0x3c] sm:$0xf]
  %v25 = vld [vmem:[%s0 + $0x40] sm:$0xf]
  %v26 = vld [vmem:[%s0 + $0x44] sm:$0xf]
  %v27 = vld [vmem:[%s0 + $0x48] sm:$0xf]
  %v28 = vld [vmem:[%s0 + $0x4c] sm:$0xf]
  %v29 = vld [vmem:[%s0 + $0x50] sm:$0xf]
  %v30 = vld [vmem:[%s0 + $0x54] sm:$0xf]
  %v31 = vld [vmem:[%s0 + $0x58] sm:$0xf]
  %v32 = vld [vmem:[%s0 + $0x5c] sm:$0xf]
  %v33 = vld [vmem:[%s0 + $0x60] sm:$0xf]
  %v34 = vld [vmem:[%s0 + $0x64] sm:$0xf]
  %v35 = vld [vmem:[%s0 + $0x68] sm:$0xf]
  %v36 = vld [vmem:[%s0 + $0x6c] sm:$0xf]
  %v37 = vld [vmem:[%s0 + $0x70] sm:$0xf]
  %v38 = vld [vmem:[%s0 + $0x74] sm:$0xf]
  %v39 = vld [vmem:[%s0 + $0x78] sm:$0xf]
  %v40 = vld [vmem:[%s0 + $0x7c] sm:$0xf]
  %v41 = vld [vmem:[%s0 + $0x80] sm:$0xf]
  %v42 = vld [vmem:[%s0 + $0x84] sm:$0xf]
  %v43 = vld [vmem:[%s0 + $0x88] sm:$0xf]
  %v44 = vld [vmem:[%s0 + $0x8c] sm:$0xf]
  %v45 = vld [vmem:[%s0 + $0x90] sm:$0xf]
  %v46 = vld [vmem:[%s0 + $0x94] sm:$0xf]
  %v47 = vld [vmem:[%s0 + $0x98] sm:$0xf]
  %v48 = vld [vmem:[%s0 + $0x9c] sm:$0xf]
  %v49 = vld [vmem:[%s0 + $0xa0] sm:$0xf]
  %v50 = vld [vmem:[%s0 + $0xa4] sm:$0xf]
  %v51 = vld [vmem:[%s0 + $0xa8] sm:$0xf]
  %v52 = vld [vmem:[%s0 + $0xac] sm:$0xf]
  %v53 = vld [vmem:[%s0 + $0xb0] sm:$0xf]
  %v54 = vld [vmem:[%s0 + $0xb4] sm:$0xf]
  %v55 = vld [vmem:[%s0 + $0xb8] sm:$0xf]
  %v56 = vld [vmem:[%s0 + $0xbc] sm:$0xf]
  %v57 = vld [vmem:[%s0 + $0xc0] sm:$0xf]
  %v58 = vld [vmem:[%s0 + $0xc4] sm:$0xf]
  %v59 = vld [vmem:[%s0 + $0xc8] sm:$0xf]
  %v60 = vld [vmem:[%s0 + $0xcc] sm:$0xf]
  %v61 = vld [vmem:[%s0 + $0xd0] sm:$0xf]
  %v62 = vld [vmem:[%s0 + $0xd4] sm:$0xf]
  %v63 = vld [vmem:[%s0 + $0xd8] sm:$0xf]
  %v64 = vld [vmem:[%s0 + $0xdc] sm:$0xf]
  %v65 = vld [vmem:[%s0 + $0xe0] sm:$0xf]
  %v66 = vld [vmem:[%s0 + $0xe4] sm:$0xf]
  %v67 = vld [vmem:[%s0 + $0xe8] sm:$0xf]
  %v68 = vld [vmem:[%s0 + $0xec] sm:$0xf]
  %v69 = vld [vmem:[%s0 + $0xf0] sm:$0xf]
  %v70 = vld [vmem:[%s0 + $0xf4] sm:$0xf]
  %v71 = vld [vmem:[%s0 + $0xf8] sm:$0xf]
  %v72 = vld [vmem:[%s0 + $0xfc] sm:$0xf]
  %vm73 = vcmask 1043456
  %v76 = vsel %vm73, %v9, 4286644096
  %v79 = vsel %vm73, %v25, 4286644096
  %v81 = vmax.bf16 %v76, %v79
  %v83 = vsel %vm73, %v41, 4286644096
  %v85 = vmax.bf16 %v81, %v83
  %v87 = vsel %vm73, %v57, 4286644096
  %v89 = vmax.bf16 %v85, %v87
  %v91 = vsel %vm73, %v10, 4286644096
  %v94 = vsel %vm73, %v26, 4286644096
  %v96 = vmax.bf16 %v91, %v94
  %v98 = vsel %vm73, %v42, 4286644096
  %v100 = vmax.bf16 %v96, %v98
  %v102 = vsel %vm73, %v58, 4286644096
  %v104 = vmax.bf16 %v100, %v102
  %v106 = vsel %vm73, %v11, 4286644096
  %v109 = vsel %vm73, %v27, 4286644096
  %v111 = vmax.bf16 %v106, %v109
  %v113 = vsel %vm73, %v43, 4286644096
  %v115 = vmax.bf16 %v111, %v113
  %v117 = vsel %vm73, %v59, 4286644096
  %v119 = vmax.bf16 %v115, %v117
  %v121 = vsel %vm73, %v12, 4286644096
  %v124 = vsel %vm73, %v28, 4286644096
  %v126 = vmax.bf16 %v121, %v124
  %v128 = vsel %vm73, %v44, 4286644096
  %v130 = vmax.bf16 %v126, %v128
  %v132 = vsel %vm73, %v60, 4286644096
  %v134 = vmax.bf16 %v130, %v132
  %v136 = vsel %vm73, %v13, 4286644096
  %v139 = vsel %vm73, %v29, 4286644096
  %v141 = vmax.bf16 %v136, %v139
  %v143 = vsel %vm73, %v45, 4286644096
  %v145 = vmax.bf16 %v141, %v143
  %v147 = vsel %vm73, %v61, 4286644096
  %v149 = vmax.bf16 %v145, %v147
  %v151 = vsel %vm73, %v14, 4286644096
  %v154 = vsel %vm73, %v30, 4286644096
  %v156 = vmax.bf16 %v151, %v154
  %v158 = vsel %vm73, %v46, 4286644096
  %v160 = vmax.bf16 %v156, %v158
  %v162 = vsel %vm73, %v62, 4286644096
  %v164 = vmax.bf16 %v160, %v162
  %v166 = vsel %vm73, %v15, 4286644096
  %v169 = vsel %vm73, %v31, 4286644096
  %v171 = vmax.bf16 %v166, %v169
  %v173 = vsel %vm73, %v47, 4286644096
  %v175 = vmax.bf16 %v171, %v173
  %v177 = vsel %vm73, %v63, 4286644096
  %v179 = vmax.bf16 %v175, %v177
  %v181 = vsel %vm73, %v16, 4286644096
  %v184 = vsel %vm73, %v32, 4286644096
  %v186 = vmax.bf16 %v181, %v184
  %v188 = vsel %vm73, %v48, 4286644096
  %v190 = vmax.bf16 %v186, %v188
  %v192 = vsel %vm73, %v64, 4286644096
  %v194 = vmax.bf16 %v190, %v192
  %v196 = vsel %vm73, %v17, 4286644096
  %v199 = vsel %vm73, %v33, 4286644096
  %v201 = vmax.bf16 %v196, %v199
  %v203 = vsel %vm73, %v49, 4286644096
  %v205 = vmax.bf16 %v201, %v203
  %v207 = vsel %vm73, %v65, 4286644096
  %v209 = vmax.bf16 %v205, %v207
  %v211 = vsel %vm73, %v18, 4286644096
  %v214 = vsel %vm73, %v34, 4286644096
  %v216 = vmax.bf16 %v211, %v214
  %v218 = vsel %vm73, %v50, 4286644096
  %v220 = vmax.bf16 %v216, %v218
  %v222 = vsel %vm73, %v66, 4286644096
  %v224 = vmax.bf16 %v220, %v222
  %v226 = vsel %vm73, %v19, 4286644096
  %v229 = vsel %vm73, %v35, 4286644096
  %v231 = vmax.bf16 %v226, %v229
  %v233 = vsel %vm73, %v51, 4286644096
  %v235 = vmax.bf16 %v231, %v233
  %v237 = vsel %vm73, %v67, 4286644096
  %v239 = vmax.bf16 %v235, %v237
  %v241 = vsel %vm73, %v20, 4286644096
  %v244 = vsel %vm73, %v36, 4286644096
  %v246 = vmax.bf16 %v241, %v244
  %v248 = vsel %vm73, %v52, 4286644096
  %v250 = vmax.bf16 %v246, %v248
  %v252 = vsel %vm73, %v68, 4286644096
  %v254 = vmax.bf16 %v250, %v252
  %v256 = vsel %vm73, %v21, 4286644096
  %v259 = vsel %vm73, %v37, 4286644096
  %v261 = vmax.bf16 %v256, %v259
  %v263 = vsel %vm73, %v53, 4286644096
  %v265 = vmax.bf16 %v261, %v263
  %v267 = vsel %vm73, %v69, 4286644096
  %v269 = vmax.bf16 %v265, %v267
  %v271 = vsel %vm73, %v22, 4286644096
  %v274 = vsel %vm73, %v38, 4286644096
  %v276 = vmax.bf16 %v271, %v274
  %v278 = vsel %vm73, %v54, 4286644096
  %v280 = vmax.bf16 %v276, %v278
  %v282 = vsel %vm73, %v70, 4286644096
  %v284 = vmax.bf16 %v280, %v282
  %v286 = vsel %vm73, %v23, 4286644096
  %v289 = vsel %vm73, %v39, 4286644096
  %v291 = vmax.bf16 %v286, %v289
  %v293 = vsel %vm73, %v55, 4286644096
  %v295 = vmax.bf16 %v291, %v293
  %v297 = vsel %vm73, %v71, 4286644096
  %v299 = vmax.bf16 %v295, %v297
  %v301 = vsel %vm73, %v24, 4286644096
  %v304 = vsel %vm73, %v40, 4286644096
  %v306 = vmax.bf16 %v301, %v304
  %v308 = vsel %vm73, %v56, 4286644096
  %v310 = vmax.bf16 %v306, %v308
  %v312 = vsel %vm73, %v72, 4286644096
  %v314 = vmax.bf16 %v310, %v312
  %315 = vst [vmem:[%s1] sm:$0xf] %v89
  %316 = vst [vmem:[%s1 + $0x4] sm:$0xf] %v104
  %317 = vst [vmem:[%s1 + $0x8] sm:$0xf] %v119
  %318 = vst [vmem:[%s1 + $0xc] sm:$0xf] %v134
  %319 = vst [vmem:[%s1 + $0x10] sm:$0xf] %v149
  %320 = vst [vmem:[%s1 + $0x14] sm:$0xf] %v164
  %321 = vst [vmem:[%s1 + $0x18] sm:$0xf] %v179
  %322 = vst [vmem:[%s1 + $0x1c] sm:$0xf] %v194
  %323 = vst [vmem:[%s1 + $0x20] sm:$0xf] %v209
  %324 = vst [vmem:[%s1 + $0x24] sm:$0xf] %v224
  %325 = vst [vmem:[%s1 + $0x28] sm:$0xf] %v239
  %326 = vst [vmem:[%s1 + $0x2c] sm:$0xf] %v254
  %327 = vst [vmem:[%s1 + $0x30] sm:$0xf] %v269
  %328 = vst [vmem:[%s1 + $0x34] sm:$0xf] %v284
  %329 = vst [vmem:[%s1 + $0x38] sm:$0xf] %v299
  %330 = vst [vmem:[%s1 + $0x3c] sm:$0xf] %v314
  // Predicated region
  $region6: #{cnn_student_forward.10} parent=0 // pred_check
    _
  $region7: #{cnn_student_forward.10} parent=0 // pred_check_branch
    %332 = sbr.rel (0) target = $region9
  $region8: #{cnn_student_forward.10} parent=0 // pred_region
    _
  $region9: #{cnn_student_forward.10} parent=0 // pred_fallthru
    _
  // Predicated region
  $region10: #{cnn_student_forward.10} parent=0 // pred_check
    _
  $region11: #{cnn_student_forward.10} parent=0 // pred_check_branch
    %334 = sbr.rel (0) target = $region13
  $region12: #{cnn_student_forward.10} parent=0 // pred_region
    _
  $region13: #{cnn_student_forward.10} parent=0 // pred_fallthru
    _

// kernel: cnn_student_forward.11
$region0: #{cnn_student_forward.11}
  #allocation0 [shape = 'u32[]', space=smem, size = 0x4, offset = 0x4, fixed_abs, tag = 'smem constant byte address 0x4 - core index']
  #allocation1 [shape = 'u32[144,128]{1,0:T(1,128)}', space=vmem, size = 0x12000, scoped, tag = 'internal scratch']
  %s0 = inlined_call_operand.vmem [shape: bf16[2,1152], index: 0, kind: input, shape index: {}]
  %s1 = inlined_call_operand.vmem [shape: bf16[1152,10], index: 1, kind: input, shape index: {}]
  %s2 = inlined_call_operand.vmem [shape: f32[1,10], index: 2, kind: input, shape index: {}]
  %s3 = inlined_call_operand.hbm [shape: f32[2,10], index: 3, kind: output, shape index: {0}]
  %s4 = inlined_call_operand.hbm [shape: f32[2,10], index: 4, kind: output, shape index: {1}]
  %5 = xla_tuple %s3, %s4
  %s6 = sld [smem:[#allocation0]]
  $region30: #{cnn_student_forward.11} parent=0
    _
  %s8 = ssub.s32 1, %s6
  %s9 = scalar_select 0, %s8, %s6
  $region1: #{cnn_student_forward.11} parent=0
    #allocation2 [shape = 'u8[1024]{0}', space=vmem, size = 0x400, scoped, tag = 'output window, operand 0, single buffered']
    #allocation3 [shape = 's32[1]{0}', space=sflag, size = 0x4, scoped, tag = 'scoped memory for cnn_student_forward.11']
    #allocation4 [shape = 'u8[1024]{0}', space=vmem, size = 0x400, scoped, tag = 'output window, operand 1, single buffered']
    #allocation5 [shape = 's32[1]{0}', space=sflag, size = 0x4, scoped, tag = 'scoped memory for cnn_student_forward.11']
    %10 = vsyncpa [#allocation3], 0
    %11 = vsyncpa [#allocation5], 0
    // Predicated region
    $region2: #{cnn_student_forward.11} parent=1 // pred_check
      _
    $region3: #{cnn_student_forward.11} parent=1 // pred_check_branch
      %13 = sbr.rel (0) target = $region5
    $region4: #{cnn_student_forward.11} parent=1 // pred_region
      _
    $region5: #{cnn_student_forward.11} parent=1 // pred_fallthru
      _
    // Predicated region
    $region6: #{cnn_student_forward.11} parent=1 // pred_check
      _
    $region7: #{cnn_student_forward.11} parent=1 // pred_check_branch
      %15 = sbr.rel (0) target = $region9
    $region8: #{cnn_student_forward.11} parent=1 // pred_region
      _
    $region9: #{cnn_student_forward.11} parent=1 // pred_fallthru
      _
    // Predicated region
    $region10: #{cnn_student_forward.11} parent=1 // pred_check
      _
    $region11: #{cnn_student_forward.11} parent=1 // pred_check_branch
      %17 = sbr.rel (0) target = $region13
    $region12: #{cnn_student_forward.11} parent=1 // pred_region
      _
    $region13: #{cnn_student_forward.11} parent=1 // pred_fallthru
      _
    %v19 = vld [vmem:[%s0] sm:$0xff]
    %v20 = vld [vmem:[%s0 + $0x8] sm:$0x1]
    %v21 = vld [vmem:[%s1] sm:$0xf]
    %v22 = vld [vmem:[%s1 + $0x4] sm:$0xf]
    %v23 = vld [vmem:[%s1 + $0x8] sm:$0xf]
    %v24 = vld [vmem:[%s1 + $0xc] sm:$0xf]
    %v25 = vld [vmem:[%s1 + $0x10] sm:$0xf]
    %v26 = vld [vmem:[%s1 + $0x14] sm:$0xf]
    %v27 = vld [vmem:[%s1 + $0x18] sm:$0xf]
    %v28 = vld [vmem:[%s1 + $0x1c] sm:$0xf]
    %v29 = vld [vmem:[%s1 + $0x20] sm:$0xf]
    %v30 = vld [vmem:[%s1 + $0x24] sm:$0xf]
    %v31 = vld [vmem:[%s1 + $0x28] sm:$0xf]
    %v32 = vld [vmem:[%s1 + $0x2c] sm:$0xf]
    %v33 = vld [vmem:[%s1 + $0x30] sm:$0xf]
    %v34 = vld [vmem:[%s1 + $0x34] sm:$0xf]
    %v35 = vld [vmem:[%s1 + $0x38] sm:$0xf]
    %v36 = vld [vmem:[%s1 + $0x3c] sm:$0xf]
    %v37 = vld [vmem:[%s1 + $0x40] sm:$0xf]
    %v38 = vld [vmem:[%s1 + $0x44] sm:$0xf]
    %v39 = vld [vmem:[%s1 + $0x48] sm:$0xf]
    %v40 = vld [vmem:[%s1 + $0x4c] sm:$0xf]
    %v41 = vld [vmem:[%s1 + $0x50] sm:$0xf]
    %v42 = vld [vmem:[%s1 + $0x54] sm:$0xf]
    %v43 = vld [vmem:[%s1 + $0x58] sm:$0xf]
    %v44 = vld [vmem:[%s1 + $0x5c] sm:$0xf]
    %v45 = vld [vmem:[%s1 + $0x60] sm:$0xf]
    %v46 = vld [vmem:[%s1 + $0x64] sm:$0xf]
    %v47 = vld [vmem:[%s1 + $0x68] sm:$0xf]
    %v48 = vld [vmem:[%s1 + $0x6c] sm:$0xf]
    %v49 = vld [vmem:[%s1 + $0x70] sm:$0xf]
    %v50 = vld [vmem:[%s1 + $0x74] sm:$0xf]
    %v51 = vld [vmem:[%s1 + $0x78] sm:$0xf]
    %v52 = vld [vmem:[%s1 + $0x7c] sm:$0xf]
    %v53 = vld [vmem:[%s1 + $0x80] sm:$0xf]
    %v54 = vld [vmem:[%s1 + $0x84] sm:$0xf]
    %v55 = vld [vmem:[%s1 + $0x88] sm:$0xf]
    %v56 = vld [vmem:[%s1 + $0x8c] sm:$0xf]
    %v57 = vld [vmem:[%s1 + $0x90] sm:$0xf]
    %v58 = vld [vmem:[%s1 + $0x94] sm:$0xf]
    %v59 = vld [vmem:[%s1 + $0x98] sm:$0xf]
    %v60 = vld [vmem:[%s1 + $0x9c] sm:$0xf]
    %v61 = vld [vmem:[%s1 + $0xa0] sm:$0xf]
    %v62 = vld [vmem:[%s1 + $0xa4] sm:$0xf]
    %v63 = vld [vmem:[%s1 + $0xa8] sm:$0xf]
    %v64 = vld [vmem:[%s1 + $0xac] sm:$0xf]
    %v65 = vld [vmem:[%s1 + $0xb0] sm:$0xf]
    %v66 = vld [vmem:[%s1 + $0xb4] sm:$0xf]
    %v67 = vld [vmem:[%s1 + $0xb8] sm:$0xf]
    %v68 = vld [vmem:[%s1 + $0xbc] sm:$0xf]
    %v69 = vld [vmem:[%s1 + $0xc0] sm:$0xf]
    %v70 = vld [vmem:[%s1 + $0xc4] sm:$0xf]
    %v71 = vld [vmem:[%s1 + $0xc8] sm:$0xf]
    %v72 = vld [vmem:[%s1 + $0xcc] sm:$0xf]
    %v73 = vld [vmem:[%s1 + $0xd0] sm:$0xf]
    %v74 = vld [vmem:[%s1 + $0xd4] sm:$0xf]
    %v75 = vld [vmem:[%s1 + $0xd8] sm:$0xf]
    %v76 = vld [vmem:[%s1 + $0xdc] sm:$0xf]
    %v77 = vld [vmem:[%s1 + $0xe0] sm:$0xf]
    %v78 = vld [vmem:[%s1 + $0xe4] sm:$0xf]
    %v79 = vld [vmem:[%s1 + $0xe8] sm:$0xf]
    %v80 = vld [vmem:[%s1 + $0xec] sm:$0xf]
    %v81 = vld [vmem:[%s1 + $0xf0] sm:$0xf]
    %v82 = vld [vmem:[%s1 + $0xf4] sm:$0xf]
    %v83 = vld [vmem:[%s1 + $0xf8] sm:$0xf]
    %v84 = vld [vmem:[%s1 + $0xfc] sm:$0xf]
    %v85 = vld [vmem:[%s1 + $0x100] sm:$0xf]
    %v86 = vld [vmem:[%s1 + $0x104] sm:$0xf]
    %v87 = vld [vmem:[%s1 + $0x108] sm:$0xf]
    %v88 = vld [vmem:[%s1 + $0x10c] sm:$0xf]
    %v89 = vld [vmem:[%s1 + $0x110] sm:$0xf]
    %v90 = vld [vmem:[%s1 + $0x114] sm:$0xf]
    %v91 = vld [vmem:[%s1 + $0x118] sm:$0xf]
    %v92 = vld [vmem:[%s1 + $0x11c] sm:$0xf]
    %v93 = vld [vmem:[%s1 + $0x120] sm:$0xf]
    %v94 = vld [vmem:[%s1 + $0x124] sm:$0xf]
    %v95 = vld [vmem:[%s1 + $0x128] sm:$0xf]
    %v96 = vld [vmem:[%s1 + $0x12c] sm:$0xf]
    %v97 = vld [vmem:[%s1 + $0x130] sm:$0xf]
    %v98 = vld [vmem:[%s1 + $0x134] sm:$0xf]
    %v99 = vld [vmem:[%s1 + $0x138] sm:$0xf]
    %v100 = vld [vmem:[%s1 + $0x13c] sm:$0xf]
    %v101 = vld [vmem:[%s1 + $0x140] sm:$0xf]
    %v102 = vld [vmem:[%s1 + $0x144] sm:$0xf]
    %v103 = vld [vmem:[%s1 + $0x148] sm:$0xf]
    %v104 = vld [vmem:[%s1 + $0x14c] sm:$0xf]
    %v105 = vld [vmem:[%s1 + $0x150] sm:$0xf]
    %v106 = vld [vmem:[%s1 + $0x154] sm:$0xf]
    %v107 = vld [vmem:[%s1 + $0x158] sm:$0xf]
    %v108 = vld [vmem:[%s1 + $0x15c] sm:$0xf]
    %v109 = vld [vmem:[%s1 + $0x160] sm:$0xf]
    %v110 = vld [vmem:[%s1 + $0x164] sm:$0xf]
    %v111 = vld [vmem:[%s1 + $0x168] sm:$0xf]
    %v112 = vld [vmem:[%s1 + $0x16c] sm:$0xf]
    %v113 = vld [vmem:[%s1 + $0x170] sm:$0xf]
    %v114 = vld [vmem:[%s1 + $0x174] sm:$0xf]
    %v115 = vld [vmem:[%s1 + $0x178] sm:$0xf]
    %v116 = vld [vmem:[%s1 + $0x17c] sm:$0xf]
    %v117 = vld [vmem:[%s1 + $0x180] sm:$0xf]
    %v118 = vld [vmem:[%s1 + $0x184] sm:$0xf]
    %v119 = vld [vmem:[%s1 + $0x188] sm:$0xf]
    %v120 = vld [vmem:[%s1 + $0x18c] sm:$0xf]
    %v121 = vld [vmem:[%s1 + $0x190] sm:$0xf]
    %v122 = vld [vmem:[%s1 + $0x194] sm:$0xf]
    %v123 = vld [vmem:[%s1 + $0x198] sm:$0xf]
    %v124 = vld [vmem:[%s1 + $0x19c] sm:$0xf]
    %v125 = vld [vmem:[%s1 + $0x1a0] sm:$0xf]
    %v126 = vld [vmem:[%s1 + $0x1a4] sm:$0xf]
    %v127 = vld [vmem:[%s1 + $0x1a8] sm:$0xf]
    %v128 = vld [vmem:[%s1 + $0x1ac] sm:$0xf]
    %v129 = vld [vmem:[%s1 + $0x1b0] sm:$0xf]
    %v130 = vld [vmem:[%s1 + $0x1b4] sm:$0xf]
    %v131 = vld [vmem:[%s1 + $0x1b8] sm:$0xf]
    %v132 = vld [vmem:[%s1 + $0x1bc] sm:$0xf]
    %v133 = vld [vmem:[%s1 + $0x1c0] sm:$0xf]
    %v134 = vld [vmem:[%s1 + $0x1c4] sm:$0xf]
    %v135 = vld [vmem:[%s1 + $0x1c8] sm:$0xf]
    %v136 = vld [vmem:[%s1 + $0x1cc] sm:$0xf]
    %v137 = vld [vmem:[%s1 + $0x1d0] sm:$0xf]
    %v138 = vld [vmem:[%s1 + $0x1d4] sm:$0xf]
    %v139 = vld [vmem:[%s1 + $0x1d8] sm:$0xf]
    %v140 = vld [vmem:[%s1 + $0x1dc] sm:$0xf]
    %v141 = vld [vmem:[%s1 + $0x1e0] sm:$0xf]
    %v142 = vld [vmem:[%s1 + $0x1e4] sm:$0xf]
    %v143 = vld [vmem:[%s1 + $0x1e8] sm:$0xf]
    %v144 = vld [vmem:[%s1 + $0x1ec] sm:$0xf]
    %v145 = vld [vmem:[%s1 + $0x1f0] sm:$0xf]
    %v146 = vld [vmem:[%s1 + $0x1f4] sm:$0xf]
    %v147 = vld [vmem:[%s1 + $0x1f8] sm:$0xf]
    %v148 = vld [vmem:[%s1 + $0x1fc] sm:$0xf]
    %v149 = vld [vmem:[%s1 + $0x200] sm:$0xf]
    %v150 = vld [vmem:[%s1 + $0x204] sm:$0xf]
    %v151 = vld [vmem:[%s1 + $0x208] sm:$0xf]
    %v152 = vld [vmem:[%s1 + $0x20c] sm:$0xf]
    %v153 = vld [vmem:[%s1 + $0x210] sm:$0xf]
    %v154 = vld [vmem:[%s1 + $0x214] sm:$0xf]
    %v155 = vld [vmem:[%s1 + $0x218] sm:$0xf]
    %v156 = vld [vmem:[%s1 + $0x21c] sm:$0xf]
    %v157 = vld [vmem:[%s1 + $0x220] sm:$0xf]
    %v158 = vld [vmem:[%s1 + $0x224] sm:$0xf]
    %v159 = vld [vmem:[%s1 + $0x228] sm:$0xf]
    %v160 = vld [vmem:[%s1 + $0x22c] sm:$0xf]
    %v161 = vld [vmem:[%s1 + $0x230] sm:$0xf]
    %v162 = vld [vmem:[%s1 + $0x234] sm:$0xf]
    %v163 = vld [vmem:[%s1 + $0x238] sm:$0xf]
    %v164 = vld [vmem:[%s1 + $0x23c] sm:$0xf]
    %v165 = vld [vmem:[%s2] sm:$0x1]
    %v167 = vlaneseq
    %v168 = vshrl.u32 %v167, 7
    %v169 = vsub.s32 0, %v168
    %v170 = vrot.slane %v165, %v169
    %v174 = vcombine.high %v19, %v19
    %v176 = vunpack.c.l.s4 1966171168
    %v177 = vunpack.c.0.s8 %v176
    %v178 = vlaneseq
    %v179 = vshrl.u32 %v178, 7
    %v180 = vsub.s32 %v177, %v179
    %v181 = vrot.slane %v19, %v180
    %v183 = vunpack.c.l.s4 1966171168
    %v184 = vunpack.c.0.s8 %v183
    %v185 = vlaneseq
    %v186 = vshrl.u32 %v185, 7
    %v187 = vsub.s32 %v184, %v186
    %v188 = vrot.slane %v174, %v187
    %v189 = vcombine.high %v181, %v181
    %v190 = vcombine.high %v188, %v188
    %v192 = vunpack.c.l.s4 1966171168
    %v193 = vunpack.c.0.s8 %v192
    %v194 = vlaneseq
    %v195 = vshrl.u32 %v194, 7
    %v196 = vsub.s32 %v193, %v195
    %v197 = vrot.slane %v181, %v196
    %v199 = vunpack.c.l.s4 1966171168
    %v200 = vunpack.c.0.s8 %v199
    %v201 = vlaneseq
    %v202 = vshrl.u32 %v201, 7
    %v203 = vsub.s32 %v200, %v202
    %v204 = vrot.slane %v188, %v203
    %v206 = vunpack.c.l.s4 1966171168
    %v207 = vunpack.c.0.s8 %v206
    %v208 = vlaneseq
    %v209 = vshrl.u32 %v208, 7
    %v210 = vsub.s32 %v207, %v209
    %v211 = vrot.slane %v189, %v210
    %v213 = vunpack.c.l.s4 1966171168
    %v214 = vunpack.c.0.s8 %v213
    %v215 = vlaneseq
    %v216 = vshrl.u32 %v215, 7
    %v217 = vsub.s32 %v214, %v216
    %v218 = vrot.slane %v190, %v217
    %v219 = vcombine.high %v197, %v197
    %v220 = vcombine.high %v204, %v204
    %v221 = vcombine.high %v211, %v211
    %v222 = vcombine.high %v218, %v218
    %v224 = vunpack.c.l.s4 1966171168
    %v225 = vunpack.c.0.s8 %v224
    %v226 = vlaneseq
    %v227 = vshrl.u32 %v226, 7
    %v228 = vsub.s32 %v225, %v227
    %v229 = vrot.slane %v20, %v228
    %v231 = vunpack.c.l.s4 1966171168
    %v232 = vunpack.c.0.s8 %v231
    %v233 = vlaneseq
    %v234 = vshrl.u32 %v233, 7
    %v235 = vsub.s32 %v232, %v234
    %v236 = vrot.slane %v229, %v235
    %v390 = vunpack.c.l.b16 %v21
    %v391 = vunpack.c.l.b16 %v22
    %v392 = vunpack.c.l.b16 %v23
    %v393 = vunpack.c.l.b16 %v24
    %v394 = vunpack.c.l.b16 %v25
    %v395 = vunpack.c.l.b16 %v26
    %v396 = vunpack.c.l.b16 %v27
    %v397 = vunpack.c.l.b16 %v28
    %v398 = vunpack.c.l.b16 %v29
    %v399 = vunpack.c.l.b16 %v30
    %v400 = vunpack.c.l.b16 %v31
    %v401 = vunpack.c.l.b16 %v32
    %v402 = vunpack.c.l.b16 %v33
    %v403 = vunpack.c.l.b16 %v34
    %v404 = vunpack.c.l.b16 %v35
    %v405 = vunpack.c.l.b16 %v36
    %v406 = vunpack.c.l.b16 %v37
    %v407 = vunpack.c.l.b16 %v38
    %v408 = vunpack.c.l.b16 %v39
    %v409 = vunpack.c.l.b16 %v40
    %v410 = vunpack.c.l.b16 %v41
    %v411 = vunpack.c.l.b16 %v42
    %v412 = vunpack.c.l.b16 %v43
    %v413 = vunpack.c.l.b16 %v44
    %v414 = vunpack.c.l.b16 %v45
    %v415 = vunpack.c.l.b16 %v46
    %v416 = vunpack.c.l.b16 %v47
    %v417 = vunpack.c.l.b16 %v48
    %v418 = vunpack.c.l.b16 %v49
    %v419 = vunpack.c.l.b16 %v50
    %v420 = vunpack.c.l.b16 %v51
    %v421 = vunpack.c.l.b16 %v52
    %v422 = vunpack.c.l.b16 %v53
    %v423 = vunpack.c.l.b16 %v54
    %v424 = vunpack.c.l.b16 %v55
    %v425 = vunpack.c.l.b16 %v56
    %v426 = vunpack.c.l.b16 %v57
    %v427 = vunpack.c.l.b16 %v58
    %v428 = vunpack.c.l.b16 %v59
    %v429 = vunpack.c.l.b16 %v60
    %v430 = vunpack.c.l.b16 %v61
    %v431 = vunpack.c.l.b16 %v62
    %v432 = vunpack.c.l.b16 %v63
    %v433 = vunpack.c.l.b16 %v64
    %v434 = vunpack.c.l.b16 %v65
    %v435 = vunpack.c.l.b16 %v66
    %v436 = vunpack.c.l.b16 %v67
    %v437 = vunpack.c.l.b16 %v68
    %v438 = vunpack.c.l.b16 %v69
    %v439 = vunpack.c.l.b16 %v70
    %v440 = vunpack.c.l.b16 %v71
    %v441 = vunpack.c.l.b16 %v72
    %v442 = vunpack.c.l.b16 %v73
    %v443 = vunpack.c.l.b16 %v74
    %v444 = vunpack.c.l.b16 %v75
    %v445 = vunpack.c.l.b16 %v76
    %v446 = vunpack.c.l.b16 %v77
    %v447 = vunpack.c.l.b16 %v78
    %v448 = vunpack.c.l.b16 %v79
    %v449 = vunpack.c.l.b16 %v80
    %v450 = vunpack.c.l.b16 %v81
    %v451 = vunpack.c.l.b16 %v82
    %v452 = vunpack.c.l.b16 %v83
    %v453 = vunpack.c.l.b16 %v84
    %v454 = vunpack.c.l.b16 %v85
    %v455 = vunpack.c.l.b16 %v86
    %v456 = vunpack.c.l.b16 %v87
    %v457 = vunpack.c.l.b16 %v88
    %v458 = vunpack.c.l.b16 %v89
    %v459 = vunpack.c.l.b16 %v90
    %v460 = vunpack.c.l.b16 %v91
    %v461 = vunpack.c.l.b16 %v92
    %v462 = vunpack.c.l.b16 %v93
    %v463 = vunpack.c.l.b16 %v94
    %v464 = vunpack.c.l.b16 %v95
    %v465 = vunpack.c.l.b16 %v96
    %v466 = vunpack.c.l.b16 %v97
    %v467 = vunpack.c.l.b16 %v98
    %v468 = vunpack.c.l.b16 %v99
    %v469 = vunpack.c.l.b16 %v100
    %v470 = vunpack.c.l.b16 %v101
    %v471 = vunpack.c.l.b16 %v102
    %v472 = vunpack.c.l.b16 %v103
    %v473 = vunpack.c.l.b16 %v104
    %v474 = vunpack.c.l.b16 %v105
    %v475 = vunpack.c.l.b16 %v106
    %v476 = vunpack.c.l.b16 %v107
    %v477 = vunpack.c.l.b16 %v108
    %v478 = vunpack.c.l.b16 %v109
    %v479 = vunpack.c.l.b16 %v110
    %v480 = vunpack.c.l.b16 %v111
    %v481 = vunpack.c.l.b16 %v112
    %v482 = vunpack.c.l.b16 %v113
    %v483 = vunpack.c.l.b16 %v114
    %v484 = vunpack.c.l.b16 %v115
    %v485 = vunpack.c.l.b16 %v116
    %v486 = vunpack.c.l.b16 %v117
    %v487 = vunpack.c.l.b16 %v118
    %v488 = vunpack.c.l.b16 %v119
    %v489 = vunpack.c.l.b16 %v120
    %v490 = vunpack.c.l.b16 %v121
    %v491 = vunpack.c.l.b16 %v122
    %v492 = vunpack.c.l.b16 %v123
    %v493 = vunpack.c.l.b16 %v124
    %v494 = vunpack.c.l.b16 %v125
    %v495 = vunpack.c.l.b16 %v126
    %v496 = vunpack.c.l.b16 %v127
    %v497 = vunpack.c.l.b16 %v128
    %v498 = vunpack.c.l.b16 %v129
    %v499 = vunpack.c.l.b16 %v130
    %v500 = vunpack.c.l.b16 %v131
    %v501 = vunpack.c.l.b16 %v132
    %v502 = vunpack.c.l.b16 %v133
    %v503 = vunpack.c.l.b16 %v134
    %v504 = vunpack.c.l.b16 %v135
    %v505 = vunpack.c.l.b16 %v136
    %v506 = vunpack.c.l.b16 %v137
    %v507 = vunpack.c.l.b16 %v138
    %v508 = vunpack.c.l.b16 %v139
    %v509 = vunpack.c.l.b16 %v140
    %v510 = vunpack.c.l.b16 %v141
    %v511 = vunpack.c.l.b16 %v142
    %v512 = vunpack.c.l.b16 %v143
    %v513 = vunpack.c.l.b16 %v144
    %v514 = vunpack.c.l.b16 %v145
    %v515 = vunpack.c.l.b16 %v146
    %v516 = vunpack.c.l.b16 %v147
    %v517 = vunpack.c.l.b16 %v148
    %v518 = vunpack.c.l.b16 %v149
    %v519 = vunpack.c.l.b16 %v150
    %v520 = vunpack.c.l.b16 %v151
    %v521 = vunpack.c.l.b16 %v152
    %v522 = vunpack.c.l.b16 %v153
    %v523 = vunpack.c.l.b16 %v154
    %v524 = vunpack.c.l.b16 %v155
    %v525 = vunpack.c.l.b16 %v156
    %v526 = vunpack.c.l.b16 %v157
    %v527 = vunpack.c.l.b16 %v158
    %v528 = vunpack.c.l.b16 %v159
    %v529 = vunpack.c.l.b16 %v160
    %v530 = vunpack.c.l.b16 %v161
    %v531 = vunpack.c.l.b16 %v162
    %v532 = vunpack.c.l.b16 %v163
    %v533 = vunpack.c.l.b16 %v164
    %v534 = vpack.c.b16 %v391, %v390
    %v535 = vpack.c.b16 %v393, %v392
    %v536 = vpack.c.b16 %v395, %v394
    %v537 = vpack.c.b16 %v397, %v396
    %v538 = vpack.c.b16 %v399, %v398
    %v539 = vpack.c.b16 %v401, %v400
    %v540 = vpack.c.b16 %v403, %v402
    %v541 = vpack.c.b16 %v405, %v404
    %v542 = vpack.c.b16 %v407, %v406
    %v543 = vpack.c.b16 %v409, %v408
    %v544 = vpack.c.b16 %v411, %v410
    %v545 = vpack.c.b16 %v413, %v412
    %v546 = vpack.c.b16 %v415, %v414
    %v547 = vpack.c.b16 %v417, %v416
    %v548 = vpack.c.b16 %v419, %v418
    %v549 = vpack.c.b16 %v421, %v420
    %v550 = vpack.c.b16 %v423, %v422
    %v551 = vpack.c.b16 %v425, %v424
    %v552 = vpack.c.b16 %v427, %v426
    %v553 = vpack.c.b16 %v429, %v428
    %v554 = vpack.c.b16 %v431, %v430
    %v555 = vpack.c.b16 %v433, %v432
    %v556 = vpack.c.b16 %v435, %v434
    %v557 = vpack.c.b16 %v437, %v436
    %v558 = vpack.c.b16 %v439, %v438
    %v559 = vpack.c.b16 %v441, %v440
    %v560 = vpack.c.b16 %v443, %v442
    %v561 = vpack.c.b16 %v445, %v444
    %v562 = vpack.c.b16 %v447, %v446
    %v563 = vpack.c.b16 %v449, %v448
    %v564 = vpack.c.b16 %v451, %v450
    %v565 = vpack.c.b16 %v453, %v452
    %v566 = vpack.c.b16 %v455, %v454
    %v567 = vpack.c.b16 %v457, %v456
    %v568 = vpack.c.b16 %v459, %v458
    %v569 = vpack.c.b16 %v461, %v460
    %v570 = vpack.c.b16 %v463, %v462
    %v571 = vpack.c.b16 %v465, %v464
    %v572 = vpack.c.b16 %v467, %v466
    %v573 = vpack.c.b16 %v469, %v468
    %v574 = vpack.c.b16 %v471, %v470
    %v575 = vpack.c.b16 %v473, %v472
    %v576 = vpack.c.b16 %v475, %v474
    %v577 = vpack.c.b16 %v477, %v476
    %v578 = vpack.c.b16 %v479, %v478
    %v579 = vpack.c.b16 %v481, %v480
    %v580 = vpack.c.b16 %v483, %v482
    %v581 = vpack.c.b16 %v485, %v484
    %v582 = vpack.c.b16 %v487, %v486
    %v583 = vpack.c.b16 %v489, %v488
    %v584 = vpack.c.b16 %v491, %v490
    %v585 = vpack.c.b16 %v493, %v492
    %v586 = vpack.c.b16 %v495, %v494
    %v587 = vpack.c.b16 %v497, %v496
    %v588 = vpack.c.b16 %v499, %v498
    %v589 = vpack.c.b16 %v501, %v500
    %v590 = vpack.c.b16 %v503, %v502
    %v591 = vpack.c.b16 %v505, %v504
    %v592 = vpack.c.b16 %v507, %v506
    %v593 = vpack.c.b16 %v509, %v508
    %v594 = vpack.c.b16 %v511, %v510
    %v595 = vpack.c.b16 %v513, %v512
    %v596 = vpack.c.b16 %v515, %v514
    %v597 = vpack.c.b16 %v517, %v516
    %v598 = vpack.c.b16 %v519, %v518
    %v599 = vpack.c.b16 %v521, %v520
    %v600 = vpack.c.b16 %v523, %v522
    %v601 = vpack.c.b16 %v525, %v524
    %v602 = vpack.c.b16 %v527, %v526
    %v603 = vpack.c.b16 %v529, %v528
    %v604 = vpack.c.b16 %v531, %v530
    %v605 = vpack.c.b16 %v533, %v532
    %678 = vmatprep.subr.bf16.mxu0 0
    %679 = vmatpush1.bf16.msra.mxu0 %v534
    %680 = vmatprep.subr.bf16.mxu0 0
    %681 = vmatpush1.bf16.msra.mxu0 %v535
    %682 = vmatprep.subr.bf16.mxu0 0
    %683 = vmatpush1.bf16.msra.mxu0 %v536
    %684 = vmatprep.subr.bf16.mxu0 0
    %685 = vmatpush1.bf16.msra.mxu0 %v537
    %686 = vmatprep.subr.bf16.mxu0 0
    %687 = vmatpush1.bf16.msra.mxu0 %v538
    %688 = vmatprep.subr.bf16.mxu0 0
    %689 = vmatpush1.bf16.msra.mxu0 %v539
    %690 = vmatprep.subr.bf16.mxu0 0
    %691 = vmatpush1.bf16.msra.mxu0 %v540
    %692 = vmatprep.subr.bf16.mxu0 0
    %693 = vmatpush1.bf16.msra.mxu0 %v541
    %694 = vmatprep.subr.bf16.mxu0 0
    %695 = vmatpush1.bf16.msra.mxu0 %v542
    %696 = vmatprep.subr.bf16.mxu0 0
    %697 = vmatpush1.bf16.msra.mxu0 %v543
    %698 = vmatprep.subr.bf16.mxu0 0
    %699 = vmatpush1.bf16.msra.mxu0 %v544
    %700 = vmatprep.subr.bf16.mxu0 0
    %701 = vmatpush1.bf16.msra.mxu0 %v545
    %702 = vmatprep.subr.bf16.mxu0 0
    %703 = vmatpush1.bf16.msra.mxu0 %v546
    %704 = vmatprep.subr.bf16.mxu0 0
    %705 = vmatpush1.bf16.msra.mxu0 %v547
    %706 = vmatprep.subr.bf16.mxu0 0
    %707 = vmatpush1.bf16.msra.mxu0 %v548
    %708 = vmatprep.subr.bf16.mxu0 0
    %709 = vmatpush1.bf16.msra.mxu0 %v549
    %710 = vmatprep.mubr.bf16.mxu0 %v211
    %711 = vmatmul.mubr.bf16.gmra.mrb[0].mxu0 %v197
    %v712 = vpop.f32.mrb[0].mxu0
    %v713 = vadd.f32 %v170, %v712
    %v714 = vpop.f32.mrb[0].mxu0
    %v715 = vpop.f32.mrb[0].mxu0
    %v716 = vpop.f32.mrb[0].mxu0
    %717 = vdwg.mxu0
    %718 = vmatprep.subr.bf16.mxu0 0
    %719 = vmatpush1.bf16.msra.mxu0 %v550
    %720 = vmatprep.subr.bf16.mxu0 0
    %721 = vmatpush1.bf16.msra.mxu0 %v551
    %722 = vmatprep.subr.bf16.mxu0 0
    %723 = vmatpush1.bf16.msra.mxu0 %v552
    %724 = vmatprep.subr.bf16.mxu0 0
    %725 = vmatpush1.bf16.msra.mxu0 %v553
    %726 = vmatprep.subr.bf16.mxu0 0
    %727 = vmatpush1.bf16.msra.mxu0 %v554
    %728 = vmatprep.subr.bf16.mxu0 0
    %729 = vmatpush1.bf16.msra.mxu0 %v555
    %730 = vmatprep.subr.bf16.mxu0 0
    %731 = vmatpush1.bf16.msra.mxu0 %v556
    %732 = vmatprep.subr.bf16.mxu0 0
    %733 = vmatpush1.bf16.msra.mxu0 %v557
    %734 = vmatprep.subr.bf16.mxu0 0
    %735 = vmatpush1.bf16.msra.mxu0 %v558
    %736 = vmatprep.subr.bf16.mxu0 0
    %737 = vmatpush1.bf16.msra.mxu0 %v559
    %738 = vmatprep.subr.bf16.mxu0 0
    %739 = vmatpush1.bf16.msra.mxu0 %v560
    %740 = vmatprep.subr.bf16.mxu0 0
    %741 = vmatpush1.bf16.msra.mxu0 %v561
    %742 = vmatprep.subr.bf16.mxu0 0
    %743 = vmatpush1.bf16.msra.mxu0 %v562
    %744 = vmatprep.subr.bf16.mxu0 0
    %745 = vmatpush1.bf16.msra.mxu0 %v563
    %746 = vmatprep.subr.bf16.mxu0 0
    %747 = vmatpush1.bf16.msra.mxu0 %v564
    %748 = vmatprep.subr.bf16.mxu0 0
    %749 = vmatpush1.bf16.msra.mxu0 %v565
    %750 = vmatprep.mubr.bf16.mxu0 %v221
    %751 = vmatmul.mubr.bf16.gmra.mrb[0].mxu0 %v219
    %v752 = vpop.f32.mrb[0].mxu0
    %v753 = vadd.f32 %v713, %v752
    %v754 = vpop.f32.mrb[0].mxu0
    %v755 = vpop.f32.mrb[0].mxu0
    %v756 = vpop.f32.mrb[0].mxu0
    %757 = vdwg.mxu0
    %758 = vmatprep.subr.bf16.mxu0 0
    %759 = vmatpush1.bf16.msra.mxu0 %v566
    %760 = vmatprep.subr.bf16.mxu0 0
    %761 = vmatpush1.bf16.msra.mxu0 %v567
    %762 = vmatprep.subr.bf16.mxu0 0
    %763 = vmatpush1.bf16.msra.mxu0 %v568
    %764 = vmatprep.subr.bf16.mxu0 0
    %765 = vmatpush1.bf16.msra.mxu0 %v569
    %766 = vmatprep.subr.bf16.mxu0 0
    %767 = vmatpush1.bf16.msra.mxu0 %v570
    %768 = vmatprep.subr.bf16.mxu0 0
    %769 = vmatpush1.bf16.msra.mxu0 %v571
    %770 = vmatprep.subr.bf16.mxu0 0
    %771 = vmatpush1.bf16.msra.mxu0 %v572
    %772 = vmatprep.subr.bf16.mxu0 0
    %773 = vmatpush1.bf16.msra.mxu0 %v573
    %774 = vmatprep.subr.bf16.mxu0 0
    %775 = vmatpush1.bf16.msra.mxu0 %v574
    %776 = vmatprep.subr.bf16.mxu0 0
    %777 = vmatpush1.bf16.msra.mxu0 %v575
    %778 = vmatprep.subr.bf16.mxu0 0
    %779 = vmatpush1.bf16.msra.mxu0 %v576
    %780 = vmatprep.subr.bf16.mxu0 0
    %781 = vmatpush1.bf16.msra.mxu0 %v577
    %782 = vmatprep.subr.bf16.mxu0 0
    %783 = vmatpush1.bf16.msra.mxu0 %v578
    %784 = vmatprep.subr.bf16.mxu0 0
    %785 = vmatpush1.bf16.msra.mxu0 %v579
    %786 = vmatprep.subr.bf16.mxu0 0
    %787 = vmatpush1.bf16.msra.mxu0 %v580
    %788 = vmatprep.subr.bf16.mxu0 0
    %789 = vmatpush1.bf16.msra.mxu0 %v581
    %790 = vmatprep.mubr.bf16.mxu0 %v218
    %791 = vmatmul.mubr.bf16.gmra.mrb[0].mxu0 %v204
    %v792 = vpop.f32.mrb[0].mxu0
    %v793 = vadd.f32 %v753, %v792
    %v794 = vpop.f32.mrb[0].mxu0
    %v795 = vpop.f32.mrb[0].mxu0
    %v796 = vpop.f32.mrb[0].mxu0
    %797 = vdwg.mxu0
    %798 = vmatprep.subr.bf16.mxu0 0
    %799 = vmatpush1.bf16.msra.mxu0 %v582
    %800 = vmatprep.subr.bf16.mxu0 0
    %801 = vmatpush1.bf16.msra.mxu0 %v583
    %802 = vmatprep.subr.bf16.mxu0 0
    %803 = vmatpush1.bf16.msra.mxu0 %v584
    %804 = vmatprep.subr.bf16.mxu0 0
    %805 = vmatpush1.bf16.msra.mxu0 %v585
    %806 = vmatprep.subr.bf16.mxu0 0
    %807 = vmatpush1.bf16.msra.mxu0 %v586
    %808 = vmatprep.subr.bf16.mxu0 0
    %809 = vmatpush1.bf16.msra.mxu0 %v587
    %810 = vmatprep.subr.bf16.mxu0 0
    %811 = vmatpush1.bf16.msra.mxu0 %v588
    %812 = vmatprep.subr.bf16.mxu0 0
    %813 = vmatpush1.bf16.msra.mxu0 %v589
    %814 = vmatprep.subr.bf16.mxu0 0
    %815 = vmatpush1.bf16.msra.mxu0 %v590
    %816 = vmatprep.subr.bf16.mxu0 0
    %817 = vmatpush1.bf16.msra.mxu0 %v591
    %818 = vmatprep.subr.bf16.mxu0 0
    %819 = vmatpush1.bf16.msra.mxu0 %v592
    %820 = vmatprep.subr.bf16.mxu0 0
    %821 = vmatpush1.bf16.msra.mxu0 %v593
    %822 = vmatprep.subr.bf16.mxu0 0
    %823 = vmatpush1.bf16.msra.mxu0 %v594
    %824 = vmatprep.subr.bf16.mxu0 0
    %825 = vmatpush1.bf16.msra.mxu0 %v595
    %826 = vmatprep.subr.bf16.mxu0 0
    %827 = vmatpush1.bf16.msra.mxu0 %v596
    %828 = vmatprep.subr.bf16.mxu0 0
    %829 = vmatpush1.bf16.msra.mxu0 %v597
    %830 = vmatprep.mubr.bf16.mxu0 %v222
    %831 = vmatmul.mubr.bf16.gmra.mrb[0].mxu0 %v220
    %v832 = vpop.f32.mrb[0].mxu0
    %v833 = vadd.f32 %v793, %v832
    %v834 = vpop.f32.mrb[0].mxu0
    %v835 = vpop.f32.mrb[0].mxu0
    %v836 = vpop.f32.mrb[0].mxu0
    %837 = vdwg.mxu0
    %838 = vmatprep.subr.bf16.mxu0 0
    %839 = vmatpush1.bf16.msra.mxu0 %v598
    %840 = vmatprep.subr.bf16.mxu0 0
    %841 = vmatpush1.bf16.msra.mxu0 %v599
    %842 = vmatprep.subr.bf16.mxu0 0
    %843 = vmatpush1.bf16.msra.mxu0 %v600
    %844 = vmatprep.subr.bf16.mxu0 0
    %845 = vmatpush1.bf16.msra.mxu0 %v601
    %846 = vmatprep.subr.bf16.mxu0 0
    %847 = vmatpush1.bf16.msra.mxu0 %v602
    %848 = vmatprep.subr.bf16.mxu0 0
    %849 = vmatpush1.bf16.msra.mxu0 %v603
    %850 = vmatprep.subr.bf16.mxu0 0
    %851 = vmatpush1.bf16.msra.mxu0 %v604
    %852 = vmatprep.subr.bf16.mxu0 0
    %853 = vmatpush1.bf16.msra.mxu0 %v605
    %854 = vmatprep.subr.bf16.mxu0 0
    %855 = vmatpush1.bf16.msra.mxu0 0
    %856 = vmatprep.subr.bf16.mxu0 0
    %857 = vmatpush1.bf16.msra.mxu0 0
    %858 = vmatprep.subr.bf16.mxu0 0
    %859 = vmatpush1.bf16.msra.mxu0 0
    %860 = vmatprep.subr.bf16.mxu0 0
    %861 = vmatpush1.bf16.msra.mxu0 0
    %862 = vmatprep.subr.bf16.mxu0 0
    %863 = vmatpush1.bf16.msra.mxu0 0
    %864 = vmatprep.subr.bf16.mxu0 0
    %865 = vmatpush1.bf16.msra.mxu0 0
    %866 = vmatprep.subr.bf16.mxu0 0
    %867 = vmatpush1.bf16.msra.mxu0 0
    %868 = vmatprep.subr.bf16.mxu0 0
    %869 = vmatpush1.bf16.msra.mxu0 0
    %870 = vmatprep.mubr.bf16.mxu0 0
    %871 = vmatmul.mubr.bf16.gmra.mrb[0].mxu0 %v236
    %v872 = vpop.f32.mrb[0].mxu0
    %v873 = vadd.f32 %v833, %v872
    %v874 = vpop.f32.mrb[0].mxu0
    %v875 = vpop.f32.mrb[0].mxu0
    %v876 = vpop.f32.mrb[0].mxu0
    %877 = vdwg.mxu0
    %vm878 = vcmask 74752
    %v879 = vsel %vm878, %v873, -inf
    %880 = vmax.xlane.f32.xlu0 %v879
    %v881 = vpop.xlane.xlu0 %880
    %v882 = vsub.f32 %v873, %v881
    %v883 = vmul.f32 %v882, 1.442695
    %v884 = vpow.pop %v883
    %v885 = vsel %vm878, %v884, 0.0
    %886 = vadd.xlane.f32.xlu0 %v885
    %v887 = vpop.xlane.xlu0 %886
    %v888 = vlog2.pop %v887
    %v889 = vmul.f32 %v888, 0.6931472
    %890 = vst.msk [vmem:[#allocation2] sm:$0x3] %vm878, %v873
    %v891 = vsub.f32 %v882, %v889
    %892 = vst.msk [vmem:[#allocation4] sm:$0x3] %vm878, %v891
    // Predicated region
    $region14: #{cnn_student_forward.11} parent=1 // pred_check
      _
    $region15: #{cnn_student_forward.11} parent=1 // pred_check_branch
      %894 = sbr.rel (0) target = $region17
    $region16: #{cnn_student_forward.11} parent=1 // pred_region
      %s896 = ssub.s32 32, 32
      %897 = vsyncadd [#allocation3], %s896
      %s899 = sshll.u32 [#allocation2], 4
      %s900 = int_to_ptr.vmem [resolvable:$true] %s899
      %902 = dma.vmem_to_hbm [thread:$0]  %s900, 32, %s3, [#allocation3]
    $region17: #{cnn_student_forward.11} parent=1 // pred_fallthru
      _
    // Predicated region
    $region18: #{cnn_student_forward.11} parent=1 // pred_check
      _
    $region19: #{cnn_student_forward.11} parent=1 // pred_check_branch
      %904 = sbr.rel (0) target = $region21
    $region20: #{cnn_student_forward.11} parent=1 // pred_region
      %s906 = ssub.s32 32, 32
      %907 = vsyncadd [#allocation5], %s906
      %s909 = sshll.u32 [#allocation4], 4
      %s910 = int_to_ptr.vmem [resolvable:$true] %s909
      %912 = dma.vmem_to_hbm [thread:$0]  %s910, 32, %s4, [#allocation5]
    $region21: #{cnn_student_forward.11} parent=1 // pred_fallthru
      _
    // Predicated region
    $region22: #{cnn_student_forward.11} parent=1 // pred_check
      _
    $region23: #{cnn_student_forward.11} parent=1 // pred_check_branch
      %914 = sbr.rel (0) target = $region25
    $region24: #{cnn_student_forward.11} parent=1 // pred_region
      %915 = dma.done [#allocation3], 32
    $region25: #{cnn_student_forward.11} parent=1 // pred_fallthru
      _
    // Predicated region
    $region26: #{cnn_student_forward.11} parent=1 // pred_check
      _
    $region27: #{cnn_student_forward.11} parent=1 // pred_check_branch
      %917 = sbr.rel (0) target = $region29
    $region28: #{cnn_student_forward.11} parent=1 // pred_region
      %918 = dma.done [#allocation5], 32
    $region29: #{cnn_student_forward.11} parent=1 // pred_fallthru
      _
    %919 = vsyncpa [#allocation3], 1
    %920 = vsyncpa [#allocation5], 1

</llo_original>
